<compile_context>
chip_gen: v7x
topology: tpu7x:2x2x1
jax: 0.10.0
libtpu: 0.0.40
codegen_flags: <defaults>
</compile_context>

<pallas_src>
import numpy as np
import jax
import jax.numpy as jnp
from jax.experimental import pallas as pl
from jax.experimental.pallas import tpu as pltpu


# ----------------------------- fused Pallas kernel --------------------------
#
# Per-grid-step layouts (B = samples per step):
#   lhs1 : (6, 2, 4, B, 140)  dims = (t, di, j, n, ki*28+col);  pooled conv1
#          row p = t + 2j, conv1 output row = 2p + di, K = 5 taps * 28 cols.
#   W1   : (140, 256)  banded conv1 weights, cols = dj*128 + q*10 + c (120 used)
#   W2k  : (5, 128, 256) banded conv2 weights per tap ki2,
#          rows = q*10 + ci (120 used), cols = dj2*128 + q2*20 + c2 (80 used)
#   f1w  : (4, 128, 50)  fc1 weights per p2, rows = q2*20 + c2 (80 used)

def _net_fused_kernel(lhs_ref, w1_ref, b1_ref, w2_ref, b2_ref,
                      f1w_ref, f1b_ref, f2w_ref, f2b_ref, o_ref):
    B = o_ref.shape[0]
    w1 = w1_ref[...]                     # (140, 256) bf16, resident
    b1 = b1_ref[...]                     # (1, 128) f32
    b2 = b2_ref[...]                     # (1, 128) f32

    # ---- conv1 + bias + 2x2 max-pool + ReLU: one (8B,140)@(140,256) dot per
    #      conv2 window t; di stacked on M, dj stacked on N (128-lane halves).
    h1 = []
    for t in range(6):
        lt = lhs_ref[t]                                        # (2, 4, B, 140) bf16
        r = jnp.dot(lt.reshape(8 * B, 140), w1,
                    preferred_element_type=jnp.float32)        # (8B, 256) f32
        r = r.reshape(2, 4 * B, 256)
        m = jnp.maximum(r[0], r[1])                            # pool over di
        m = jnp.maximum(m[:, :128], m[:, 128:])                # pool over dj
        h1.append(jnp.maximum(m + b1, 0.0).astype(jnp.bfloat16))   # (4B, 128)

    # ---- conv2 + bias + 2x2 max-pool + ReLU: 10 dots with M = 4B.
    # TODO(synk): nn.Dropout2d on conv2's output is identity in eval mode.
    accs = []
    for di2 in range(2):
        a = jnp.dot(h1[di2], w2_ref[0], preferred_element_type=jnp.float32)
        for ki2 in range(1, 5):
            a = a + jnp.dot(h1[di2 + ki2], w2_ref[ki2],
                            preferred_element_type=jnp.float32)
        accs.append(a)                                          # (4B, 256) f32
    m = jnp.maximum(accs[0], accs[1])                           # pool over di2
    m = jnp.maximum(m[:, :128], m[:, 128:])                     # pool over dj2
    pooled2 = jnp.maximum(m + b2, 0.0)                          # (4B, 128) f32
    p4 = pooled2.reshape(4, B, 128)                             # rows (p2, n)

    # ---- fc1 (+ReLU): torch's view(-1,320) flatten == sum over p2 of
    #      (B,128)@(128,50) dots (weights pre-permuted at pack time).
    h = jnp.dot(p4[0].astype(jnp.bfloat16), f1w_ref[0],
                preferred_element_type=jnp.float32)
    for p2 in range(1, 4):
        h = h + jnp.dot(p4[p2].astype(jnp.bfloat16), f1w_ref[p2],
                        preferred_element_type=jnp.float32)
    h = jnp.maximum(h + f1b_ref[...], 0.0)                      # (B, 50)
    # TODO(synk): F.dropout(training=self.training) is identity in eval mode.

    # ---- fc2 -> log_softmax
    logits = jnp.dot(h.astype(jnp.bfloat16), f2w_ref[...],
                     preferred_element_type=jnp.float32) + f2b_ref[...]  # (B, 10)
    s = logits - jnp.max(logits, axis=-1, keepdims=True)
    o_ref[...] = s - jnp.log(jnp.sum(jnp.exp(s), axis=-1, keepdims=True))


# --------------------------- host-side weight packing -----------------------

def _pack_weights(params):
    w1, b1, w2, b2, fc1_w, fc1_b, fc2_w, fc2_b = params

    # conv1 as ONE banded matmul with K = 5*28 (tap-row folded into K).
    # W1[ki*28 + j_in, dj*128 + q*10 + c] = w1[c, 0, ki, j_in - 2q - dj]
    S1 = np.zeros((5, 28, 2, 12), np.float32)            # (kj, j_in, dj, q)
    for kj in range(5):
        for dj in range(2):
            for q in range(12):
                S1[kj, 2 * q + dj + kj, dj, q] = 1.0
    w1b = jnp.einsum('Kjdq,ckK->kjdqc', S1, w1[:, 0])    # (ki, j_in, dj, q, c)
    w1b = w1b.reshape(5, 28, 2, 120)
    w1p = jnp.pad(w1b, ((0, 0), (0, 0), (0, 0), (0, 8))).reshape(140, 256)

    # conv2 banded matmuls over h1's (col, chan) axis.
    # W2k[ki, q*10+ci, dj2*128 + q2*20 + c2] = w2[c2, ci, ki, q - 2q2 - dj2]
    S2 = np.zeros((5, 12, 2, 4), np.float32)             # (kj, q, dj2, q2)
    for kj in range(5):
        for dj in range(2):
            for q2 in range(4):
                S2[kj, 2 * q2 + dj + kj, dj, q2] = 1.0
    w2b = jnp.einsum('Kqdp,cikK->kqidpc', S2, w2)        # (ki, q, ci, dj2, q2, c2)
    w2b = w2b.reshape(5, 120, 2, 80)
    w2p = jnp.pad(w2b, ((0, 0), (0, 8), (0, 0), (0, 48))).reshape(5, 128, 256)

    # Bias tiles matching the pooled column layouts (padded columns are 0).
    b1p = jnp.pad(jnp.tile(b1, 12), (0, 8)).reshape(1, 128)
    b2p = jnp.pad(jnp.tile(b2, 4), (0, 48)).reshape(1, 128)

    # fc1 weights permuted to the kernel's (p2, q2*20+c2) layout; torch's
    # view(-1, 320) flatten order is c2*16 + p2*4 + q2.
    f1w = fc1_w.reshape(50, 20, 4, 4).transpose(2, 3, 1, 0).reshape(4, 80, 50)
    f1w = jnp.pad(f1w, ((0, 0), (0, 48), (0, 0)))
    f1b = fc1_b.reshape(1, 50)
    f2w = fc2_w.T
    f2b = fc2_b.reshape(1, 10)

    bf = jnp.bfloat16
    return (w1p.astype(bf), b1p.astype(jnp.float32),
            w2p.astype(bf), b2p.astype(jnp.float32),
            f1w.astype(bf), f1b.astype(jnp.float32),
            f2w.astype(bf), f2b.astype(jnp.float32))


def _round_up(a, m):
    return (a + m - 1) // m * m


def net_forward(x, params, block_b=128):
    N = x.shape[0]
    packed = _pack_weights(params)

    # Batch tile: multiple of 16 so bf16 sublane tiles collapse for free.
    B = min(block_b, _round_up(N, 16))
    B = max(16, (B // 16) * 16)
    Npad = _round_up(N, B)

    x2 = x[:, 0]                                          # (N, 28, 28)
    if Npad > N:
        x2 = jnp.pad(x2, ((0, Npad - N), (0, 0), (0, 0)))

    # Host-side row-im2col in the kernel's (t, di, j, n, ki*28+col) layout:
    # input row = 2*(t + 2j) + di + ki  (pooled conv1 row p = t + 2j).
    t_i = np.arange(6).reshape(6, 1, 1, 1)
    d_i = np.arange(2).reshape(1, 2, 1, 1)
    j_i = np.arange(4).reshape(1, 1, 4, 1)
    k_i = np.arange(5).reshape(1, 1, 1, 5)
    rows = jnp.asarray(2 * t_i + d_i + 4 * j_i + k_i, dtype=jnp.int32)  # (6,2,4,5)
    g = jnp.take(x2, rows.reshape(-1), axis=1)            # (Npad, 240, 28)
    g = g.reshape(Npad, 6, 2, 4, 5, 28).transpose(1, 2, 3, 0, 4, 5)
    lhs1 = g.reshape(6, 2, 4, Npad, 140).astype(jnp.bfloat16)

    out = pl.pallas_call(
        _net_fused_kernel,
        out_shape=jax.ShapeDtypeStruct((Npad, 10), jnp.float32),
        grid=(Npad // B,),
        in_specs=[
            pl.BlockSpec((6, 2, 4, B, 140), lambda i: (0, 0, 0, i, 0)),  # im2col input
            pl.BlockSpec((140, 256), lambda i: (0, 0)),                  # conv1 W (resident)
            pl.BlockSpec((1, 128), lambda i: (0, 0)),                    # conv1 bias tile
            pl.BlockSpec((5, 128, 256), lambda i: (0, 0, 0)),            # conv2 W (resident)
            pl.BlockSpec((1, 128), lambda i: (0, 0)),                    # conv2 bias tile
            pl.BlockSpec((4, 128, 50), lambda i: (0, 0, 0)),             # fc1 W (pre-permuted)
            pl.BlockSpec((1, 50), lambda i: (0, 0)),                     # fc1 bias
            pl.BlockSpec((50, 10), lambda i: (0, 0)),                    # fc2 W.T
            pl.BlockSpec((1, 10), lambda i: (0, 0)),                     # fc2 bias
        ],
        out_specs=pl.BlockSpec((B, 10), lambda i: (i, 0)),
        compiler_params=pltpu.CompilerParams(
            dimension_semantics=("parallel",),
            vmem_limit_bytes=32 * 1024 * 1024),
    )(lhs1, *packed)
    return out[:N]


# ------------------------------ pure-JAX reference --------------------------

def _net_forward_ref(x, params):
    w1, b1, w2, b2, fc1_w, fc1_b, fc2_w, fc2_b = params
    N = x.shape[0]
    hp = jax.lax.Precision.HIGHEST
    dn1 = jax.lax.conv_dimension_numbers(x.shape, w1.shape, ('NCHW', 'OIHW', 'NCHW'))
    y = jax.lax.conv_general_dilated(x, w1, (1, 1), 'VALID',
                                     dimension_numbers=dn1, precision=hp)
    y = y + b1[None, :, None, None]
    y = y.reshape(N, 10, 12, 2, 12, 2).max(axis=(3, 5))
    y = jnp.maximum(y, 0.0)
    dn2 = jax.lax.conv_dimension_numbers(y.shape, w2.shape, ('NCHW', 'OIHW', 'NCHW'))
    y = jax.lax.conv_general_dilated(y, w2, (1, 1), 'VALID',
                                     dimension_numbers=dn2, precision=hp)
    y = y + b2[None, :, None, None]
    y = y.reshape(N, 20, 4, 2, 4, 2).max(axis=(3, 5))
    y = jnp.maximum(y, 0.0)
    y = y.reshape(N, 320)
    y = jnp.maximum(jnp.dot(y, fc1_w.T, precision=hp) + fc1_b, 0.0)
    y = jnp.dot(y, fc2_w.T, precision=hp) + fc2_b
    return jax.nn.log_softmax(y, axis=1)


# ----------------------------------- setup ----------------------------------

def init_params(key):
    # Deterministic PyTorch-style uniform(-1/sqrt(fan_in), 1/sqrt(fan_in)) init.
    ks = jax.random.split(key, 8)

    def u(k, shape, fan_in):
        bound = 1.0 / jnp.sqrt(jnp.float32(fan_in))
        return jax.random.uniform(k, shape, jnp.float32, -bound, bound)

    w1 = u(ks[0], (10, 1, 5, 5), 1 * 5 * 5)
    b1 = u(ks[1], (10,), 1 * 5 * 5)
    w2 = u(ks[2], (20, 10, 5, 5), 10 * 5 * 5)
    b2 = u(ks[3], (20,), 10 * 5 * 5)
    fc1_w = u(ks[4], (50, 320), 320)
    fc1_b = u(ks[5], (50,), 320)
    fc2_w = u(ks[6], (10, 50), 50)
    fc2_b = u(ks[7], (10,), 50)
    return (w1, b1, w2, b2, fc1_w, fc1_b, fc2_w, fc2_b)


if __name__ == "__main__":
    key = jax.random.PRNGKey(0)
    pkey, xkey = jax.random.split(key)
    params = init_params(pkey)
    # MNIST-shaped input: batch=2, NCHW (2, 1, 28, 28) -- required for the 320-dim flatten.
    x = jax.random.normal(xkey, (2, 1, 28, 28), jnp.float32)

    out = jax.jit(net_forward)(x, params)
    out = jax.block_until_ready(out)

    assert out.shape == (2, 10) and out.dtype == jnp.float32
    # log_softmax sanity: rows must exp-sum to ~1
    assert bool(jnp.all(jnp.abs(jnp.sum(jnp.exp(out), axis=1) - 1.0) < 1e-4))
    # numerical check against a pure-JAX reference (loose tol for bf16 MXU paths)
    ref = _net_forward_ref(x, params)
    assert bool(jnp.allclose(out, ref, atol=5e-2, rtol=5e-2))
    print("KERNEL_OK")
</pallas_src>

<mosaic_0001>
module attributes {stable_mosaic.version = 11 : i64} {
  func.func @_net_fused_kernel(%arg0: i32, %arg1: memref<6x2x4x16x140xbf16, #tpu.memory_space<vmem>>, %arg2: memref<140x256xbf16, #tpu.memory_space<vmem>>, %arg3: memref<1x128xf32, #tpu.memory_space<vmem>>, %arg4: memref<5x128x256xbf16, #tpu.memory_space<vmem>>, %arg5: memref<1x128xf32, #tpu.memory_space<vmem>>, %arg6: memref<4x128x50xbf16, #tpu.memory_space<vmem>>, %arg7: memref<1x50xf32, #tpu.memory_space<vmem>>, %arg8: memref<50x10xbf16, #tpu.memory_space<vmem>>, %arg9: memref<1x10xf32, #tpu.memory_space<vmem>>, %arg10: memref<16x10xf32, #tpu.memory_space<vmem>>) attributes {dimension_semantics = [#tpu.dimension_semantics<parallel>], iteration_bounds = array<i64: 1>, scalar_prefetch = 0 : i64, scratch_operands = 0 : i64, tpu.core_type = #tpu.core_type<tc>, window_params = [{transform_indices = @transform_0, window_bounds = array<i64: 6, 2, 4, 16, 140>}, {pipeline_mode = #tpu.pipeline_mode<synchronous>, transform_indices = @transform_1, window_bounds = array<i64: 140, 256>}, {pipeline_mode = #tpu.pipeline_mode<synchronous>, transform_indices = @transform_2, window_bounds = array<i64: 1, 128>}, {pipeline_mode = #tpu.pipeline_mode<synchronous>, transform_indices = @transform_3, window_bounds = array<i64: 5, 128, 256>}, {pipeline_mode = #tpu.pipeline_mode<synchronous>, transform_indices = @transform_4, window_bounds = array<i64: 1, 128>}, {pipeline_mode = #tpu.pipeline_mode<synchronous>, transform_indices = @transform_5, window_bounds = array<i64: 4, 128, 50>}, {pipeline_mode = #tpu.pipeline_mode<synchronous>, transform_indices = @transform_6, window_bounds = array<i64: 1, 50>}, {pipeline_mode = #tpu.pipeline_mode<synchronous>, transform_indices = @transform_7, window_bounds = array<i64: 50, 10>}, {pipeline_mode = #tpu.pipeline_mode<synchronous>, transform_indices = @transform_8, window_bounds = array<i64: 1, 10>}, {transform_indices = @transform_9, window_bounds = array<i64: 16, 10>}]} {
    %c0 = arith.constant 0 : index
    %c0_0 = arith.constant 0 : index
    %0 = vector.load %arg2[%c0, %c0_0] : memref<140x256xbf16, #tpu.memory_space<vmem>>, vector<140x256xbf16>
    %c0_1 = arith.constant 0 : index
    %c0_2 = arith.constant 0 : index
    %1 = vector.load %arg3[%c0_1, %c0_2] : memref<1x128xf32, #tpu.memory_space<vmem>>, vector<1x128xf32>
    %c0_3 = arith.constant 0 : index
    %c0_4 = arith.constant 0 : index
    %2 = vector.load %arg5[%c0_3, %c0_4] : memref<1x128xf32, #tpu.memory_space<vmem>>, vector<1x128xf32>
    %c0_5 = arith.constant 0 : index
    %c0_6 = arith.constant 0 : index
    %c0_7 = arith.constant 0 : index
    %c0_8 = arith.constant 0 : index
    %c0_9 = arith.constant 0 : index
    %3 = vector.load %arg1[%c0_5, %c0_6, %c0_7, %c0_8, %c0_9] : memref<6x2x4x16x140xbf16, #tpu.memory_space<vmem>>, vector<1x2x4x16x140xbf16>
    %4 = vector.shape_cast %3 : vector<1x2x4x16x140xbf16> to vector<2x4x16x140xbf16>
    %5 = vector.shape_cast %4 : vector<2x4x16x140xbf16> to vector<128x140xbf16>
    %cst = arith.constant dense<0.000000e+00> : vector<128x256xf32>
    %6 = tpu.matmul %5, %0, %cst {dimension_numbers = #tpu.dot_dimension_numbers<[1], [0], [0], [1], [0, 0, 1, 1], [], []>} : vector<128x140xbf16>, vector<140x256xbf16>, vector<128x256xf32> -> vector<128x256xf32>
    %7 = vector.shape_cast %6 : vector<128x256xf32> to vector<2x64x256xf32>
    %8 = vector.extract_strided_slice %7 {offsets = [0, 0, 0], sizes = [1, 64, 256], strides = [1, 1, 1]} : vector<2x64x256xf32> to vector<1x64x256xf32>
    %9 = vector.shape_cast %8 : vector<1x64x256xf32> to vector<64x256xf32>
    %10 = vector.extract_strided_slice %7 {offsets = [1, 0, 0], sizes = [1, 64, 256], strides = [1, 1, 1]} : vector<2x64x256xf32> to vector<1x64x256xf32>
    %11 = vector.shape_cast %10 : vector<1x64x256xf32> to vector<64x256xf32>
    %12 = arith.maximumf %9, %11 : vector<64x256xf32>
    %13 = vector.extract_strided_slice %12 {offsets = [0, 0], sizes = [64, 128], strides = [1, 1]} : vector<64x256xf32> to vector<64x128xf32>
    %14 = vector.extract_strided_slice %12 {offsets = [0, 128], sizes = [64, 128], strides = [1, 1]} : vector<64x256xf32> to vector<64x128xf32>
    %15 = arith.maximumf %13, %14 : vector<64x128xf32>
    %16 = vector.broadcast %1 : vector<1x128xf32> to vector<64x128xf32>
    %17 = arith.addf %15, %16 : vector<64x128xf32>
    %cst_10 = arith.constant 0.000000e+00 : f32
    %18 = vector.broadcast %cst_10 : f32 to vector<64x128xf32>
    %19 = arith.maximumf %17, %18 : vector<64x128xf32>
    %20 = arith.truncf %19 : vector<64x128xf32> to vector<64x128xbf16>
    %c1 = arith.constant 1 : index
    %c0_11 = arith.constant 0 : index
    %c0_12 = arith.constant 0 : index
    %c0_13 = arith.constant 0 : index
    %c0_14 = arith.constant 0 : index
    %21 = vector.load %arg1[%c1, %c0_11, %c0_12, %c0_13, %c0_14] : memref<6x2x4x16x140xbf16, #tpu.memory_space<vmem>>, vector<1x2x4x16x140xbf16>
    %22 = vector.shape_cast %21 : vector<1x2x4x16x140xbf16> to vector<2x4x16x140xbf16>
    %23 = vector.shape_cast %22 : vector<2x4x16x140xbf16> to vector<128x140xbf16>
    %cst_15 = arith.constant dense<0.000000e+00> : vector<128x256xf32>
    %24 = tpu.matmul %23, %0, %cst_15 {dimension_numbers = #tpu.dot_dimension_numbers<[1], [0], [0], [1], [0, 0, 1, 1], [], []>} : vector<128x140xbf16>, vector<140x256xbf16>, vector<128x256xf32> -> vector<128x256xf32>
    %25 = vector.shape_cast %24 : vector<128x256xf32> to vector<2x64x256xf32>
    %26 = vector.extract_strided_slice %25 {offsets = [0, 0, 0], sizes = [1, 64, 256], strides = [1, 1, 1]} : vector<2x64x256xf32> to vector<1x64x256xf32>
    %27 = vector.shape_cast %26 : vector<1x64x256xf32> to vector<64x256xf32>
    %28 = vector.extract_strided_slice %25 {offsets = [1, 0, 0], sizes = [1, 64, 256], strides = [1, 1, 1]} : vector<2x64x256xf32> to vector<1x64x256xf32>
    %29 = vector.shape_cast %28 : vector<1x64x256xf32> to vector<64x256xf32>
    %30 = arith.maximumf %27, %29 : vector<64x256xf32>
    %31 = vector.extract_strided_slice %30 {offsets = [0, 0], sizes = [64, 128], strides = [1, 1]} : vector<64x256xf32> to vector<64x128xf32>
    %32 = vector.extract_strided_slice %30 {offsets = [0, 128], sizes = [64, 128], strides = [1, 1]} : vector<64x256xf32> to vector<64x128xf32>
    %33 = arith.maximumf %31, %32 : vector<64x128xf32>
    %34 = vector.broadcast %1 : vector<1x128xf32> to vector<64x128xf32>
    %35 = arith.addf %33, %34 : vector<64x128xf32>
    %cst_16 = arith.constant 0.000000e+00 : f32
    %36 = vector.broadcast %cst_16 : f32 to vector<64x128xf32>
    %37 = arith.maximumf %35, %36 : vector<64x128xf32>
    %38 = arith.truncf %37 : vector<64x128xf32> to vector<64x128xbf16>
    %c2 = arith.constant 2 : index
    %c0_17 = arith.constant 0 : index
    %c0_18 = arith.constant 0 : index
    %c0_19 = arith.constant 0 : index
    %c0_20 = arith.constant 0 : index
    %39 = vector.load %arg1[%c2, %c0_17, %c0_18, %c0_19, %c0_20] : memref<6x2x4x16x140xbf16, #tpu.memory_space<vmem>>, vector<1x2x4x16x140xbf16>
    %40 = vector.shape_cast %39 : vector<1x2x4x16x140xbf16> to vector<2x4x16x140xbf16>
    %41 = vector.shape_cast %40 : vector<2x4x16x140xbf16> to vector<128x140xbf16>
    %cst_21 = arith.constant dense<0.000000e+00> : vector<128x256xf32>
    %42 = tpu.matmul %41, %0, %cst_21 {dimension_numbers = #tpu.dot_dimension_numbers<[1], [0], [0], [1], [0, 0, 1, 1], [], []>} : vector<128x140xbf16>, vector<140x256xbf16>, vector<128x256xf32> -> vector<128x256xf32>
    %43 = vector.shape_cast %42 : vector<128x256xf32> to vector<2x64x256xf32>
    %44 = vector.extract_strided_slice %43 {offsets = [0, 0, 0], sizes = [1, 64, 256], strides = [1, 1, 1]} : vector<2x64x256xf32> to vector<1x64x256xf32>
    %45 = vector.shape_cast %44 : vector<1x64x256xf32> to vector<64x256xf32>
    %46 = vector.extract_strided_slice %43 {offsets = [1, 0, 0], sizes = [1, 64, 256], strides = [1, 1, 1]} : vector<2x64x256xf32> to vector<1x64x256xf32>
    %47 = vector.shape_cast %46 : vector<1x64x256xf32> to vector<64x256xf32>
    %48 = arith.maximumf %45, %47 : vector<64x256xf32>
    %49 = vector.extract_strided_slice %48 {offsets = [0, 0], sizes = [64, 128], strides = [1, 1]} : vector<64x256xf32> to vector<64x128xf32>
    %50 = vector.extract_strided_slice %48 {offsets = [0, 128], sizes = [64, 128], strides = [1, 1]} : vector<64x256xf32> to vector<64x128xf32>
    %51 = arith.maximumf %49, %50 : vector<64x128xf32>
    %52 = vector.broadcast %1 : vector<1x128xf32> to vector<64x128xf32>
    %53 = arith.addf %51, %52 : vector<64x128xf32>
    %cst_22 = arith.constant 0.000000e+00 : f32
    %54 = vector.broadcast %cst_22 : f32 to vector<64x128xf32>
    %55 = arith.maximumf %53, %54 : vector<64x128xf32>
    %56 = arith.truncf %55 : vector<64x128xf32> to vector<64x128xbf16>
    %c3 = arith.constant 3 : index
    %c0_23 = arith.constant 0 : index
    %c0_24 = arith.constant 0 : index
    %c0_25 = arith.constant 0 : index
    %c0_26 = arith.constant 0 : index
    %57 = vector.load %arg1[%c3, %c0_23, %c0_24, %c0_25, %c0_26] : memref<6x2x4x16x140xbf16, #tpu.memory_space<vmem>>, vector<1x2x4x16x140xbf16>
    %58 = vector.shape_cast %57 : vector<1x2x4x16x140xbf16> to vector<2x4x16x140xbf16>
    %59 = vector.shape_cast %58 : vector<2x4x16x140xbf16> to vector<128x140xbf16>
    %cst_27 = arith.constant dense<0.000000e+00> : vector<128x256xf32>
    %60 = tpu.matmul %59, %0, %cst_27 {dimension_numbers = #tpu.dot_dimension_numbers<[1], [0], [0], [1], [0, 0, 1, 1], [], []>} : vector<128x140xbf16>, vector<140x256xbf16>, vector<128x256xf32> -> vector<128x256xf32>
    %61 = vector.shape_cast %60 : vector<128x256xf32> to vector<2x64x256xf32>
    %62 = vector.extract_strided_slice %61 {offsets = [0, 0, 0], sizes = [1, 64, 256], strides = [1, 1, 1]} : vector<2x64x256xf32> to vector<1x64x256xf32>
    %63 = vector.shape_cast %62 : vector<1x64x256xf32> to vector<64x256xf32>
    %64 = vector.extract_strided_slice %61 {offsets = [1, 0, 0], sizes = [1, 64, 256], strides = [1, 1, 1]} : vector<2x64x256xf32> to vector<1x64x256xf32>
    %65 = vector.shape_cast %64 : vector<1x64x256xf32> to vector<64x256xf32>
    %66 = arith.maximumf %63, %65 : vector<64x256xf32>
    %67 = vector.extract_strided_slice %66 {offsets = [0, 0], sizes = [64, 128], strides = [1, 1]} : vector<64x256xf32> to vector<64x128xf32>
    %68 = vector.extract_strided_slice %66 {offsets = [0, 128], sizes = [64, 128], strides = [1, 1]} : vector<64x256xf32> to vector<64x128xf32>
    %69 = arith.maximumf %67, %68 : vector<64x128xf32>
    %70 = vector.broadcast %1 : vector<1x128xf32> to vector<64x128xf32>
    %71 = arith.addf %69, %70 : vector<64x128xf32>
    %cst_28 = arith.constant 0.000000e+00 : f32
    %72 = vector.broadcast %cst_28 : f32 to vector<64x128xf32>
    %73 = arith.maximumf %71, %72 : vector<64x128xf32>
    %74 = arith.truncf %73 : vector<64x128xf32> to vector<64x128xbf16>
    %c4 = arith.constant 4 : index
    %c0_29 = arith.constant 0 : index
    %c0_30 = arith.constant 0 : index
    %c0_31 = arith.constant 0 : index
    %c0_32 = arith.constant 0 : index
    %75 = vector.load %arg1[%c4, %c0_29, %c0_30, %c0_31, %c0_32] : memref<6x2x4x16x140xbf16, #tpu.memory_space<vmem>>, vector<1x2x4x16x140xbf16>
    %76 = vector.shape_cast %75 : vector<1x2x4x16x140xbf16> to vector<2x4x16x140xbf16>
    %77 = vector.shape_cast %76 : vector<2x4x16x140xbf16> to vector<128x140xbf16>
    %cst_33 = arith.constant dense<0.000000e+00> : vector<128x256xf32>
    %78 = tpu.matmul %77, %0, %cst_33 {dimension_numbers = #tpu.dot_dimension_numbers<[1], [0], [0], [1], [0, 0, 1, 1], [], []>} : vector<128x140xbf16>, vector<140x256xbf16>, vector<128x256xf32> -> vector<128x256xf32>
    %79 = vector.shape_cast %78 : vector<128x256xf32> to vector<2x64x256xf32>
    %80 = vector.extract_strided_slice %79 {offsets = [0, 0, 0], sizes = [1, 64, 256], strides = [1, 1, 1]} : vector<2x64x256xf32> to vector<1x64x256xf32>
    %81 = vector.shape_cast %80 : vector<1x64x256xf32> to vector<64x256xf32>
    %82 = vector.extract_strided_slice %79 {offsets = [1, 0, 0], sizes = [1, 64, 256], strides = [1, 1, 1]} : vector<2x64x256xf32> to vector<1x64x256xf32>
    %83 = vector.shape_cast %82 : vector<1x64x256xf32> to vector<64x256xf32>
    %84 = arith.maximumf %81, %83 : vector<64x256xf32>
    %85 = vector.extract_strided_slice %84 {offsets = [0, 0], sizes = [64, 128], strides = [1, 1]} : vector<64x256xf32> to vector<64x128xf32>
    %86 = vector.extract_strided_slice %84 {offsets = [0, 128], sizes = [64, 128], strides = [1, 1]} : vector<64x256xf32> to vector<64x128xf32>
    %87 = arith.maximumf %85, %86 : vector<64x128xf32>
    %88 = vector.broadcast %1 : vector<1x128xf32> to vector<64x128xf32>
    %89 = arith.addf %87, %88 : vector<64x128xf32>
    %cst_34 = arith.constant 0.000000e+00 : f32
    %90 = vector.broadcast %cst_34 : f32 to vector<64x128xf32>
    %91 = arith.maximumf %89, %90 : vector<64x128xf32>
    %92 = arith.truncf %91 : vector<64x128xf32> to vector<64x128xbf16>
    %c5 = arith.constant 5 : index
    %c0_35 = arith.constant 0 : index
    %c0_36 = arith.constant 0 : index
    %c0_37 = arith.constant 0 : index
    %c0_38 = arith.constant 0 : index
    %93 = vector.load %arg1[%c5, %c0_35, %c0_36, %c0_37, %c0_38] : memref<6x2x4x16x140xbf16, #tpu.memory_space<vmem>>, vector<1x2x4x16x140xbf16>
    %94 = vector.shape_cast %93 : vector<1x2x4x16x140xbf16> to vector<2x4x16x140xbf16>
    %95 = vector.shape_cast %94 : vector<2x4x16x140xbf16> to vector<128x140xbf16>
    %cst_39 = arith.constant dense<0.000000e+00> : vector<128x256xf32>
    %96 = tpu.matmul %95, %0, %cst_39 {dimension_numbers = #tpu.dot_dimension_numbers<[1], [0], [0], [1], [0, 0, 1, 1], [], []>} : vector<128x140xbf16>, vector<140x256xbf16>, vector<128x256xf32> -> vector<128x256xf32>
    %97 = vector.shape_cast %96 : vector<128x256xf32> to vector<2x64x256xf32>
    %98 = vector.extract_strided_slice %97 {offsets = [0, 0, 0], sizes = [1, 64, 256], strides = [1, 1, 1]} : vector<2x64x256xf32> to vector<1x64x256xf32>
    %99 = vector.shape_cast %98 : vector<1x64x256xf32> to vector<64x256xf32>
    %100 = vector.extract_strided_slice %97 {offsets = [1, 0, 0], sizes = [1, 64, 256], strides = [1, 1, 1]} : vector<2x64x256xf32> to vector<1x64x256xf32>
    %101 = vector.shape_cast %100 : vector<1x64x256xf32> to vector<64x256xf32>
    %102 = arith.maximumf %99, %101 : vector<64x256xf32>
    %103 = vector.extract_strided_slice %102 {offsets = [0, 0], sizes = [64, 128], strides = [1, 1]} : vector<64x256xf32> to vector<64x128xf32>
    %104 = vector.extract_strided_slice %102 {offsets = [0, 128], sizes = [64, 128], strides = [1, 1]} : vector<64x256xf32> to vector<64x128xf32>
    %105 = arith.maximumf %103, %104 : vector<64x128xf32>
    %106 = vector.broadcast %1 : vector<1x128xf32> to vector<64x128xf32>
    %107 = arith.addf %105, %106 : vector<64x128xf32>
    %cst_40 = arith.constant 0.000000e+00 : f32
    %108 = vector.broadcast %cst_40 : f32 to vector<64x128xf32>
    %109 = arith.maximumf %107, %108 : vector<64x128xf32>
    %110 = arith.truncf %109 : vector<64x128xf32> to vector<64x128xbf16>
    %c0_41 = arith.constant 0 : index
    %c0_42 = arith.constant 0 : index
    %c0_43 = arith.constant 0 : index
    %111 = vector.load %arg4[%c0_41, %c0_42, %c0_43] : memref<5x128x256xbf16, #tpu.memory_space<vmem>>, vector<1x128x256xbf16>
    %112 = vector.shape_cast %111 : vector<1x128x256xbf16> to vector<128x256xbf16>
    %cst_44 = arith.constant dense<0.000000e+00> : vector<64x256xf32>
    %113 = tpu.matmul %20, %112, %cst_44 {dimension_numbers = #tpu.dot_dimension_numbers<[1], [0], [0], [1], [0, 0, 1, 1], [], []>} : vector<64x128xbf16>, vector<128x256xbf16>, vector<64x256xf32> -> vector<64x256xf32>
    %c1_45 = arith.constant 1 : index
    %c0_46 = arith.constant 0 : index
    %c0_47 = arith.constant 0 : index
    %114 = vector.load %arg4[%c1_45, %c0_46, %c0_47] : memref<5x128x256xbf16, #tpu.memory_space<vmem>>, vector<1x128x256xbf16>
    %115 = vector.shape_cast %114 : vector<1x128x256xbf16> to vector<128x256xbf16>
    %cst_48 = arith.constant dense<0.000000e+00> : vector<64x256xf32>
    %116 = tpu.matmul %38, %115, %cst_48 {dimension_numbers = #tpu.dot_dimension_numbers<[1], [0], [0], [1], [0, 0, 1, 1], [], []>} : vector<64x128xbf16>, vector<128x256xbf16>, vector<64x256xf32> -> vector<64x256xf32>
    %117 = arith.addf %113, %116 : vector<64x256xf32>
    %c2_49 = arith.constant 2 : index
    %c0_50 = arith.constant 0 : index
    %c0_51 = arith.constant 0 : index
    %118 = vector.load %arg4[%c2_49, %c0_50, %c0_51] : memref<5x128x256xbf16, #tpu.memory_space<vmem>>, vector<1x128x256xbf16>
    %119 = vector.shape_cast %118 : vector<1x128x256xbf16> to vector<128x256xbf16>
    %cst_52 = arith.constant dense<0.000000e+00> : vector<64x256xf32>
    %120 = tpu.matmul %56, %119, %cst_52 {dimension_numbers = #tpu.dot_dimension_numbers<[1], [0], [0], [1], [0, 0, 1, 1], [], []>} : vector<64x128xbf16>, vector<128x256xbf16>, vector<64x256xf32> -> vector<64x256xf32>
    %121 = arith.addf %117, %120 : vector<64x256xf32>
    %c3_53 = arith.constant 3 : index
    %c0_54 = arith.constant 0 : index
    %c0_55 = arith.constant 0 : index
    %122 = vector.load %arg4[%c3_53, %c0_54, %c0_55] : memref<5x128x256xbf16, #tpu.memory_space<vmem>>, vector<1x128x256xbf16>
    %123 = vector.shape_cast %122 : vector<1x128x256xbf16> to vector<128x256xbf16>
    %cst_56 = arith.constant dense<0.000000e+00> : vector<64x256xf32>
    %124 = tpu.matmul %74, %123, %cst_56 {dimension_numbers = #tpu.dot_dimension_numbers<[1], [0], [0], [1], [0, 0, 1, 1], [], []>} : vector<64x128xbf16>, vector<128x256xbf16>, vector<64x256xf32> -> vector<64x256xf32>
    %125 = arith.addf %121, %124 : vector<64x256xf32>
    %c4_57 = arith.constant 4 : index
    %c0_58 = arith.constant 0 : index
    %c0_59 = arith.constant 0 : index
    %126 = vector.load %arg4[%c4_57, %c0_58, %c0_59] : memref<5x128x256xbf16, #tpu.memory_space<vmem>>, vector<1x128x256xbf16>
    %127 = vector.shape_cast %126 : vector<1x128x256xbf16> to vector<128x256xbf16>
    %cst_60 = arith.constant dense<0.000000e+00> : vector<64x256xf32>
    %128 = tpu.matmul %92, %127, %cst_60 {dimension_numbers = #tpu.dot_dimension_numbers<[1], [0], [0], [1], [0, 0, 1, 1], [], []>} : vector<64x128xbf16>, vector<128x256xbf16>, vector<64x256xf32> -> vector<64x256xf32>
    %129 = arith.addf %125, %128 : vector<64x256xf32>
    %c0_61 = arith.constant 0 : index
    %c0_62 = arith.constant 0 : index
    %c0_63 = arith.constant 0 : index
    %130 = vector.load %arg4[%c0_61, %c0_62, %c0_63] : memref<5x128x256xbf16, #tpu.memory_space<vmem>>, vector<1x128x256xbf16>
    %131 = vector.shape_cast %130 : vector<1x128x256xbf16> to vector<128x256xbf16>
    %cst_64 = arith.constant dense<0.000000e+00> : vector<64x256xf32>
    %132 = tpu.matmul %38, %131, %cst_64 {dimension_numbers = #tpu.dot_dimension_numbers<[1], [0], [0], [1], [0, 0, 1, 1], [], []>} : vector<64x128xbf16>, vector<128x256xbf16>, vector<64x256xf32> -> vector<64x256xf32>
    %c1_65 = arith.constant 1 : index
    %c0_66 = arith.constant 0 : index
    %c0_67 = arith.constant 0 : index
    %133 = vector.load %arg4[%c1_65, %c0_66, %c0_67] : memref<5x128x256xbf16, #tpu.memory_space<vmem>>, vector<1x128x256xbf16>
    %134 = vector.shape_cast %133 : vector<1x128x256xbf16> to vector<128x256xbf16>
    %cst_68 = arith.constant dense<0.000000e+00> : vector<64x256xf32>
    %135 = tpu.matmul %56, %134, %cst_68 {dimension_numbers = #tpu.dot_dimension_numbers<[1], [0], [0], [1], [0, 0, 1, 1], [], []>} : vector<64x128xbf16>, vector<128x256xbf16>, vector<64x256xf32> -> vector<64x256xf32>
    %136 = arith.addf %132, %135 : vector<64x256xf32>
    %c2_69 = arith.constant 2 : index
    %c0_70 = arith.constant 0 : index
    %c0_71 = arith.constant 0 : index
    %137 = vector.load %arg4[%c2_69, %c0_70, %c0_71] : memref<5x128x256xbf16, #tpu.memory_space<vmem>>, vector<1x128x256xbf16>
    %138 = vector.shape_cast %137 : vector<1x128x256xbf16> to vector<128x256xbf16>
    %cst_72 = arith.constant dense<0.000000e+00> : vector<64x256xf32>
    %139 = tpu.matmul %74, %138, %cst_72 {dimension_numbers = #tpu.dot_dimension_numbers<[1], [0], [0], [1], [0, 0, 1, 1], [], []>} : vector<64x128xbf16>, vector<128x256xbf16>, vector<64x256xf32> -> vector<64x256xf32>
    %140 = arith.addf %136, %139 : vector<64x256xf32>
    %c3_73 = arith.constant 3 : index
    %c0_74 = arith.constant 0 : index
    %c0_75 = arith.constant 0 : index
    %141 = vector.load %arg4[%c3_73, %c0_74, %c0_75] : memref<5x128x256xbf16, #tpu.memory_space<vmem>>, vector<1x128x256xbf16>
    %142 = vector.shape_cast %141 : vector<1x128x256xbf16> to vector<128x256xbf16>
    %cst_76 = arith.constant dense<0.000000e+00> : vector<64x256xf32>
    %143 = tpu.matmul %92, %142, %cst_76 {dimension_numbers = #tpu.dot_dimension_numbers<[1], [0], [0], [1], [0, 0, 1, 1], [], []>} : vector<64x128xbf16>, vector<128x256xbf16>, vector<64x256xf32> -> vector<64x256xf32>
    %144 = arith.addf %140, %143 : vector<64x256xf32>
    %c4_77 = arith.constant 4 : index
    %c0_78 = arith.constant 0 : index
    %c0_79 = arith.constant 0 : index
    %145 = vector.load %arg4[%c4_77, %c0_78, %c0_79] : memref<5x128x256xbf16, #tpu.memory_space<vmem>>, vector<1x128x256xbf16>
    %146 = vector.shape_cast %145 : vector<1x128x256xbf16> to vector<128x256xbf16>
    %cst_80 = arith.constant dense<0.000000e+00> : vector<64x256xf32>
    %147 = tpu.matmul %110, %146, %cst_80 {dimension_numbers = #tpu.dot_dimension_numbers<[1], [0], [0], [1], [0, 0, 1, 1], [], []>} : vector<64x128xbf16>, vector<128x256xbf16>, vector<64x256xf32> -> vector<64x256xf32>
    %148 = arith.addf %144, %147 : vector<64x256xf32>
    %149 = arith.maximumf %129, %148 : vector<64x256xf32>
    %150 = vector.extract_strided_slice %149 {offsets = [0, 0], sizes = [64, 128], strides = [1, 1]} : vector<64x256xf32> to vector<64x128xf32>
    %151 = vector.extract_strided_slice %149 {offsets = [0, 128], sizes = [64, 128], strides = [1, 1]} : vector<64x256xf32> to vector<64x128xf32>
    %152 = arith.maximumf %150, %151 : vector<64x128xf32>
    %153 = vector.broadcast %2 : vector<1x128xf32> to vector<64x128xf32>
    %154 = arith.addf %152, %153 : vector<64x128xf32>
    %cst_81 = arith.constant 0.000000e+00 : f32
    %155 = vector.broadcast %cst_81 : f32 to vector<64x128xf32>
    %156 = arith.maximumf %154, %155 : vector<64x128xf32>
    %157 = vector.shape_cast %156 : vector<64x128xf32> to vector<4x16x128xf32>
    %158 = vector.extract_strided_slice %157 {offsets = [0, 0, 0], sizes = [1, 16, 128], strides = [1, 1, 1]} : vector<4x16x128xf32> to vector<1x16x128xf32>
    %159 = vector.shape_cast %158 : vector<1x16x128xf32> to vector<16x128xf32>
    %160 = arith.truncf %159 : vector<16x128xf32> to vector<16x128xbf16>
    %c0_82 = arith.constant 0 : index
    %c0_83 = arith.constant 0 : index
    %c0_84 = arith.constant 0 : index
    %161 = vector.load %arg6[%c0_82, %c0_83, %c0_84] : memref<4x128x50xbf16, #tpu.memory_space<vmem>>, vector<1x128x50xbf16>
    %162 = vector.shape_cast %161 : vector<1x128x50xbf16> to vector<128x50xbf16>
    %cst_85 = arith.constant dense<0.000000e+00> : vector<16x50xf32>
    %163 = tpu.matmul %160, %162, %cst_85 {dimension_numbers = #tpu.dot_dimension_numbers<[1], [0], [0], [1], [0, 0, 1, 1], [], []>} : vector<16x128xbf16>, vector<128x50xbf16>, vector<16x50xf32> -> vector<16x50xf32>
    %164 = vector.extract_strided_slice %157 {offsets = [1, 0, 0], sizes = [1, 16, 128], strides = [1, 1, 1]} : vector<4x16x128xf32> to vector<1x16x128xf32>
    %165 = vector.shape_cast %164 : vector<1x16x128xf32> to vector<16x128xf32>
    %166 = arith.truncf %165 : vector<16x128xf32> to vector<16x128xbf16>
    %c1_86 = arith.constant 1 : index
    %c0_87 = arith.constant 0 : index
    %c0_88 = arith.constant 0 : index
    %167 = vector.load %arg6[%c1_86, %c0_87, %c0_88] : memref<4x128x50xbf16, #tpu.memory_space<vmem>>, vector<1x128x50xbf16>
    %168 = vector.shape_cast %167 : vector<1x128x50xbf16> to vector<128x50xbf16>
    %cst_89 = arith.constant dense<0.000000e+00> : vector<16x50xf32>
    %169 = tpu.matmul %166, %168, %cst_89 {dimension_numbers = #tpu.dot_dimension_numbers<[1], [0], [0], [1], [0, 0, 1, 1], [], []>} : vector<16x128xbf16>, vector<128x50xbf16>, vector<16x50xf32> -> vector<16x50xf32>
    %170 = arith.addf %163, %169 : vector<16x50xf32>
    %171 = vector.extract_strided_slice %157 {offsets = [2, 0, 0], sizes = [1, 16, 128], strides = [1, 1, 1]} : vector<4x16x128xf32> to vector<1x16x128xf32>
    %172 = vector.shape_cast %171 : vector<1x16x128xf32> to vector<16x128xf32>
    %173 = arith.truncf %172 : vector<16x128xf32> to vector<16x128xbf16>
    %c2_90 = arith.constant 2 : index
    %c0_91 = arith.constant 0 : index
    %c0_92 = arith.constant 0 : index
    %174 = vector.load %arg6[%c2_90, %c0_91, %c0_92] : memref<4x128x50xbf16, #tpu.memory_space<vmem>>, vector<1x128x50xbf16>
    %175 = vector.shape_cast %174 : vector<1x128x50xbf16> to vector<128x50xbf16>
    %cst_93 = arith.constant dense<0.000000e+00> : vector<16x50xf32>
    %176 = tpu.matmul %173, %175, %cst_93 {dimension_numbers = #tpu.dot_dimension_numbers<[1], [0], [0], [1], [0, 0, 1, 1], [], []>} : vector<16x128xbf16>, vector<128x50xbf16>, vector<16x50xf32> -> vector<16x50xf32>
    %177 = arith.addf %170, %176 : vector<16x50xf32>
    %178 = vector.extract_strided_slice %157 {offsets = [3, 0, 0], sizes = [1, 16, 128], strides = [1, 1, 1]} : vector<4x16x128xf32> to vector<1x16x128xf32>
    %179 = vector.shape_cast %178 : vector<1x16x128xf32> to vector<16x128xf32>
    %180 = arith.truncf %179 : vector<16x128xf32> to vector<16x128xbf16>
    %c3_94 = arith.constant 3 : index
    %c0_95 = arith.constant 0 : index
    %c0_96 = arith.constant 0 : index
    %181 = vector.load %arg6[%c3_94, %c0_95, %c0_96] : memref<4x128x50xbf16, #tpu.memory_space<vmem>>, vector<1x128x50xbf16>
    %182 = vector.shape_cast %181 : vector<1x128x50xbf16> to vector<128x50xbf16>
    %cst_97 = arith.constant dense<0.000000e+00> : vector<16x50xf32>
    %183 = tpu.matmul %180, %182, %cst_97 {dimension_numbers = #tpu.dot_dimension_numbers<[1], [0], [0], [1], [0, 0, 1, 1], [], []>} : vector<16x128xbf16>, vector<128x50xbf16>, vector<16x50xf32> -> vector<16x50xf32>
    %184 = arith.addf %177, %183 : vector<16x50xf32>
    %c0_98 = arith.constant 0 : index
    %c0_99 = arith.constant 0 : index
    %185 = vector.load %arg7[%c0_98, %c0_99] : memref<1x50xf32, #tpu.memory_space<vmem>>, vector<1x50xf32>
    %186 = vector.broadcast %185 : vector<1x50xf32> to vector<16x50xf32>
    %187 = arith.addf %184, %186 : vector<16x50xf32>
    %cst_100 = arith.constant 0.000000e+00 : f32
    %188 = vector.broadcast %cst_100 : f32 to vector<16x50xf32>
    %189 = arith.maximumf %187, %188 : vector<16x50xf32>
    %190 = arith.truncf %189 : vector<16x50xf32> to vector<16x50xbf16>
    %c0_101 = arith.constant 0 : index
    %c0_102 = arith.constant 0 : index
    %191 = vector.load %arg8[%c0_101, %c0_102] : memref<50x10xbf16, #tpu.memory_space<vmem>>, vector<50x10xbf16>
    %cst_103 = arith.constant dense<0.000000e+00> : vector<16x10xf32>
    %192 = tpu.matmul %190, %191, %cst_103 {dimension_numbers = #tpu.dot_dimension_numbers<[1], [0], [0], [1], [0, 0, 1, 1], [], []>} : vector<16x50xbf16>, vector<50x10xbf16>, vector<16x10xf32> -> vector<16x10xf32>
    %c0_104 = arith.constant 0 : index
    %c0_105 = arith.constant 0 : index
    %193 = vector.load %arg9[%c0_104, %c0_105] : memref<1x10xf32, #tpu.memory_space<vmem>>, vector<1x10xf32>
    %194 = vector.broadcast %193 : vector<1x10xf32> to vector<16x10xf32>
    %195 = arith.addf %192, %194 : vector<16x10xf32>
    %cst_106 = arith.constant dense<0xFF800000> : vector<16xf32>
    %196 = vector.multi_reduction <maximumf>, %195, %cst_106 [1] : vector<16x10xf32> to vector<16xf32>
    %197 = vector.shape_cast %196 : vector<16xf32> to vector<16x1xf32>
    %198 = vector.broadcast %197 : vector<16x1xf32> to vector<16x10xf32>
    %199 = arith.subf %195, %198 : vector<16x10xf32>
    %200 = math.exp %199 : vector<16x10xf32>
    %cst_107 = arith.constant dense<0.000000e+00> : vector<16xf32>
    %201 = vector.multi_reduction <add>, %200, %cst_107 [1] : vector<16x10xf32> to vector<16xf32>
    %202 = vector.shape_cast %201 : vector<16xf32> to vector<16x1xf32>
    %203 = math.log %202 : vector<16x1xf32>
    %204 = vector.broadcast %203 : vector<16x1xf32> to vector<16x10xf32>
    %205 = arith.subf %199, %204 : vector<16x10xf32>
    %c0_108 = arith.constant 0 : index
    %c0_109 = arith.constant 0 : index
    %206 = vector.load %arg10[%c0_108, %c0_109] : memref<16x10xf32, #tpu.memory_space<vmem>>, vector<16x10xf32>
    tpu.vector_store %arg10[%c0_108, %c0_109], %205 {strides = array<i32>} : memref<16x10xf32, #tpu.memory_space<vmem>>, vector<16x10xf32>,
    return
  }
  func.func @transform_0(%arg0: i32) -> (i32, i32, i32, i32, i32) {
    %c0_i32 = arith.constant 0 : i32
    %c0_i32_0 = arith.constant 0 : i32
    %c0_i32_1 = arith.constant 0 : i32
    %c0_i32_2 = arith.constant 0 : i32
    %c0_i32_3 = arith.constant 0 : i32
    return %c0_i32, %c0_i32_0, %c0_i32_1, %arg0, %c0_i32_2 : i32, i32, i32, i32, i32
  }
  func.func @transform_1(%arg0: i32) -> (i32, i32) {
    %c0_i32 = arith.constant 0 : i32
    %c0_i32_0 = arith.constant 0 : i32
    %c0_i32_1 = arith.constant 0 : i32
    return %c0_i32, %c0_i32_0 : i32, i32
  }
  func.func @transform_2(%arg0: i32) -> (i32, i32) {
    %c0_i32 = arith.constant 0 : i32
    %c0_i32_0 = arith.constant 0 : i32
    %c0_i32_1 = arith.constant 0 : i32
    return %c0_i32, %c0_i32_0 : i32, i32
  }
  func.func @transform_3(%arg0: i32) -> (i32, i32, i32) {
    %c0_i32 = arith.constant 0 : i32
    %c0_i32_0 = arith.constant 0 : i32
    %c0_i32_1 = arith.constant 0 : i32
    %c0_i32_2 = arith.constant 0 : i32
    return %c0_i32, %c0_i32_0, %c0_i32_1 : i32, i32, i32
  }
  func.func @transform_4(%arg0: i32) -> (i32, i32) {
    %c0_i32 = arith.constant 0 : i32
    %c0_i32_0 = arith.constant 0 : i32
    %c0_i32_1 = arith.constant 0 : i32
    return %c0_i32, %c0_i32_0 : i32, i32
  }
  func.func @transform_5(%arg0: i32) -> (i32, i32, i32) {
    %c0_i32 = arith.constant 0 : i32
    %c0_i32_0 = arith.constant 0 : i32
    %c0_i32_1 = arith.constant 0 : i32
    %c0_i32_2 = arith.constant 0 : i32
    return %c0_i32, %c0_i32_0, %c0_i32_1 : i32, i32, i32
  }
  func.func @transform_6(%arg0: i32) -> (i32, i32) {
    %c0_i32 = arith.constant 0 : i32
    %c0_i32_0 = arith.constant 0 : i32
    %c0_i32_1 = arith.constant 0 : i32
    return %c0_i32, %c0_i32_0 : i32, i32
  }
  func.func @transform_7(%arg0: i32) -> (i32, i32) {
    %c0_i32 = arith.constant 0 : i32
    %c0_i32_0 = arith.constant 0 : i32
    %c0_i32_1 = arith.constant 0 : i32
    return %c0_i32, %c0_i32_0 : i32, i32
  }
  func.func @transform_8(%arg0: i32) -> (i32, i32) {
    %c0_i32 = arith.constant 0 : i32
    %c0_i32_0 = arith.constant 0 : i32
    %c0_i32_1 = arith.constant 0 : i32
    return %c0_i32, %c0_i32_0 : i32, i32
  }
  func.func @transform_9(%arg0: i32) -> (i32, i32) {
    %c0_i32 = arith.constant 0 : i32
    %c0_i32_0 = arith.constant 0 : i32
    return %arg0, %c0_i32 : i32, i32
  }
}

</mosaic_0001>

<llo_original>
// kernel: tile.19
$region0: #{tile.19}
  %s0 = inlined_call_operand.vmem [shape: f32[4,20], index: 0, kind: input, shape index: {}]
  %s1 = inlined_call_operand.vmem [shape: f32[80], index: 1, kind: output, shape index: {}]
  $region1: #{tile.19} parent=0
    #allocation0 [shape = 'u8[4096]{0}', space=vmem, size = 0x1000, scoped, tag = 'scoped mem for output reshape']
    #allocation1 [shape = 'u8[4096]{0}', space=vmem, size = 0x1000, scoped, tag = 'scoped mem for input reshape']
    %s3 = sshllo.u32 0, 4
    %v4 = vld [vmem:[%s0] sm:%s3]
    %5 = vst [vmem:[#allocation1] sm:%s3] %v4
    %v6 = vld [vmem:[#allocation1] sm:$0x1]
    %vm7 = vcmask 162816
    %8 = vst.msk [vmem:[#allocation0] sm:$0x1] %vm7, %v6
    %s9 = scalar_lea.vmem [#allocation1], 3
    %v10 = vld [vmem:[%s9] sm:$0x1]
    %11 = vrot.lane.b32.xlu0 %v10, 60
    %v12 = vpop.permute.xlu0 %11
    %vm13 = vcmask 654816
    %14 = vst.msk [vmem:[#allocation0] sm:$0x1] %vm13, %v12
    %s15 = scalar_lea.vmem [#allocation1], 2
    %v16 = vld [vmem:[%s15] sm:$0x1]
    %17 = vrot.lane.b32.xlu0 %v16, 40
    %v18 = vpop.permute.xlu0 %17
    %vm19 = vcmask 490816
    %20 = vst.msk [vmem:[#allocation0] sm:$0x1] %vm19, %v18
    %s21 = scalar_lea.vmem [#allocation1], 1
    %v22 = vld [vmem:[%s21] sm:$0x1]
    %23 = vrot.lane.b32.xlu0 %v22, 20
    %v24 = vpop.permute.xlu0 %23
    %vm25 = vcmask 326816
    %26 = vst.msk [vmem:[#allocation0] sm:$0x1] %vm25, %v24
    %s28 = sshllo.u32 0, 1
    %v30 = vld [vmem:[#allocation0] sm:%s28]
    %s31 = sshllo.u32 0, 1
    %32 = vst [vmem:[%s1] sm:%s31] %v30

// kernel: tile.14
$region0: #{tile.14}
  %s0 = inlined_call_operand.vmem [shape: f32[12,10], index: 0, kind: input, shape index: {}]
  %s1 = inlined_call_operand.vmem [shape: f32[120], index: 1, kind: output, shape index: {}]
  $region1: #{tile.14} parent=0
    #allocation0 [shape = 'u8[4096]{0}', space=vmem, size = 0x1000, scoped, tag = 'scoped mem for output reshape']
    %v2 = vld [vmem:[%s0] sm:$0x1]
    %vm3 = vcmask 80896
    %4 = vst.msk [vmem:[#allocation0] sm:$0x1] %vm3, %v2
    %s5 = scalar_lea.vmem %s0, 11
    %v6 = vld [vmem:[%s5] sm:$0x1]
    %7 = vrot.lane.b32.xlu0 %v6, 110
    %v8 = vpop.permute.xlu0 %7
    %vm9 = vcmask 982896
    %10 = vst.msk [vmem:[#allocation0] sm:$0x1] %vm9, %v8
    %s11 = scalar_lea.vmem %s0, 10
    %v12 = vld [vmem:[%s11] sm:$0x1]
    %13 = vrot.lane.b32.xlu0 %v12, 100
    %v14 = vpop.permute.xlu0 %13
    %vm15 = vcmask 900896
    %16 = vst.msk [vmem:[#allocation0] sm:$0x1] %vm15, %v14
    %s17 = scalar_lea.vmem %s0, 9
    %v18 = vld [vmem:[%s17] sm:$0x1]
    %19 = vrot.lane.b32.xlu0 %v18, 90
    %v20 = vpop.permute.xlu0 %19
    %vm21 = vcmask 818896
    %22 = vst.msk [vmem:[#allocation0] sm:$0x1] %vm21, %v20
    %s23 = scalar_lea.vmem %s0, 8
    %v24 = vld [vmem:[%s23] sm:$0x1]
    %25 = vrot.lane.b32.xlu0 %v24, 80
    %v26 = vpop.permute.xlu0 %25
    %vm27 = vcmask 736896
    %28 = vst.msk [vmem:[#allocation0] sm:$0x1] %vm27, %v26
    %s29 = scalar_lea.vmem %s0, 7
    %v30 = vld [vmem:[%s29] sm:$0x1]
    %31 = vrot.lane.b32.xlu0 %v30, 70
    %v32 = vpop.permute.xlu0 %31
    %vm33 = vcmask 654896
    %34 = vst.msk [vmem:[#allocation0] sm:$0x1] %vm33, %v32
    %s35 = scalar_lea.vmem %s0, 6
    %v36 = vld [vmem:[%s35] sm:$0x1]
    %37 = vrot.lane.b32.xlu0 %v36, 60
    %v38 = vpop.permute.xlu0 %37
    %vm39 = vcmask 572896
    %40 = vst.msk [vmem:[#allocation0] sm:$0x1] %vm39, %v38
    %s41 = scalar_lea.vmem %s0, 5
    %v42 = vld [vmem:[%s41] sm:$0x1]
    %43 = vrot.lane.b32.xlu0 %v42, 50
    %v44 = vpop.permute.xlu0 %43
    %vm45 = vcmask 490896
    %46 = vst.msk [vmem:[#allocation0] sm:$0x1] %vm45, %v44
    %s47 = scalar_lea.vmem %s0, 4
    %v48 = vld [vmem:[%s47] sm:$0x1]
    %49 = vrot.lane.b32.xlu0 %v48, 40
    %v50 = vpop.permute.xlu0 %49
    %vm51 = vcmask 408896
    %52 = vst.msk [vmem:[#allocation0] sm:$0x1] %vm51, %v50
    %s53 = scalar_lea.vmem %s0, 3
    %v54 = vld [vmem:[%s53] sm:$0x1]
    %55 = vrot.lane.b32.xlu0 %v54, 30
    %v56 = vpop.permute.xlu0 %55
    %vm57 = vcmask 326896
    %58 = vst.msk [vmem:[#allocation0] sm:$0x1] %vm57, %v56
    %s59 = scalar_lea.vmem %s0, 2
    %v60 = vld [vmem:[%s59] sm:$0x1]
    %61 = vrot.lane.b32.xlu0 %v60, 20
    %v62 = vpop.permute.xlu0 %61
    %vm63 = vcmask 244896
    %64 = vst.msk [vmem:[#allocation0] sm:$0x1] %vm63, %v62
    %s65 = scalar_lea.vmem %s0, 1
    %v66 = vld [vmem:[%s65] sm:$0x1]
    %67 = vrot.lane.b32.xlu0 %v66, 10
    %v68 = vpop.permute.xlu0 %67
    %vm69 = vcmask 162896
    %70 = vst.msk [vmem:[#allocation0] sm:$0x1] %vm69, %v68
    %s72 = sshllo.u32 0, 1
    %v74 = vld [vmem:[#allocation0] sm:%s72]
    %s75 = sshllo.u32 0, 1
    %76 = vst [vmem:[%s1] sm:%s75] %v74

// kernel: tile.18
$region0: #{tile.18}
  #allocation2 [shape = 's32[1]{0}', space=sflag, size = 0x4, scoped, tag = 'scoped memory for tile.18']
  %s0 = inlined_call_operand.hbm [shape: f32[20], index: 0, kind: input, shape index: {}]
  %s1 = inlined_call_operand.vmem [shape: f32[4,20], index: 1, kind: output, shape index: {}]
  $region1: #{tile.18} parent=0
    #allocation0 [shape = 'u8[512]{0}', space=vmem, size = 0x400, scoped, tag = 'operand span for operand 0']
    #allocation1 [shape = 's32[1]{0}', space=sflag, size = 0x4, scoped, tag = 'scoped memory for tile.18']
    %2 = vsyncpa [#allocation1], 0
    // Predicated region
    $region2: #{tile.18} parent=1 // pred_check
      _
    $region3: #{tile.18} parent=1 // pred_check_branch
      %4 = sbr.rel (0) target = $region5
    $region4: #{tile.18} parent=1 // pred_region
      %s6 = ssub.s32 16, 16
      %7 = vsyncadd [#allocation1], %s6
      %s9 = sshll.u32 [#allocation0], 4
      %s10 = int_to_ptr.vmem [resolvable:$true] %s9
      %12 = dma.hbm_to_vmem [thread:$0]  %s0, 16, %s10, [#allocation1]
    $region5: #{tile.18} parent=1 // pred_fallthru
      _
    // Predicated region
    $region6: #{tile.18} parent=1 // pred_check
      _
    $region7: #{tile.18} parent=1 // pred_check_branch
      %14 = sbr.rel (0) target = $region9
    $region8: #{tile.18} parent=1 // pred_region
      %15 = dma.done [#allocation1], 16
    $region9: #{tile.18} parent=1 // pred_fallthru
      _
    %v16 = vld [vmem:[#allocation0] ss:$0 sm:$0xff]
    %17 = vst [vmem:[%s1] sm:$0xf] %v16
    %18 = vsyncpa [#allocation1], 1

// kernel: tile.13
$region0: #{tile.13}
  #allocation2 [shape = 's32[1]{0}', space=sflag, size = 0x4, scoped, tag = 'scoped memory for tile.13']
  %s0 = inlined_call_operand.hbm [shape: f32[10], index: 0, kind: input, shape index: {}]
  %s1 = inlined_call_operand.vmem [shape: f32[12,10], index: 1, kind: output, shape index: {}]
  $region1: #{tile.13} parent=0
    #allocation0 [shape = 'u8[512]{0}', space=vmem, size = 0x400, scoped, tag = 'operand span for operand 0']
    #allocation1 [shape = 's32[1]{0}', space=sflag, size = 0x4, scoped, tag = 'scoped memory for tile.13']
    %2 = vsyncpa [#allocation1], 0
    // Predicated region
    $region2: #{tile.13} parent=1 // pred_check
      _
    $region3: #{tile.13} parent=1 // pred_check_branch
      %4 = sbr.rel (0) target = $region5
    $region4: #{tile.13} parent=1 // pred_region
      %s6 = ssub.s32 16, 16
      %7 = vsyncadd [#allocation1], %s6
      %s9 = sshll.u32 [#allocation0], 4
      %s10 = int_to_ptr.vmem [resolvable:$true] %s9
      %12 = dma.hbm_to_vmem [thread:$0]  %s0, 16, %s10, [#allocation1]
    $region5: #{tile.13} parent=1 // pred_fallthru
      _
    // Predicated region
    $region6: #{tile.13} parent=1 // pred_check
      _
    $region7: #{tile.13} parent=1 // pred_check_branch
      %14 = sbr.rel (0) target = $region9
    $region8: #{tile.13} parent=1 // pred_region
      %15 = dma.done [#allocation1], 16
    $region9: #{tile.13} parent=1 // pred_fallthru
      _
    %v16 = vld [vmem:[#allocation0] ss:$0 sm:$0xff]
    %17 = vst [vmem:[%s1] sm:$0xff] %v16
    %s18 = scalar_lea.vmem %s1, 8
    %19 = vst [vmem:[%s18] sm:$0xff] %v16
    %20 = vsyncpa [#allocation1], 1

// kernel: net_forward.1
$region0: #{net_forward.1}
  #allocation0 [shape = 'u32[]', space=smem, size = 0x4, offset = 0x4, fixed_abs, tag = 'smem constant byte address 0x4 - core index']
  #allocation1 [shape = 'u32[144,128]{1,0:T(1,128)}', space=vmem, size = 0x12000, scoped, tag = 'internal scratch']
  %s0 = inlined_call_operand.vmem [shape: bf16[6,2,4,16,140], index: 0, kind: input, shape index: {}]
  %s1 = inlined_call_operand.vmem [shape: bf16[140,256], index: 1, kind: input, shape index: {}]
  %s2 = inlined_call_operand.vmem [shape: f32[1,128], index: 2, kind: input, shape index: {}]
  %s3 = inlined_call_operand.vmem [shape: bf16[5,128,256], index: 3, kind: input, shape index: {}]
  %s4 = inlined_call_operand.vmem [shape: f32[1,128], index: 4, kind: input, shape index: {}]
  %s5 = inlined_call_operand.vmem [shape: bf16[4,128,50], index: 5, kind: input, shape index: {}]
  %s6 = inlined_call_operand.vmem [shape: f32[1,50], index: 6, kind: input, shape index: {}]
  %s7 = inlined_call_operand.vmem [shape: bf16[50,10], index: 7, kind: input, shape index: {}]
  %s8 = inlined_call_operand.vmem [shape: f32[1,10], index: 8, kind: input, shape index: {}]
  %s9 = inlined_call_operand.vmem [shape: f32[16,10], index: 9, kind: output, shape index: {}]
  %s10 = sld [smem:[#allocation0]]
  $region46: #{net_forward.1} parent=0
    _
  %s12 = ssub.s32 1, %s10
  %s13 = scalar_select 0, %s12, %s10
  // Predicated region
  $region2: #{net_forward.1} parent=0 // pred_check
    _
  $region3: #{net_forward.1} parent=0 // pred_check_branch
    %15 = sbr.rel (0) target = $region5
  $region4: #{net_forward.1} parent=0 // pred_region
    _
  $region5: #{net_forward.1} parent=0 // pred_fallthru
    _
  // Predicated region
  $region6: #{net_forward.1} parent=0 // pred_check
    _
  $region7: #{net_forward.1} parent=0 // pred_check_branch
    %17 = sbr.rel (0) target = $region9
  $region8: #{net_forward.1} parent=0 // pred_region
    _
  $region9: #{net_forward.1} parent=0 // pred_fallthru
    _
  // Predicated region
  $region10: #{net_forward.1} parent=0 // pred_check
    _
  $region11: #{net_forward.1} parent=0 // pred_check_branch
    %19 = sbr.rel (0) target = $region13
  $region12: #{net_forward.1} parent=0 // pred_region
    _
  $region13: #{net_forward.1} parent=0 // pred_fallthru
    _
  // Predicated region
  $region14: #{net_forward.1} parent=0 // pred_check
    _
  $region15: #{net_forward.1} parent=0 // pred_check_branch
    %21 = sbr.rel (0) target = $region17
  $region16: #{net_forward.1} parent=0 // pred_region
    _
  $region17: #{net_forward.1} parent=0 // pred_fallthru
    _
  // Predicated region
  $region18: #{net_forward.1} parent=0 // pred_check
    _
  $region19: #{net_forward.1} parent=0 // pred_check_branch
    %23 = sbr.rel (0) target = $region21
  $region20: #{net_forward.1} parent=0 // pred_region
    _
  $region21: #{net_forward.1} parent=0 // pred_fallthru
    _
  // Predicated region
  $region22: #{net_forward.1} parent=0 // pred_check
    _
  $region23: #{net_forward.1} parent=0 // pred_check_branch
    %25 = sbr.rel (0) target = $region25
  $region24: #{net_forward.1} parent=0 // pred_region
    _
  $region25: #{net_forward.1} parent=0 // pred_fallthru
    _
  // Predicated region
  $region26: #{net_forward.1} parent=0 // pred_check
    _
  $region27: #{net_forward.1} parent=0 // pred_check_branch
    %27 = sbr.rel (0) target = $region29
  $region28: #{net_forward.1} parent=0 // pred_region
    _
  $region29: #{net_forward.1} parent=0 // pred_fallthru
    _
  // Predicated region
  $region30: #{net_forward.1} parent=0 // pred_check
    _
  $region31: #{net_forward.1} parent=0 // pred_check_branch
    %29 = sbr.rel (0) target = $region33
  $region32: #{net_forward.1} parent=0 // pred_region
    _
  $region33: #{net_forward.1} parent=0 // pred_fallthru
    _
  // Predicated region
  $region34: #{net_forward.1} parent=0 // pred_check
    _
  $region35: #{net_forward.1} parent=0 // pred_check_branch
    %31 = sbr.rel (0) target = $region37
  $region36: #{net_forward.1} parent=0 // pred_region
    _
  $region37: #{net_forward.1} parent=0 // pred_fallthru
    _
  %v33 = vld [vmem:[%s1] sm:$0xff]
  %v34 = vld [vmem:[%s1 + $0x8] sm:$0xff]
  %v35 = vld [vmem:[%s1 + $0x10] sm:$0xff]
  %v36 = vld [vmem:[%s1 + $0x18] sm:$0xff]
  %v37 = vld [vmem:[%s1 + $0x20] sm:$0xff]
  %v38 = vld [vmem:[%s1 + $0x28] sm:$0xff]
  %v39 = vld [vmem:[%s1 + $0x30] sm:$0xff]
  %v40 = vld [vmem:[%s1 + $0x38] sm:$0xff]
  %v41 = vld [vmem:[%s1 + $0x40] sm:$0xff]
  %v42 = vld [vmem:[%s1 + $0x48] sm:$0xff]
  %v43 = vld [vmem:[%s1 + $0x50] sm:$0xff]
  %v44 = vld [vmem:[%s1 + $0x58] sm:$0xff]
  %v45 = vld [vmem:[%s1 + $0x60] sm:$0xff]
  %v46 = vld [vmem:[%s1 + $0x68] sm:$0xff]
  %v47 = vld [vmem:[%s1 + $0x70] sm:$0xff]
  %v48 = vld [vmem:[%s1 + $0x78] sm:$0xff]
  %v49 = vld [vmem:[%s1 + $0x80] sm:$0xff]
  %v50 = vld [vmem:[%s1 + $0x88] sm:$0x33]
  %v51 = vld [vmem:[%s2] sm:$0x1]
  %v52 = vld [vmem:[%s4] sm:$0x1]
  %v53 = vld [vmem:[%s0] sm:$0xff]
  %v54 = vld [vmem:[%s0 + $0x8] sm:$0xff]
  %v55 = vld [vmem:[%s0 + $0x10] sm:$0xff]
  %v56 = vld [vmem:[%s0 + $0x18] sm:$0xff]
  %v57 = vld [vmem:[%s0 + $0x20] sm:$0xff]
  %v58 = vld [vmem:[%s0 + $0x28] sm:$0xff]
  %v59 = vld [vmem:[%s0 + $0x30] sm:$0xff]
  %v60 = vld [vmem:[%s0 + $0x38] sm:$0xff]
  %v61 = vld [vmem:[%s0 + $0x40] sm:$0xff]
  %v62 = vld [vmem:[%s0 + $0x48] sm:$0xff]
  %v63 = vld [vmem:[%s0 + $0x50] sm:$0xff]
  %v64 = vld [vmem:[%s0 + $0x58] sm:$0xff]
  %v65 = vld [vmem:[%s0 + $0x60] sm:$0xff]
  %v66 = vld [vmem:[%s0 + $0x68] sm:$0xff]
  %v67 = vld [vmem:[%s0 + $0x70] sm:$0xff]
  %v68 = vld [vmem:[%s0 + $0x78] sm:$0xff]
  %v85 = vunpack.c.l.b16 %v53
  %v86 = vunpack.c.h.b16 %v53
  %v87 = vunpack.c.l.b16 %v54
  %v88 = vunpack.c.h.b16 %v54
  %v89 = vunpack.c.l.b16 %v55
  %v90 = vunpack.c.h.b16 %v55
  %v91 = vunpack.c.l.b16 %v56
  %v92 = vunpack.c.h.b16 %v56
  %v93 = vunpack.c.l.b16 %v57
  %v94 = vunpack.c.h.b16 %v57
  %v95 = vunpack.c.l.b16 %v58
  %v96 = vunpack.c.h.b16 %v58
  %v97 = vunpack.c.l.b16 %v59
  %v98 = vunpack.c.h.b16 %v59
  %v99 = vunpack.c.l.b16 %v60
  %v100 = vunpack.c.h.b16 %v60
  %v101 = vunpack.c.l.b16 %v61
  %v102 = vunpack.c.h.b16 %v61
  %v103 = vunpack.c.l.b16 %v62
  %v104 = vunpack.c.h.b16 %v62
  %v105 = vunpack.c.l.b16 %v63
  %v106 = vunpack.c.h.b16 %v63
  %v107 = vunpack.c.l.b16 %v64
  %v108 = vunpack.c.h.b16 %v64
  %v109 = vunpack.c.l.b16 %v65
  %v110 = vunpack.c.h.b16 %v65
  %v111 = vunpack.c.l.b16 %v66
  %v112 = vunpack.c.h.b16 %v66
  %v113 = vunpack.c.l.b16 %v67
  %v114 = vunpack.c.h.b16 %v67
  %v115 = vunpack.c.l.b16 %v68
  %v116 = vunpack.c.h.b16 %v68
  %v117 = vpack.c.b16 %v87, %v85
  %v118 = vpack.c.b16 %v88, %v86
  %v119 = vpack.c.b16 %v91, %v89
  %v120 = vpack.c.b16 %v92, %v90
  %v121 = vpack.c.b16 %v95, %v93
  %v122 = vpack.c.b16 %v96, %v94
  %v123 = vpack.c.b16 %v99, %v97
  %v124 = vpack.c.b16 %v100, %v98
  %v125 = vpack.c.b16 %v103, %v101
  %v126 = vpack.c.b16 %v104, %v102
  %v127 = vpack.c.b16 %v107, %v105
  %v128 = vpack.c.b16 %v108, %v106
  %v129 = vpack.c.b16 %v111, %v109
  %v130 = vpack.c.b16 %v112, %v110
  %v131 = vpack.c.b16 %v115, %v113
  %v132 = vpack.c.b16 %v116, %v114
  %v159 = vunpack.c.l.b16 %v33
  %v160 = vunpack.c.h.b16 %v33
  %v161 = vunpack.c.l.b16 %v34
  %v162 = vunpack.c.h.b16 %v34
  %v163 = vunpack.c.l.b16 %v35
  %v164 = vunpack.c.h.b16 %v35
  %v165 = vunpack.c.l.b16 %v36
  %v166 = vunpack.c.h.b16 %v36
  %v167 = vunpack.c.l.b16 %v37
  %v168 = vunpack.c.h.b16 %v37
  %v169 = vunpack.c.l.b16 %v38
  %v170 = vunpack.c.h.b16 %v38
  %v171 = vunpack.c.l.b16 %v39
  %v172 = vunpack.c.h.b16 %v39
  %v173 = vunpack.c.l.b16 %v40
  %v174 = vunpack.c.h.b16 %v40
  %v175 = vunpack.c.l.b16 %v41
  %v176 = vunpack.c.h.b16 %v41
  %v177 = vunpack.c.l.b16 %v42
  %v178 = vunpack.c.h.b16 %v42
  %v179 = vunpack.c.l.b16 %v43
  %v180 = vunpack.c.h.b16 %v43
  %v181 = vunpack.c.l.b16 %v44
  %v182 = vunpack.c.h.b16 %v44
  %v183 = vunpack.c.l.b16 %v45
  %v184 = vunpack.c.h.b16 %v45
  %v185 = vunpack.c.l.b16 %v46
  %v186 = vunpack.c.h.b16 %v46
  %v187 = vunpack.c.l.b16 %v47
  %v188 = vunpack.c.h.b16 %v47
  %v189 = vunpack.c.l.b16 %v48
  %v190 = vunpack.c.h.b16 %v48
  %v191 = vunpack.c.l.b16 %v49
  %v192 = vunpack.c.h.b16 %v49
  %v193 = vunpack.c.l.b16 %v50
  %v194 = vunpack.c.h.b16 %v50
  %v195 = vpack.c.b16 %v161, %v159
  %v196 = vpack.c.b16 %v162, %v160
  %v197 = vpack.c.b16 %v165, %v163
  %v198 = vpack.c.b16 %v166, %v164
  %v199 = vpack.c.b16 %v169, %v167
  %v200 = vpack.c.b16 %v170, %v168
  %v201 = vpack.c.b16 %v173, %v171
  %v202 = vpack.c.b16 %v174, %v172
  %v203 = vpack.c.b16 %v177, %v175
  %v204 = vpack.c.b16 %v178, %v176
  %v205 = vpack.c.b16 %v181, %v179
  %v206 = vpack.c.b16 %v182, %v180
  %v207 = vpack.c.b16 %v185, %v183
  %v208 = vpack.c.b16 %v186, %v184
  %v209 = vpack.c.b16 %v189, %v187
  %v210 = vpack.c.b16 %v190, %v188
  %v211 = vpack.c.b16 %v193, %v191
  %v212 = vpack.c.b16 %v194, %v192
  %vm229 = vcmask 97280
  %v231 = vsel %vm229, %v118, 0
  %v234 = vsel %vm229, %v120, 0
  %v237 = vsel %vm229, %v122, 0
  %v240 = vsel %vm229, %v124, 0
  %v243 = vsel %vm229, %v126, 0
  %v246 = vsel %vm229, %v128, 0
  %v249 = vsel %vm229, %v130, 0
  %v252 = vsel %vm229, %v132, 0
  %vm254 = vcmask 1045504
  %v256 = vsel %vm254, %v211, 0
  %v259 = vsel %vm254, %v212, 0
  %261 = vmatprep.subr.bf16.mxu0 %v196
  %262 = vmatpush1.bf16.msra.mxu0 %v195
  %263 = vmatprep.subr.bf16.mxu0 %v198
  %264 = vmatpush1.bf16.msra.mxu0 %v197
  %265 = vmatprep.subr.bf16.mxu0 %v200
  %266 = vmatpush1.bf16.msra.mxu0 %v199
  %267 = vmatprep.subr.bf16.mxu0 %v202
  %268 = vmatpush1.bf16.msra.mxu0 %v201
  %269 = vmatprep.subr.bf16.mxu0 %v204
  %270 = vmatpush1.bf16.msra.mxu0 %v203
  %271 = vmatprep.subr.bf16.mxu0 %v206
  %272 = vmatpush1.bf16.msra.mxu0 %v205
  %273 = vmatprep.subr.bf16.mxu0 %v208
  %274 = vmatpush1.bf16.msra.mxu0 %v207
  %275 = vmatprep.subr.bf16.mxu0 %v210
  %276 = vmatpush1.bf16.msra.mxu0 %v209
  %277 = vmatprep.subr.bf16.mxu0 %v259
  %278 = vmatpush1.bf16.msra.mxu0 %v256
  %279 = vmatprep.subr.bf16.mxu0 0
  %280 = vmatpush1.bf16.msra.mxu0 0
  %281 = vmatprep.subr.bf16.mxu0 0
  %282 = vmatpush1.bf16.msra.mxu0 0
  %283 = vmatprep.subr.bf16.mxu0 0
  %284 = vmatpush1.bf16.msra.mxu0 0
  %285 = vmatprep.subr.bf16.mxu0 0
  %286 = vmatpush1.bf16.msra.mxu0 0
  %287 = vmatprep.subr.bf16.mxu0 0
  %288 = vmatpush1.bf16.msra.mxu0 0
  %289 = vmatprep.subr.bf16.mxu0 0
  %290 = vmatpush1.bf16.msra.mxu0 0
  %291 = vmatprep.subr.bf16.mxu0 0
  %292 = vmatpush1.bf16.msra.mxu0 0
  %293 = vmatprep.mubr.bf16.mxu0 %v231
  %294 = vmatmul.mubr.bf16.gmra.mrb[0].mxu0 %v117
  %v295 = vpop.f32.mrb[0].mxu0
  %v296 = vadd.f32 0.0, %v295
  %v297 = vpop.f32.mrb[0].mxu0
  %v298 = vadd.f32 0.0, %v297
  %v299 = vpop.f32.mrb[0].mxu0
  %v300 = vadd.f32 0.0, %v299
  %v301 = vpop.f32.mrb[0].mxu0
  %v302 = vadd.f32 0.0, %v301
  %303 = vmatprep.mubr.bf16.mxu0 %v234
  %304 = vmatmul.mubr.bf16.gmra.mrb[0].mxu0 %v119
  %v305 = vpop.f32.mrb[0].mxu0
  %v306 = vadd.f32 0.0, %v305
  %v307 = vpop.f32.mrb[0].mxu0
  %v308 = vadd.f32 0.0, %v307
  %v309 = vpop.f32.mrb[0].mxu0
  %v310 = vadd.f32 0.0, %v309
  %v311 = vpop.f32.mrb[0].mxu0
  %v312 = vadd.f32 0.0, %v311
  %313 = vmatprep.mubr.bf16.mxu0 %v237
  %314 = vmatmul.mubr.bf16.gmra.mrb[0].mxu0 %v121
  %v315 = vpop.f32.mrb[0].mxu0
  %v316 = vadd.f32 0.0, %v315
  %v317 = vpop.f32.mrb[0].mxu0
  %v318 = vadd.f32 0.0, %v317
  %v319 = vpop.f32.mrb[0].mxu0
  %v320 = vadd.f32 0.0, %v319
  %v321 = vpop.f32.mrb[0].mxu0
  %v322 = vadd.f32 0.0, %v321
  %323 = vmatprep.mubr.bf16.mxu0 %v240
  %324 = vmatmul.mubr.bf16.gmra.mrb[0].mxu0 %v123
  %v325 = vpop.f32.mrb[0].mxu0
  %v326 = vadd.f32 0.0, %v325
  %v327 = vpop.f32.mrb[0].mxu0
  %v328 = vadd.f32 0.0, %v327
  %v329 = vpop.f32.mrb[0].mxu0
  %v330 = vadd.f32 0.0, %v329
  %v331 = vpop.f32.mrb[0].mxu0
  %v332 = vadd.f32 0.0, %v331
  %333 = vmatprep.mubr.bf16.mxu0 %v243
  %334 = vmatmul.mubr.bf16.gmra.mrb[0].mxu0 %v125
  %v335 = vpop.f32.mrb[0].mxu0
  %v336 = vadd.f32 0.0, %v335
  %v337 = vpop.f32.mrb[0].mxu0
  %v338 = vadd.f32 0.0, %v337
  %v339 = vpop.f32.mrb[0].mxu0
  %v340 = vadd.f32 0.0, %v339
  %v341 = vpop.f32.mrb[0].mxu0
  %v342 = vadd.f32 0.0, %v341
  %343 = vmatprep.mubr.bf16.mxu0 %v246
  %344 = vmatmul.mubr.bf16.gmra.mrb[0].mxu0 %v127
  %v345 = vpop.f32.mrb[0].mxu0
  %v346 = vadd.f32 0.0, %v345
  %v347 = vpop.f32.mrb[0].mxu0
  %v348 = vadd.f32 0.0, %v347
  %v349 = vpop.f32.mrb[0].mxu0
  %v350 = vadd.f32 0.0, %v349
  %v351 = vpop.f32.mrb[0].mxu0
  %v352 = vadd.f32 0.0, %v351
  %353 = vmatprep.mubr.bf16.mxu0 %v249
  %354 = vmatmul.mubr.bf16.gmra.mrb[0].mxu0 %v129
  %v355 = vpop.f32.mrb[0].mxu0
  %v356 = vadd.f32 0.0, %v355
  %v357 = vpop.f32.mrb[0].mxu0
  %v358 = vadd.f32 0.0, %v357
  %v359 = vpop.f32.mrb[0].mxu0
  %v360 = vadd.f32 0.0, %v359
  %v361 = vpop.f32.mrb[0].mxu0
  %v362 = vadd.f32 0.0, %v361
  %363 = vmatprep.mubr.bf16.mxu0 %v252
  %364 = vmatmul.mubr.bf16.gmra.mrb[0].mxu0 %v131
  %v365 = vpop.f32.mrb[0].mxu0
  %v366 = vadd.f32 0.0, %v365
  %v367 = vpop.f32.mrb[0].mxu0
  %v368 = vadd.f32 0.0, %v367
  %v369 = vpop.f32.mrb[0].mxu0
  %v370 = vadd.f32 0.0, %v369
  %v371 = vpop.f32.mrb[0].mxu0
  %v372 = vadd.f32 0.0, %v371
  %373 = vdwg.mxu0
  %v374 = vmax.f32 %v296, %v336
  %v375 = vmax.f32 %v298, %v338
  %v376 = vmax.f32 %v300, %v340
  %v377 = vmax.f32 %v302, %v342
  %v378 = vmax.f32 %v306, %v346
  %v379 = vmax.f32 %v308, %v348
  %v380 = vmax.f32 %v310, %v350
  %v381 = vmax.f32 %v312, %v352
  %v382 = vmax.f32 %v316, %v356
  %v383 = vmax.f32 %v318, %v358
  %v384 = vmax.f32 %v320, %v360
  %v385 = vmax.f32 %v322, %v362
  %v386 = vmax.f32 %v326, %v366
  %v387 = vmax.f32 %v328, %v368
  %v388 = vmax.f32 %v330, %v370
  %v389 = vmax.f32 %v332, %v372
  %v390 = vmax.f32 %v374, %v375
  %v391 = vmax.f32 %v376, %v377
  %v392 = vmax.f32 %v378, %v379
  %v393 = vmax.f32 %v380, %v381
  %v394 = vmax.f32 %v382, %v383
  %v395 = vmax.f32 %v384, %v385
  %v396 = vmax.f32 %v386, %v387
  %v397 = vmax.f32 %v388, %v389
  %v399 = vlaneseq
  %v400 = vshrl.u32 %v399, 7
  %v401 = vsub.s32 0, %v400
  %v402 = vrot.slane %v51, %v401
  %v404 = vadd.f32 %v390, %v402
  %v405 = vadd.f32 %v391, %v402
  %v406 = vadd.f32 %v392, %v402
  %v407 = vadd.f32 %v393, %v402
  %v408 = vadd.f32 %v394, %v402
  %v409 = vadd.f32 %v395, %v402
  %v410 = vadd.f32 %v396, %v402
  %v411 = vadd.f32 %v397, %v402
  %v412 = vmax.f32 %v404, 0.0
  %v413 = vmax.f32 %v405, 0.0
  %v414 = vmax.f32 %v406, 0.0
  %v415 = vmax.f32 %v407, 0.0
  %v416 = vmax.f32 %v408, 0.0
  %v417 = vmax.f32 %v409, 0.0
  %v418 = vmax.f32 %v410, 0.0
  %v419 = vmax.f32 %v411, 0.0
  %v420 = vpack.c.bf16 %v413, %v412
  %v421 = vpack.c.bf16 %v415, %v414
  %v422 = vpack.c.bf16 %v417, %v416
  %v423 = vpack.c.bf16 %v419, %v418
  %s424 = scalar_lea.vmem %s0, 128
  %v425 = vld [vmem:[%s424] sm:$0xff]
  %v426 = vld [vmem:[%s424 + $0x8] sm:$0xff]
  %v427 = vld [vmem:[%s424 + $0x10] sm:$0xff]
  %v428 = vld [vmem:[%s424 + $0x18] sm:$0xff]
  %v429 = vld [vmem:[%s424 + $0x20] sm:$0xff]
  %v430 = vld [vmem:[%s424 + $0x28] sm:$0xff]
  %v431 = vld [vmem:[%s424 + $0x30] sm:$0xff]
  %v432 = vld [vmem:[%s424 + $0x38] sm:$0xff]
  %v433 = vld [vmem:[%s424 + $0x40] sm:$0xff]
  %v434 = vld [vmem:[%s424 + $0x48] sm:$0xff]
  %v435 = vld [vmem:[%s424 + $0x50] sm:$0xff]
  %v436 = vld [vmem:[%s424 + $0x58] sm:$0xff]
  %v437 = vld [vmem:[%s424 + $0x60] sm:$0xff]
  %v438 = vld [vmem:[%s424 + $0x68] sm:$0xff]
  %v439 = vld [vmem:[%s424 + $0x70] sm:$0xff]
  %v440 = vld [vmem:[%s424 + $0x78] sm:$0xff]
  %v457 = vunpack.c.l.b16 %v425
  %v458 = vunpack.c.h.b16 %v425
  %v459 = vunpack.c.l.b16 %v426
  %v460 = vunpack.c.h.b16 %v426
  %v461 = vunpack.c.l.b16 %v427
  %v462 = vunpack.c.h.b16 %v427
  %v463 = vunpack.c.l.b16 %v428
  %v464 = vunpack.c.h.b16 %v428
  %v465 = vunpack.c.l.b16 %v429
  %v466 = vunpack.c.h.b16 %v429
  %v467 = vunpack.c.l.b16 %v430
  %v468 = vunpack.c.h.b16 %v430
  %v469 = vunpack.c.l.b16 %v431
  %v470 = vunpack.c.h.b16 %v431
  %v471 = vunpack.c.l.b16 %v432
  %v472 = vunpack.c.h.b16 %v432
  %v473 = vunpack.c.l.b16 %v433
  %v474 = vunpack.c.h.b16 %v433
  %v475 = vunpack.c.l.b16 %v434
  %v476 = vunpack.c.h.b16 %v434
  %v477 = vunpack.c.l.b16 %v435
  %v478 = vunpack.c.h.b16 %v435
  %v479 = vunpack.c.l.b16 %v436
  %v480 = vunpack.c.h.b16 %v436
  %v481 = vunpack.c.l.b16 %v437
  %v482 = vunpack.c.h.b16 %v437
  %v483 = vunpack.c.l.b16 %v438
  %v484 = vunpack.c.h.b16 %v438
  %v485 = vunpack.c.l.b16 %v439
  %v486 = vunpack.c.h.b16 %v439
  %v487 = vunpack.c.l.b16 %v440
  %v488 = vunpack.c.h.b16 %v440
  %v489 = vpack.c.b16 %v459, %v457
  %v490 = vpack.c.b16 %v460, %v458
  %v491 = vpack.c.b16 %v463, %v461
  %v492 = vpack.c.b16 %v464, %v462
  %v493 = vpack.c.b16 %v467, %v465
  %v494 = vpack.c.b16 %v468, %v466
  %v495 = vpack.c.b16 %v471, %v469
  %v496 = vpack.c.b16 %v472, %v470
  %v497 = vpack.c.b16 %v475, %v473
  %v498 = vpack.c.b16 %v476, %v474
  %v499 = vpack.c.b16 %v479, %v477
  %v500 = vpack.c.b16 %v480, %v478
  %v501 = vpack.c.b16 %v483, %v481
  %v502 = vpack.c.b16 %v484, %v482
  %v503 = vpack.c.b16 %v487, %v485
  %v504 = vpack.c.b16 %v488, %v486
  %v514 = vsel %vm229, %v490, 0
  %v517 = vsel %vm229, %v492, 0
  %v520 = vsel %vm229, %v494, 0
  %v523 = vsel %vm229, %v496, 0
  %v526 = vsel %vm229, %v498, 0
  %v529 = vsel %vm229, %v500, 0
  %v532 = vsel %vm229, %v502, 0
  %v535 = vsel %vm229, %v504, 0
  %537 = vmatprep.subr.bf16.mxu0 %v196
  %538 = vmatpush1.bf16.msra.mxu0 %v195
  %539 = vmatprep.subr.bf16.mxu0 %v198
  %540 = vmatpush1.bf16.msra.mxu0 %v197
  %541 = vmatprep.subr.bf16.mxu0 %v200
  %542 = vmatpush1.bf16.msra.mxu0 %v199
  %543 = vmatprep.subr.bf16.mxu0 %v202
  %544 = vmatpush1.bf16.msra.mxu0 %v201
  %545 = vmatprep.subr.bf16.mxu0 %v204
  %546 = vmatpush1.bf16.msra.mxu0 %v203
  %547 = vmatprep.subr.bf16.mxu0 %v206
  %548 = vmatpush1.bf16.msra.mxu0 %v205
  %549 = vmatprep.subr.bf16.mxu0 %v208
  %550 = vmatpush1.bf16.msra.mxu0 %v207
  %551 = vmatprep.subr.bf16.mxu0 %v210
  %552 = vmatpush1.bf16.msra.mxu0 %v209
  %553 = vmatprep.subr.bf16.mxu0 %v259
  %554 = vmatpush1.bf16.msra.mxu0 %v256
  %555 = vmatprep.subr.bf16.mxu0 0
  %556 = vmatpush1.bf16.msra.mxu0 0
  %557 = vmatprep.subr.bf16.mxu0 0
  %558 = vmatpush1.bf16.msra.mxu0 0
  %559 = vmatprep.subr.bf16.mxu0 0
  %560 = vmatpush1.bf16.msra.mxu0 0
  %561 = vmatprep.subr.bf16.mxu0 0
  %562 = vmatpush1.bf16.msra.mxu0 0
  %563 = vmatprep.subr.bf16.mxu0 0
  %564 = vmatpush1.bf16.msra.mxu0 0
  %565 = vmatprep.subr.bf16.mxu0 0
  %566 = vmatpush1.bf16.msra.mxu0 0
  %567 = vmatprep.subr.bf16.mxu0 0
  %568 = vmatpush1.bf16.msra.mxu0 0
  %569 = vmatprep.mubr.bf16.mxu0 %v514
  %570 = vmatmul.mubr.bf16.gmra.mrb[0].mxu0 %v489
  %v571 = vpop.f32.mrb[0].mxu0
  %v572 = vadd.f32 0.0, %v571
  %v573 = vpop.f32.mrb[0].mxu0
  %v574 = vadd.f32 0.0, %v573
  %v575 = vpop.f32.mrb[0].mxu0
  %v576 = vadd.f32 0.0, %v575
  %v577 = vpop.f32.mrb[0].mxu0
  %v578 = vadd.f32 0.0, %v577
  %579 = vmatprep.mubr.bf16.mxu0 %v517
  %580 = vmatmul.mubr.bf16.gmra.mrb[0].mxu0 %v491
  %v581 = vpop.f32.mrb[0].mxu0
  %v582 = vadd.f32 0.0, %v581
  %v583 = vpop.f32.mrb[0].mxu0
  %v584 = vadd.f32 0.0, %v583
  %v585 = vpop.f32.mrb[0].mxu0
  %v586 = vadd.f32 0.0, %v585
  %v587 = vpop.f32.mrb[0].mxu0
  %v588 = vadd.f32 0.0, %v587
  %589 = vmatprep.mubr.bf16.mxu0 %v520
  %590 = vmatmul.mubr.bf16.gmra.mrb[0].mxu0 %v493
  %v591 = vpop.f32.mrb[0].mxu0
  %v592 = vadd.f32 0.0, %v591
  %v593 = vpop.f32.mrb[0].mxu0
  %v594 = vadd.f32 0.0, %v593
  %v595 = vpop.f32.mrb[0].mxu0
  %v596 = vadd.f32 0.0, %v595
  %v597 = vpop.f32.mrb[0].mxu0
  %v598 = vadd.f32 0.0, %v597
  %599 = vmatprep.mubr.bf16.mxu0 %v523
  %600 = vmatmul.mubr.bf16.gmra.mrb[0].mxu0 %v495
  %v601 = vpop.f32.mrb[0].mxu0
  %v602 = vadd.f32 0.0, %v601
  %v603 = vpop.f32.mrb[0].mxu0
  %v604 = vadd.f32 0.0, %v603
  %v605 = vpop.f32.mrb[0].mxu0
  %v606 = vadd.f32 0.0, %v605
  %v607 = vpop.f32.mrb[0].mxu0
  %v608 = vadd.f32 0.0, %v607
  %609 = vmatprep.mubr.bf16.mxu0 %v526
  %610 = vmatmul.mubr.bf16.gmra.mrb[0].mxu0 %v497
  %v611 = vpop.f32.mrb[0].mxu0
  %v612 = vadd.f32 0.0, %v611
  %v613 = vpop.f32.mrb[0].mxu0
  %v614 = vadd.f32 0.0, %v613
  %v615 = vpop.f32.mrb[0].mxu0
  %v616 = vadd.f32 0.0, %v615
  %v617 = vpop.f32.mrb[0].mxu0
  %v618 = vadd.f32 0.0, %v617
  %619 = vmatprep.mubr.bf16.mxu0 %v529
  %620 = vmatmul.mubr.bf16.gmra.mrb[0].mxu0 %v499
  %v621 = vpop.f32.mrb[0].mxu0
  %v622 = vadd.f32 0.0, %v621
  %v623 = vpop.f32.mrb[0].mxu0
  %v624 = vadd.f32 0.0, %v623
  %v625 = vpop.f32.mrb[0].mxu0
  %v626 = vadd.f32 0.0, %v625
  %v627 = vpop.f32.mrb[0].mxu0
  %v628 = vadd.f32 0.0, %v627
  %629 = vmatprep.mubr.bf16.mxu0 %v532
  %630 = vmatmul.mubr.bf16.gmra.mrb[0].mxu0 %v501
  %v631 = vpop.f32.mrb[0].mxu0
  %v632 = vadd.f32 0.0, %v631
  %v633 = vpop.f32.mrb[0].mxu0
  %v634 = vadd.f32 0.0, %v633
  %v635 = vpop.f32.mrb[0].mxu0
  %v636 = vadd.f32 0.0, %v635
  %v637 = vpop.f32.mrb[0].mxu0
  %v638 = vadd.f32 0.0, %v637
  %639 = vmatprep.mubr.bf16.mxu0 %v535
  %640 = vmatmul.mubr.bf16.gmra.mrb[0].mxu0 %v503
  %v641 = vpop.f32.mrb[0].mxu0
  %v642 = vadd.f32 0.0, %v641
  %v643 = vpop.f32.mrb[0].mxu0
  %v644 = vadd.f32 0.0, %v643
  %v645 = vpop.f32.mrb[0].mxu0
  %v646 = vadd.f32 0.0, %v645
  %v647 = vpop.f32.mrb[0].mxu0
  %v648 = vadd.f32 0.0, %v647
  %649 = vdwg.mxu0
  %v650 = vmax.f32 %v572, %v612
  %v651 = vmax.f32 %v574, %v614
  %v652 = vmax.f32 %v576, %v616
  %v653 = vmax.f32 %v578, %v618
  %v654 = vmax.f32 %v582, %v622
  %v655 = vmax.f32 %v584, %v624
  %v656 = vmax.f32 %v586, %v626
  %v657 = vmax.f32 %v588, %v628
  %v658 = vmax.f32 %v592, %v632
  %v659 = vmax.f32 %v594, %v634
  %v660 = vmax.f32 %v596, %v636
  %v661 = vmax.f32 %v598, %v638
  %v662 = vmax.f32 %v602, %v642
  %v663 = vmax.f32 %v604, %v644
  %v664 = vmax.f32 %v606, %v646
  %v665 = vmax.f32 %v608, %v648
  %v666 = vmax.f32 %v650, %v651
  %v667 = vmax.f32 %v652, %v653
  %v668 = vmax.f32 %v654, %v655
  %v669 = vmax.f32 %v656, %v657
  %v670 = vmax.f32 %v658, %v659
  %v671 = vmax.f32 %v660, %v661
  %v672 = vmax.f32 %v662, %v663
  %v673 = vmax.f32 %v664, %v665
  %v674 = vadd.f32 %v666, %v402
  %v675 = vadd.f32 %v667, %v402
  %v676 = vadd.f32 %v668, %v402
  %v677 = vadd.f32 %v669, %v402
  %v678 = vadd.f32 %v670, %v402
  %v679 = vadd.f32 %v671, %v402
  %v680 = vadd.f32 %v672, %v402
  %v681 = vadd.f32 %v673, %v402
  %v682 = vmax.f32 %v674, 0.0
  %v683 = vmax.f32 %v675, 0.0
  %v684 = vmax.f32 %v676, 0.0
  %v685 = vmax.f32 %v677, 0.0
  %v686 = vmax.f32 %v678, 0.0
  %v687 = vmax.f32 %v679, 0.0
  %v688 = vmax.f32 %v680, 0.0
  %v689 = vmax.f32 %v681, 0.0
  %v690 = vpack.c.bf16 %v683, %v682
  %v691 = vpack.c.bf16 %v685, %v684
  %v692 = vpack.c.bf16 %v687, %v686
  %v693 = vpack.c.bf16 %v689, %v688
  %s694 = scalar_lea.vmem %s0, 256
  %v695 = vld [vmem:[%s694] sm:$0xff]
  %v696 = vld [vmem:[%s694 + $0x8] sm:$0xff]
  %v697 = vld [vmem:[%s694 + $0x10] sm:$0xff]
  %v698 = vld [vmem:[%s694 + $0x18] sm:$0xff]
  %v699 = vld [vmem:[%s694 + $0x20] sm:$0xff]
  %v700 = vld [vmem:[%s694 + $0x28] sm:$0xff]
  %v701 = vld [vmem:[%s694 + $0x30] sm:$0xff]
  %v702 = vld [vmem:[%s694 + $0x38] sm:$0xff]
  %v703 = vld [vmem:[%s694 + $0x40] sm:$0xff]
  %v704 = vld [vmem:[%s694 + $0x48] sm:$0xff]
  %v705 = vld [vmem:[%s694 + $0x50] sm:$0xff]
  %v706 = vld [vmem:[%s694 + $0x58] sm:$0xff]
  %v707 = vld [vmem:[%s694 + $0x60] sm:$0xff]
  %v708 = vld [vmem:[%s694 + $0x68] sm:$0xff]
  %v709 = vld [vmem:[%s694 + $0x70] sm:$0xff]
  %v710 = vld [vmem:[%s694 + $0x78] sm:$0xff]
  %v727 = vunpack.c.l.b16 %v695
  %v728 = vunpack.c.h.b16 %v695
  %v729 = vunpack.c.l.b16 %v696
  %v730 = vunpack.c.h.b16 %v696
  %v731 = vunpack.c.l.b16 %v697
  %v732 = vunpack.c.h.b16 %v697
  %v733 = vunpack.c.l.b16 %v698
  %v734 = vunpack.c.h.b16 %v698
  %v735 = vunpack.c.l.b16 %v699
  %v736 = vunpack.c.h.b16 %v699
  %v737 = vunpack.c.l.b16 %v700
  %v738 = vunpack.c.h.b16 %v700
  %v739 = vunpack.c.l.b16 %v701
  %v740 = vunpack.c.h.b16 %v701
  %v741 = vunpack.c.l.b16 %v702
  %v742 = vunpack.c.h.b16 %v702
  %v743 = vunpack.c.l.b16 %v703
  %v744 = vunpack.c.h.b16 %v703
  %v745 = vunpack.c.l.b16 %v704
  %v746 = vunpack.c.h.b16 %v704
  %v747 = vunpack.c.l.b16 %v705
  %v748 = vunpack.c.h.b16 %v705
  %v749 = vunpack.c.l.b16 %v706
  %v750 = vunpack.c.h.b16 %v706
  %v751 = vunpack.c.l.b16 %v707
  %v752 = vunpack.c.h.b16 %v707
  %v753 = vunpack.c.l.b16 %v708
  %v754 = vunpack.c.h.b16 %v708
  %v755 = vunpack.c.l.b16 %v709
  %v756 = vunpack.c.h.b16 %v709
  %v757 = vunpack.c.l.b16 %v710
  %v758 = vunpack.c.h.b16 %v710
  %v759 = vpack.c.b16 %v729, %v727
  %v760 = vpack.c.b16 %v730, %v728
  %v761 = vpack.c.b16 %v733, %v731
  %v762 = vpack.c.b16 %v734, %v732
  %v763 = vpack.c.b16 %v737, %v735
  %v764 = vpack.c.b16 %v738, %v736
  %v765 = vpack.c.b16 %v741, %v739
  %v766 = vpack.c.b16 %v742, %v740
  %v767 = vpack.c.b16 %v745, %v743
  %v768 = vpack.c.b16 %v746, %v744
  %v769 = vpack.c.b16 %v749, %v747
  %v770 = vpack.c.b16 %v750, %v748
  %v771 = vpack.c.b16 %v753, %v751
  %v772 = vpack.c.b16 %v754, %v752
  %v773 = vpack.c.b16 %v757, %v755
  %v774 = vpack.c.b16 %v758, %v756
  %v784 = vsel %vm229, %v760, 0
  %v787 = vsel %vm229, %v762, 0
  %v790 = vsel %vm229, %v764, 0
  %v793 = vsel %vm229, %v766, 0
  %v796 = vsel %vm229, %v768, 0
  %v799 = vsel %vm229, %v770, 0
  %v802 = vsel %vm229, %v772, 0
  %v805 = vsel %vm229, %v774, 0
  %807 = vmatprep.subr.bf16.mxu0 %v196
  %808 = vmatpush1.bf16.msra.mxu0 %v195
  %809 = vmatprep.subr.bf16.mxu0 %v198
  %810 = vmatpush1.bf16.msra.mxu0 %v197
  %811 = vmatprep.subr.bf16.mxu0 %v200
  %812 = vmatpush1.bf16.msra.mxu0 %v199
  %813 = vmatprep.subr.bf16.mxu0 %v202
  %814 = vmatpush1.bf16.msra.mxu0 %v201
  %815 = vmatprep.subr.bf16.mxu0 %v204
  %816 = vmatpush1.bf16.msra.mxu0 %v203
  %817 = vmatprep.subr.bf16.mxu0 %v206
  %818 = vmatpush1.bf16.msra.mxu0 %v205
  %819 = vmatprep.subr.bf16.mxu0 %v208
  %820 = vmatpush1.bf16.msra.mxu0 %v207
  %821 = vmatprep.subr.bf16.mxu0 %v210
  %822 = vmatpush1.bf16.msra.mxu0 %v209
  %823 = vmatprep.subr.bf16.mxu0 %v259
  %824 = vmatpush1.bf16.msra.mxu0 %v256
  %825 = vmatprep.subr.bf16.mxu0 0
  %826 = vmatpush1.bf16.msra.mxu0 0
  %827 = vmatprep.subr.bf16.mxu0 0
  %828 = vmatpush1.bf16.msra.mxu0 0
  %829 = vmatprep.subr.bf16.mxu0 0
  %830 = vmatpush1.bf16.msra.mxu0 0
  %831 = vmatprep.subr.bf16.mxu0 0
  %832 = vmatpush1.bf16.msra.mxu0 0
  %833 = vmatprep.subr.bf16.mxu0 0
  %834 = vmatpush1.bf16.msra.mxu0 0
  %835 = vmatprep.subr.bf16.mxu0 0
  %836 = vmatpush1.bf16.msra.mxu0 0
  %837 = vmatprep.subr.bf16.mxu0 0
  %838 = vmatpush1.bf16.msra.mxu0 0
  %839 = vmatprep.mubr.bf16.mxu0 %v784
  %840 = vmatmul.mubr.bf16.gmra.mrb[0].mxu0 %v759
  %v841 = vpop.f32.mrb[0].mxu0
  %v842 = vadd.f32 0.0, %v841
  %v843 = vpop.f32.mrb[0].mxu0
  %v844 = vadd.f32 0.0, %v843
  %v845 = vpop.f32.mrb[0].mxu0
  %v846 = vadd.f32 0.0, %v845
  %v847 = vpop.f32.mrb[0].mxu0
  %v848 = vadd.f32 0.0, %v847
  %849 = vmatprep.mubr.bf16.mxu0 %v787
  %850 = vmatmul.mubr.bf16.gmra.mrb[0].mxu0 %v761
  %v851 = vpop.f32.mrb[0].mxu0
  %v852 = vadd.f32 0.0, %v851
  %v853 = vpop.f32.mrb[0].mxu0
  %v854 = vadd.f32 0.0, %v853
  %v855 = vpop.f32.mrb[0].mxu0
  %v856 = vadd.f32 0.0, %v855
  %v857 = vpop.f32.mrb[0].mxu0
  %v858 = vadd.f32 0.0, %v857
  %859 = vmatprep.mubr.bf16.mxu0 %v790
  %860 = vmatmul.mubr.bf16.gmra.mrb[0].mxu0 %v763
  %v861 = vpop.f32.mrb[0].mxu0
  %v862 = vadd.f32 0.0, %v861
  %v863 = vpop.f32.mrb[0].mxu0
  %v864 = vadd.f32 0.0, %v863
  %v865 = vpop.f32.mrb[0].mxu0
  %v866 = vadd.f32 0.0, %v865
  %v867 = vpop.f32.mrb[0].mxu0
  %v868 = vadd.f32 0.0, %v867
  %869 = vmatprep.mubr.bf16.mxu0 %v793
  %870 = vmatmul.mubr.bf16.gmra.mrb[0].mxu0 %v765
  %v871 = vpop.f32.mrb[0].mxu0
  %v872 = vadd.f32 0.0, %v871
  %v873 = vpop.f32.mrb[0].mxu0
  %v874 = vadd.f32 0.0, %v873
  %v875 = vpop.f32.mrb[0].mxu0
  %v876 = vadd.f32 0.0, %v875
  %v877 = vpop.f32.mrb[0].mxu0
  %v878 = vadd.f32 0.0, %v877
  %879 = vmatprep.mubr.bf16.mxu0 %v796
  %880 = vmatmul.mubr.bf16.gmra.mrb[0].mxu0 %v767
  %v881 = vpop.f32.mrb[0].mxu0
  %v882 = vadd.f32 0.0, %v881
  %v883 = vpop.f32.mrb[0].mxu0
  %v884 = vadd.f32 0.0, %v883
  %v885 = vpop.f32.mrb[0].mxu0
  %v886 = vadd.f32 0.0, %v885
  %v887 = vpop.f32.mrb[0].mxu0
  %v888 = vadd.f32 0.0, %v887
  %889 = vmatprep.mubr.bf16.mxu0 %v799
  %890 = vmatmul.mubr.bf16.gmra.mrb[0].mxu0 %v769
  %v891 = vpop.f32.mrb[0].mxu0
  %v892 = vadd.f32 0.0, %v891
  %v893 = vpop.f32.mrb[0].mxu0
  %v894 = vadd.f32 0.0, %v893
  %v895 = vpop.f32.mrb[0].mxu0
  %v896 = vadd.f32 0.0, %v895
  %v897 = vpop.f32.mrb[0].mxu0
  %v898 = vadd.f32 0.0, %v897
  %899 = vmatprep.mubr.bf16.mxu0 %v802
  %900 = vmatmul.mubr.bf16.gmra.mrb[0].mxu0 %v771
  %v901 = vpop.f32.mrb[0].mxu0
  %v902 = vadd.f32 0.0, %v901
  %v903 = vpop.f32.mrb[0].mxu0
  %v904 = vadd.f32 0.0, %v903
  %v905 = vpop.f32.mrb[0].mxu0
  %v906 = vadd.f32 0.0, %v905
  %v907 = vpop.f32.mrb[0].mxu0
  %v908 = vadd.f32 0.0, %v907
  %909 = vmatprep.mubr.bf16.mxu0 %v805
  %910 = vmatmul.mubr.bf16.gmra.mrb[0].mxu0 %v773
  %v911 = vpop.f32.mrb[0].mxu0
  %v912 = vadd.f32 0.0, %v911
  %v913 = vpop.f32.mrb[0].mxu0
  %v914 = vadd.f32 0.0, %v913
  %v915 = vpop.f32.mrb[0].mxu0
  %v916 = vadd.f32 0.0, %v915
  %v917 = vpop.f32.mrb[0].mxu0
  %v918 = vadd.f32 0.0, %v917
  %919 = vdwg.mxu0
  %v920 = vmax.f32 %v842, %v882
  %v921 = vmax.f32 %v844, %v884
  %v922 = vmax.f32 %v846, %v886
  %v923 = vmax.f32 %v848, %v888
  %v924 = vmax.f32 %v852, %v892
  %v925 = vmax.f32 %v854, %v894
  %v926 = vmax.f32 %v856, %v896
  %v927 = vmax.f32 %v858, %v898
  %v928 = vmax.f32 %v862, %v902
  %v929 = vmax.f32 %v864, %v904
  %v930 = vmax.f32 %v866, %v906
  %v931 = vmax.f32 %v868, %v908
  %v932 = vmax.f32 %v872, %v912
  %v933 = vmax.f32 %v874, %v914
  %v934 = vmax.f32 %v876, %v916
  %v935 = vmax.f32 %v878, %v918
  %v936 = vmax.f32 %v920, %v921
  %v937 = vmax.f32 %v922, %v923
  %v938 = vmax.f32 %v924, %v925
  %v939 = vmax.f32 %v926, %v927
  %v940 = vmax.f32 %v928, %v929
  %v941 = vmax.f32 %v930, %v931
  %v942 = vmax.f32 %v932, %v933
  %v943 = vmax.f32 %v934, %v935
  %v944 = vadd.f32 %v936, %v402
  %v945 = vadd.f32 %v937, %v402
  %v946 = vadd.f32 %v938, %v402
  %v947 = vadd.f32 %v939, %v402
  %v948 = vadd.f32 %v940, %v402
  %v949 = vadd.f32 %v941, %v402
  %v950 = vadd.f32 %v942, %v402
  %v951 = vadd.f32 %v943, %v402
  %v952 = vmax.f32 %v944, 0.0
  %v953 = vmax.f32 %v945, 0.0
  %v954 = vmax.f32 %v946, 0.0
  %v955 = vmax.f32 %v947, 0.0
  %v956 = vmax.f32 %v948, 0.0
  %v957 = vmax.f32 %v949, 0.0
  %v958 = vmax.f32 %v950, 0.0
  %v959 = vmax.f32 %v951, 0.0
  %v960 = vpack.c.bf16 %v953, %v952
  %v961 = vpack.c.bf16 %v955, %v954
  %v962 = vpack.c.bf16 %v957, %v956
  %v963 = vpack.c.bf16 %v959, %v958
  %s964 = scalar_lea.vmem %s0, 384
  %v965 = vld [vmem:[%s964] sm:$0xff]
  %v966 = vld [vmem:[%s964 + $0x8] sm:$0xff]
  %v967 = vld [vmem:[%s964 + $0x10] sm:$0xff]
  %v968 = vld [vmem:[%s964 + $0x18] sm:$0xff]
  %v969 = vld [vmem:[%s964 + $0x20] sm:$0xff]
  %v970 = vld [vmem:[%s964 + $0x28] sm:$0xff]
  %v971 = vld [vmem:[%s964 + $0x30] sm:$0xff]
  %v972 = vld [vmem:[%s964 + $0x38] sm:$0xff]
  %v973 = vld [vmem:[%s964 + $0x40] sm:$0xff]
  %v974 = vld [vmem:[%s964 + $0x48] sm:$0xff]
  %v975 = vld [vmem:[%s964 + $0x50] sm:$0xff]
  %v976 = vld [vmem:[%s964 + $0x58] sm:$0xff]
  %v977 = vld [vmem:[%s964 + $0x60] sm:$0xff]
  %v978 = vld [vmem:[%s964 + $0x68] sm:$0xff]
  %v979 = vld [vmem:[%s964 + $0x70] sm:$0xff]
  %v980 = vld [vmem:[%s964 + $0x78] sm:$0xff]
  %v997 = vunpack.c.l.b16 %v965
  %v998 = vunpack.c.h.b16 %v965
  %v999 = vunpack.c.l.b16 %v966
  %v1000 = vunpack.c.h.b16 %v966
  %v1001 = vunpack.c.l.b16 %v967
  %v1002 = vunpack.c.h.b16 %v967
  %v1003 = vunpack.c.l.b16 %v968
  %v1004 = vunpack.c.h.b16 %v968
  %v1005 = vunpack.c.l.b16 %v969
  %v1006 = vunpack.c.h.b16 %v969
  %v1007 = vunpack.c.l.b16 %v970
  %v1008 = vunpack.c.h.b16 %v970
  %v1009 = vunpack.c.l.b16 %v971
  %v1010 = vunpack.c.h.b16 %v971
  %v1011 = vunpack.c.l.b16 %v972
  %v1012 = vunpack.c.h.b16 %v972
  %v1013 = vunpack.c.l.b16 %v973
  %v1014 = vunpack.c.h.b16 %v973
  %v1015 = vunpack.c.l.b16 %v974
  %v1016 = vunpack.c.h.b16 %v974
  %v1017 = vunpack.c.l.b16 %v975
  %v1018 = vunpack.c.h.b16 %v975
  %v1019 = vunpack.c.l.b16 %v976
  %v1020 = vunpack.c.h.b16 %v976
  %v1021 = vunpack.c.l.b16 %v977
  %v1022 = vunpack.c.h.b16 %v977
  %v1023 = vunpack.c.l.b16 %v978
  %v1024 = vunpack.c.h.b16 %v978
  %v1025 = vunpack.c.l.b16 %v979
  %v1026 = vunpack.c.h.b16 %v979
  %v1027 = vunpack.c.l.b16 %v980
  %v1028 = vunpack.c.h.b16 %v980
  %v1029 = vpack.c.b16 %v999, %v997
  %v1030 = vpack.c.b16 %v1000, %v998
  %v1031 = vpack.c.b16 %v1003, %v1001
  %v1032 = vpack.c.b16 %v1004, %v1002
  %v1033 = vpack.c.b16 %v1007, %v1005
  %v1034 = vpack.c.b16 %v1008, %v1006
  %v1035 = vpack.c.b16 %v1011, %v1009
  %v1036 = vpack.c.b16 %v1012, %v1010
  %v1037 = vpack.c.b16 %v1015, %v1013
  %v1038 = vpack.c.b16 %v1016, %v1014
  %v1039 = vpack.c.b16 %v1019, %v1017
  %v1040 = vpack.c.b16 %v1020, %v1018
  %v1041 = vpack.c.b16 %v1023, %v1021
  %v1042 = vpack.c.b16 %v1024, %v1022
  %v1043 = vpack.c.b16 %v1027, %v1025
  %v1044 = vpack.c.b16 %v1028, %v1026
  %v1054 = vsel %vm229, %v1030, 0
  %v1057 = vsel %vm229, %v1032, 0
  %v1060 = vsel %vm229, %v1034, 0
  %v1063 = vsel %vm229, %v1036, 0
  %v1066 = vsel %vm229, %v1038, 0
  %v1069 = vsel %vm229, %v1040, 0
  %v1072 = vsel %vm229, %v1042, 0
  %v1075 = vsel %vm229, %v1044, 0
  %1077 = vmatprep.subr.bf16.mxu0 %v196
  %1078 = vmatpush1.bf16.msra.mxu0 %v195
  %1079 = vmatprep.subr.bf16.mxu0 %v198
  %1080 = vmatpush1.bf16.msra.mxu0 %v197
  %1081 = vmatprep.subr.bf16.mxu0 %v200
  %1082 = vmatpush1.bf16.msra.mxu0 %v199
  %1083 = vmatprep.subr.bf16.mxu0 %v202
  %1084 = vmatpush1.bf16.msra.mxu0 %v201
  %1085 = vmatprep.subr.bf16.mxu0 %v204
  %1086 = vmatpush1.bf16.msra.mxu0 %v203
  %1087 = vmatprep.subr.bf16.mxu0 %v206
  %1088 = vmatpush1.bf16.msra.mxu0 %v205
  %1089 = vmatprep.subr.bf16.mxu0 %v208
  %1090 = vmatpush1.bf16.msra.mxu0 %v207
  %1091 = vmatprep.subr.bf16.mxu0 %v210
  %1092 = vmatpush1.bf16.msra.mxu0 %v209
  %1093 = vmatprep.subr.bf16.mxu0 %v259
  %1094 = vmatpush1.bf16.msra.mxu0 %v256
  %1095 = vmatprep.subr.bf16.mxu0 0
  %1096 = vmatpush1.bf16.msra.mxu0 0
  %1097 = vmatprep.subr.bf16.mxu0 0
  %1098 = vmatpush1.bf16.msra.mxu0 0
  %1099 = vmatprep.subr.bf16.mxu0 0
  %1100 = vmatpush1.bf16.msra.mxu0 0
  %1101 = vmatprep.subr.bf16.mxu0 0
  %1102 = vmatpush1.bf16.msra.mxu0 0
  %1103 = vmatprep.subr.bf16.mxu0 0
  %1104 = vmatpush1.bf16.msra.mxu0 0
  %1105 = vmatprep.subr.bf16.mxu0 0
  %1106 = vmatpush1.bf16.msra.mxu0 0
  %1107 = vmatprep.subr.bf16.mxu0 0
  %1108 = vmatpush1.bf16.msra.mxu0 0
  %1109 = vmatprep.mubr.bf16.mxu0 %v1054
  %1110 = vmatmul.mubr.bf16.gmra.mrb[0].mxu0 %v1029
  %v1111 = vpop.f32.mrb[0].mxu0
  %v1112 = vadd.f32 0.0, %v1111
  %v1113 = vpop.f32.mrb[0].mxu0
  %v1114 = vadd.f32 0.0, %v1113
  %v1115 = vpop.f32.mrb[0].mxu0
  %v1116 = vadd.f32 0.0, %v1115
  %v1117 = vpop.f32.mrb[0].mxu0
  %v1118 = vadd.f32 0.0, %v1117
  %1119 = vmatprep.mubr.bf16.mxu0 %v1057
  %1120 = vmatmul.mubr.bf16.gmra.mrb[0].mxu0 %v1031
  %v1121 = vpop.f32.mrb[0].mxu0
  %v1122 = vadd.f32 0.0, %v1121
  %v1123 = vpop.f32.mrb[0].mxu0
  %v1124 = vadd.f32 0.0, %v1123
  %v1125 = vpop.f32.mrb[0].mxu0
  %v1126 = vadd.f32 0.0, %v1125
  %v1127 = vpop.f32.mrb[0].mxu0
  %v1128 = vadd.f32 0.0, %v1127
  %1129 = vmatprep.mubr.bf16.mxu0 %v1060
  %1130 = vmatmul.mubr.bf16.gmra.mrb[0].mxu0 %v1033
  %v1131 = vpop.f32.mrb[0].mxu0
  %v1132 = vadd.f32 0.0, %v1131
  %v1133 = vpop.f32.mrb[0].mxu0
  %v1134 = vadd.f32 0.0, %v1133
  %v1135 = vpop.f32.mrb[0].mxu0
  %v1136 = vadd.f32 0.0, %v1135
  %v1137 = vpop.f32.mrb[0].mxu0
  %v1138 = vadd.f32 0.0, %v1137
  %1139 = vmatprep.mubr.bf16.mxu0 %v1063
  %1140 = vmatmul.mubr.bf16.gmra.mrb[0].mxu0 %v1035
  %v1141 = vpop.f32.mrb[0].mxu0
  %v1142 = vadd.f32 0.0, %v1141
  %v1143 = vpop.f32.mrb[0].mxu0
  %v1144 = vadd.f32 0.0, %v1143
  %v1145 = vpop.f32.mrb[0].mxu0
  %v1146 = vadd.f32 0.0, %v1145
  %v1147 = vpop.f32.mrb[0].mxu0
  %v1148 = vadd.f32 0.0, %v1147
  %1149 = vmatprep.mubr.bf16.mxu0 %v1066
  %1150 = vmatmul.mubr.bf16.gmra.mrb[0].mxu0 %v1037
  %v1151 = vpop.f32.mrb[0].mxu0
  %v1152 = vadd.f32 0.0, %v1151
  %v1153 = vpop.f32.mrb[0].mxu0
  %v1154 = vadd.f32 0.0, %v1153
  %v1155 = vpop.f32.mrb[0].mxu0
  %v1156 = vadd.f32 0.0, %v1155
  %v1157 = vpop.f32.mrb[0].mxu0
  %v1158 = vadd.f32 0.0, %v1157
  %1159 = vmatprep.mubr.bf16.mxu0 %v1069
  %1160 = vmatmul.mubr.bf16.gmra.mrb[0].mxu0 %v1039
  %v1161 = vpop.f32.mrb[0].mxu0
  %v1162 = vadd.f32 0.0, %v1161
  %v1163 = vpop.f32.mrb[0].mxu0
  %v1164 = vadd.f32 0.0, %v1163
  %v1165 = vpop.f32.mrb[0].mxu0
  %v1166 = vadd.f32 0.0, %v1165
  %v1167 = vpop.f32.mrb[0].mxu0
  %v1168 = vadd.f32 0.0, %v1167
  %1169 = vmatprep.mubr.bf16.mxu0 %v1072
  %1170 = vmatmul.mubr.bf16.gmra.mrb[0].mxu0 %v1041
  %v1171 = vpop.f32.mrb[0].mxu0
  %v1172 = vadd.f32 0.0, %v1171
  %v1173 = vpop.f32.mrb[0].mxu0
  %v1174 = vadd.f32 0.0, %v1173
  %v1175 = vpop.f32.mrb[0].mxu0
  %v1176 = vadd.f32 0.0, %v1175
  %v1177 = vpop.f32.mrb[0].mxu0
  %v1178 = vadd.f32 0.0, %v1177
  %1179 = vmatprep.mubr.bf16.mxu0 %v1075
  %1180 = vmatmul.mubr.bf16.gmra.mrb[0].mxu0 %v1043
  %v1181 = vpop.f32.mrb[0].mxu0
  %v1182 = vadd.f32 0.0, %v1181
  %v1183 = vpop.f32.mrb[0].mxu0
  %v1184 = vadd.f32 0.0, %v1183
  %v1185 = vpop.f32.mrb[0].mxu0
  %v1186 = vadd.f32 0.0, %v1185
  %v1187 = vpop.f32.mrb[0].mxu0
  %v1188 = vadd.f32 0.0, %v1187
  %1189 = vdwg.mxu0
  %v1190 = vmax.f32 %v1112, %v1152
  %v1191 = vmax.f32 %v1114, %v1154
  %v1192 = vmax.f32 %v1116, %v1156
  %v1193 = vmax.f32 %v1118, %v1158
  %v1194 = vmax.f32 %v1122, %v1162
  %v1195 = vmax.f32 %v1124, %v1164
  %v1196 = vmax.f32 %v1126, %v1166
  %v1197 = vmax.f32 %v1128, %v1168
  %v1198 = vmax.f32 %v1132, %v1172
  %v1199 = vmax.f32 %v1134, %v1174
  %v1200 = vmax.f32 %v1136, %v1176
  %v1201 = vmax.f32 %v1138, %v1178
  %v1202 = vmax.f32 %v1142, %v1182
  %v1203 = vmax.f32 %v1144, %v1184
  %v1204 = vmax.f32 %v1146, %v1186
  %v1205 = vmax.f32 %v1148, %v1188
  %v1206 = vmax.f32 %v1190, %v1191
  %v1207 = vmax.f32 %v1192, %v1193
  %v1208 = vmax.f32 %v1194, %v1195
  %v1209 = vmax.f32 %v1196, %v1197
  %v1210 = vmax.f32 %v1198, %v1199
  %v1211 = vmax.f32 %v1200, %v1201
  %v1212 = vmax.f32 %v1202, %v1203
  %v1213 = vmax.f32 %v1204, %v1205
  %v1214 = vadd.f32 %v1206, %v402
  %v1215 = vadd.f32 %v1207, %v402
  %v1216 = vadd.f32 %v1208, %v402
  %v1217 = vadd.f32 %v1209, %v402
  %v1218 = vadd.f32 %v1210, %v402
  %v1219 = vadd.f32 %v1211, %v402
  %v1220 = vadd.f32 %v1212, %v402
  %v1221 = vadd.f32 %v1213, %v402
  %v1222 = vmax.f32 %v1214, 0.0
  %v1223 = vmax.f32 %v1215, 0.0
  %v1224 = vmax.f32 %v1216, 0.0
  %v1225 = vmax.f32 %v1217, 0.0
  %v1226 = vmax.f32 %v1218, 0.0
  %v1227 = vmax.f32 %v1219, 0.0
  %v1228 = vmax.f32 %v1220, 0.0
  %v1229 = vmax.f32 %v1221, 0.0
  %v1230 = vpack.c.bf16 %v1223, %v1222
  %v1231 = vpack.c.bf16 %v1225, %v1224
  %v1232 = vpack.c.bf16 %v1227, %v1226
  %v1233 = vpack.c.bf16 %v1229, %v1228
  %s1234 = scalar_lea.vmem %s0, 512
  %v1235 = vld [vmem:[%s1234] sm:$0xff]
  %v1236 = vld [vmem:[%s1234 + $0x8] sm:$0xff]
  %v1237 = vld [vmem:[%s1234 + $0x10] sm:$0xff]
  %v1238 = vld [vmem:[%s1234 + $0x18] sm:$0xff]
  %v1239 = vld [vmem:[%s1234 + $0x20] sm:$0xff]
  %v1240 = vld [vmem:[%s1234 + $0x28] sm:$0xff]
  %v1241 = vld [vmem:[%s1234 + $0x30] sm:$0xff]
  %v1242 = vld [vmem:[%s1234 + $0x38] sm:$0xff]
  %v1243 = vld [vmem:[%s1234 + $0x40] sm:$0xff]
  %v1244 = vld [vmem:[%s1234 + $0x48] sm:$0xff]
  %v1245 = vld [vmem:[%s1234 + $0x50] sm:$0xff]
  %v1246 = vld [vmem:[%s1234 + $0x58] sm:$0xff]
  %v1247 = vld [vmem:[%s1234 + $0x60] sm:$0xff]
  %v1248 = vld [vmem:[%s1234 + $0x68] sm:$0xff]
  %v1249 = vld [vmem:[%s1234 + $0x70] sm:$0xff]
  %v1250 = vld [vmem:[%s1234 + $0x78] sm:$0xff]
  %v1267 = vunpack.c.l.b16 %v1235
  %v1268 = vunpack.c.h.b16 %v1235
  %v1269 = vunpack.c.l.b16 %v1236
  %v1270 = vunpack.c.h.b16 %v1236
  %v1271 = vunpack.c.l.b16 %v1237
  %v1272 = vunpack.c.h.b16 %v1237
  %v1273 = vunpack.c.l.b16 %v1238
  %v1274 = vunpack.c.h.b16 %v1238
  %v1275 = vunpack.c.l.b16 %v1239
  %v1276 = vunpack.c.h.b16 %v1239
  %v1277 = vunpack.c.l.b16 %v1240
  %v1278 = vunpack.c.h.b16 %v1240
  %v1279 = vunpack.c.l.b16 %v1241
  %v1280 = vunpack.c.h.b16 %v1241
  %v1281 = vunpack.c.l.b16 %v1242
  %v1282 = vunpack.c.h.b16 %v1242
  %v1283 = vunpack.c.l.b16 %v1243
  %v1284 = vunpack.c.h.b16 %v1243
  %v1285 = vunpack.c.l.b16 %v1244
  %v1286 = vunpack.c.h.b16 %v1244
  %v1287 = vunpack.c.l.b16 %v1245
  %v1288 = vunpack.c.h.b16 %v1245
  %v1289 = vunpack.c.l.b16 %v1246
  %v1290 = vunpack.c.h.b16 %v1246
  %v1291 = vunpack.c.l.b16 %v1247
  %v1292 = vunpack.c.h.b16 %v1247
  %v1293 = vunpack.c.l.b16 %v1248
  %v1294 = vunpack.c.h.b16 %v1248
  %v1295 = vunpack.c.l.b16 %v1249
  %v1296 = vunpack.c.h.b16 %v1249
  %v1297 = vunpack.c.l.b16 %v1250
  %v1298 = vunpack.c.h.b16 %v1250
  %v1299 = vpack.c.b16 %v1269, %v1267
  %v1300 = vpack.c.b16 %v1270, %v1268
  %v1301 = vpack.c.b16 %v1273, %v1271
  %v1302 = vpack.c.b16 %v1274, %v1272
  %v1303 = vpack.c.b16 %v1277, %v1275
  %v1304 = vpack.c.b16 %v1278, %v1276
  %v1305 = vpack.c.b16 %v1281, %v1279
  %v1306 = vpack.c.b16 %v1282, %v1280
  %v1307 = vpack.c.b16 %v1285, %v1283
  %v1308 = vpack.c.b16 %v1286, %v1284
  %v1309 = vpack.c.b16 %v1289, %v1287
  %v1310 = vpack.c.b16 %v1290, %v1288
  %v1311 = vpack.c.b16 %v1293, %v1291
  %v1312 = vpack.c.b16 %v1294, %v1292
  %v1313 = vpack.c.b16 %v1297, %v1295
  %v1314 = vpack.c.b16 %v1298, %v1296
  %v1324 = vsel %vm229, %v1300, 0
  %v1327 = vsel %vm229, %v1302, 0
  %v1330 = vsel %vm229, %v1304, 0
  %v1333 = vsel %vm229, %v1306, 0
  %v1336 = vsel %vm229, %v1308, 0
  %v1339 = vsel %vm229, %v1310, 0
  %v1342 = vsel %vm229, %v1312, 0
  %v1345 = vsel %vm229, %v1314, 0
  %1347 = vmatprep.subr.bf16.mxu0 %v196
  %1348 = vmatpush1.bf16.msra.mxu0 %v195
  %1349 = vmatprep.subr.bf16.mxu0 %v198
  %1350 = vmatpush1.bf16.msra.mxu0 %v197
  %1351 = vmatprep.subr.bf16.mxu0 %v200
  %1352 = vmatpush1.bf16.msra.mxu0 %v199
  %1353 = vmatprep.subr.bf16.mxu0 %v202
  %1354 = vmatpush1.bf16.msra.mxu0 %v201
  %1355 = vmatprep.subr.bf16.mxu0 %v204
  %1356 = vmatpush1.bf16.msra.mxu0 %v203
  %1357 = vmatprep.subr.bf16.mxu0 %v206
  %1358 = vmatpush1.bf16.msra.mxu0 %v205
  %1359 = vmatprep.subr.bf16.mxu0 %v208
  %1360 = vmatpush1.bf16.msra.mxu0 %v207
  %1361 = vmatprep.subr.bf16.mxu0 %v210
  %1362 = vmatpush1.bf16.msra.mxu0 %v209
  %1363 = vmatprep.subr.bf16.mxu0 %v259
  %1364 = vmatpush1.bf16.msra.mxu0 %v256
  %1365 = vmatprep.subr.bf16.mxu0 0
  %1366 = vmatpush1.bf16.msra.mxu0 0
  %1367 = vmatprep.subr.bf16.mxu0 0
  %1368 = vmatpush1.bf16.msra.mxu0 0
  %1369 = vmatprep.subr.bf16.mxu0 0
  %1370 = vmatpush1.bf16.msra.mxu0 0
  %1371 = vmatprep.subr.bf16.mxu0 0
  %1372 = vmatpush1.bf16.msra.mxu0 0
  %1373 = vmatprep.subr.bf16.mxu0 0
  %1374 = vmatpush1.bf16.msra.mxu0 0
  %1375 = vmatprep.subr.bf16.mxu0 0
  %1376 = vmatpush1.bf16.msra.mxu0 0
  %1377 = vmatprep.subr.bf16.mxu0 0
  %1378 = vmatpush1.bf16.msra.mxu0 0
  %1379 = vmatprep.mubr.bf16.mxu0 %v1324
  %1380 = vmatmul.mubr.bf16.gmra.mrb[0].mxu0 %v1299
  %v1381 = vpop.f32.mrb[0].mxu0
  %v1382 = vadd.f32 0.0, %v1381
  %v1383 = vpop.f32.mrb[0].mxu0
  %v1384 = vadd.f32 0.0, %v1383
  %v1385 = vpop.f32.mrb[0].mxu0
  %v1386 = vadd.f32 0.0, %v1385
  %v1387 = vpop.f32.mrb[0].mxu0
  %v1388 = vadd.f32 0.0, %v1387
  %1389 = vmatprep.mubr.bf16.mxu0 %v1327
  %1390 = vmatmul.mubr.bf16.gmra.mrb[0].mxu0 %v1301
  %v1391 = vpop.f32.mrb[0].mxu0
  %v1392 = vadd.f32 0.0, %v1391
  %v1393 = vpop.f32.mrb[0].mxu0
  %v1394 = vadd.f32 0.0, %v1393
  %v1395 = vpop.f32.mrb[0].mxu0
  %v1396 = vadd.f32 0.0, %v1395
  %v1397 = vpop.f32.mrb[0].mxu0
  %v1398 = vadd.f32 0.0, %v1397
  %1399 = vmatprep.mubr.bf16.mxu0 %v1330
  %1400 = vmatmul.mubr.bf16.gmra.mrb[0].mxu0 %v1303
  %v1401 = vpop.f32.mrb[0].mxu0
  %v1402 = vadd.f32 0.0, %v1401
  %v1403 = vpop.f32.mrb[0].mxu0
  %v1404 = vadd.f32 0.0, %v1403
  %v1405 = vpop.f32.mrb[0].mxu0
  %v1406 = vadd.f32 0.0, %v1405
  %v1407 = vpop.f32.mrb[0].mxu0
  %v1408 = vadd.f32 0.0, %v1407
  %1409 = vmatprep.mubr.bf16.mxu0 %v1333
  %1410 = vmatmul.mubr.bf16.gmra.mrb[0].mxu0 %v1305
  %v1411 = vpop.f32.mrb[0].mxu0
  %v1412 = vadd.f32 0.0, %v1411
  %v1413 = vpop.f32.mrb[0].mxu0
  %v1414 = vadd.f32 0.0, %v1413
  %v1415 = vpop.f32.mrb[0].mxu0
  %v1416 = vadd.f32 0.0, %v1415
  %v1417 = vpop.f32.mrb[0].mxu0
  %v1418 = vadd.f32 0.0, %v1417
  %1419 = vmatprep.mubr.bf16.mxu0 %v1336
  %1420 = vmatmul.mubr.bf16.gmra.mrb[0].mxu0 %v1307
  %v1421 = vpop.f32.mrb[0].mxu0
  %v1422 = vadd.f32 0.0, %v1421
  %v1423 = vpop.f32.mrb[0].mxu0
  %v1424 = vadd.f32 0.0, %v1423
  %v1425 = vpop.f32.mrb[0].mxu0
  %v1426 = vadd.f32 0.0, %v1425
  %v1427 = vpop.f32.mrb[0].mxu0
  %v1428 = vadd.f32 0.0, %v1427
  %1429 = vmatprep.mubr.bf16.mxu0 %v1339
  %1430 = vmatmul.mubr.bf16.gmra.mrb[0].mxu0 %v1309
  %v1431 = vpop.f32.mrb[0].mxu0
  %v1432 = vadd.f32 0.0, %v1431
  %v1433 = vpop.f32.mrb[0].mxu0
  %v1434 = vadd.f32 0.0, %v1433
  %v1435 = vpop.f32.mrb[0].mxu0
  %v1436 = vadd.f32 0.0, %v1435
  %v1437 = vpop.f32.mrb[0].mxu0
  %v1438 = vadd.f32 0.0, %v1437
  %1439 = vmatprep.mubr.bf16.mxu0 %v1342
  %1440 = vmatmul.mubr.bf16.gmra.mrb[0].mxu0 %v1311
  %v1441 = vpop.f32.mrb[0].mxu0
  %v1442 = vadd.f32 0.0, %v1441
  %v1443 = vpop.f32.mrb[0].mxu0
  %v1444 = vadd.f32 0.0, %v1443
  %v1445 = vpop.f32.mrb[0].mxu0
  %v1446 = vadd.f32 0.0, %v1445
  %v1447 = vpop.f32.mrb[0].mxu0
  %v1448 = vadd.f32 0.0, %v1447
  %1449 = vmatprep.mubr.bf16.mxu0 %v1345
  %1450 = vmatmul.mubr.bf16.gmra.mrb[0].mxu0 %v1313
  %v1451 = vpop.f32.mrb[0].mxu0
  %v1452 = vadd.f32 0.0, %v1451
  %v1453 = vpop.f32.mrb[0].mxu0
  %v1454 = vadd.f32 0.0, %v1453
  %v1455 = vpop.f32.mrb[0].mxu0
  %v1456 = vadd.f32 0.0, %v1455
  %v1457 = vpop.f32.mrb[0].mxu0
  %v1458 = vadd.f32 0.0, %v1457
  %1459 = vdwg.mxu0
  %v1460 = vmax.f32 %v1382, %v1422
  %v1461 = vmax.f32 %v1384, %v1424
  %v1462 = vmax.f32 %v1386, %v1426
  %v1463 = vmax.f32 %v1388, %v1428
  %v1464 = vmax.f32 %v1392, %v1432
  %v1465 = vmax.f32 %v1394, %v1434
  %v1466 = vmax.f32 %v1396, %v1436
  %v1467 = vmax.f32 %v1398, %v1438
  %v1468 = vmax.f32 %v1402, %v1442
  %v1469 = vmax.f32 %v1404, %v1444
  %v1470 = vmax.f32 %v1406, %v1446
  %v1471 = vmax.f32 %v1408, %v1448
  %v1472 = vmax.f32 %v1412, %v1452
  %v1473 = vmax.f32 %v1414, %v1454
  %v1474 = vmax.f32 %v1416, %v1456
  %v1475 = vmax.f32 %v1418, %v1458
  %v1476 = vmax.f32 %v1460, %v1461
  %v1477 = vmax.f32 %v1462, %v1463
  %v1478 = vmax.f32 %v1464, %v1465
  %v1479 = vmax.f32 %v1466, %v1467
  %v1480 = vmax.f32 %v1468, %v1469
  %v1481 = vmax.f32 %v1470, %v1471
  %v1482 = vmax.f32 %v1472, %v1473
  %v1483 = vmax.f32 %v1474, %v1475
  %v1484 = vadd.f32 %v1476, %v402
  %v1485 = vadd.f32 %v1477, %v402
  %v1486 = vadd.f32 %v1478, %v402
  %v1487 = vadd.f32 %v1479, %v402
  %v1488 = vadd.f32 %v1480, %v402
  %v1489 = vadd.f32 %v1481, %v402
  %v1490 = vadd.f32 %v1482, %v402
  %v1491 = vadd.f32 %v1483, %v402
  %v1492 = vmax.f32 %v1484, 0.0
  %v1493 = vmax.f32 %v1485, 0.0
  %v1494 = vmax.f32 %v1486, 0.0
  %v1495 = vmax.f32 %v1487, 0.0
  %v1496 = vmax.f32 %v1488, 0.0
  %v1497 = vmax.f32 %v1489, 0.0
  %v1498 = vmax.f32 %v1490, 0.0
  %v1499 = vmax.f32 %v1491, 0.0
  %v1500 = vpack.c.bf16 %v1493, %v1492
  %v1501 = vpack.c.bf16 %v1495, %v1494
  %v1502 = vpack.c.bf16 %v1497, %v1496
  %v1503 = vpack.c.bf16 %v1499, %v1498
  %s1504 = scalar_lea.vmem %s0, 640
  %v1505 = vld [vmem:[%s1504] sm:$0xff]
  %v1506 = vld [vmem:[%s1504 + $0x8] sm:$0xff]
  %v1507 = vld [vmem:[%s1504 + $0x10] sm:$0xff]
  %v1508 = vld [vmem:[%s1504 + $0x18] sm:$0xff]
  %v1509 = vld [vmem:[%s1504 + $0x20] sm:$0xff]
  %v1510 = vld [vmem:[%s1504 + $0x28] sm:$0xff]
  %v1511 = vld [vmem:[%s1504 + $0x30] sm:$0xff]
  %v1512 = vld [vmem:[%s1504 + $0x38] sm:$0xff]
  %v1513 = vld [vmem:[%s1504 + $0x40] sm:$0xff]
  %v1514 = vld [vmem:[%s1504 + $0x48] sm:$0xff]
  %v1515 = vld [vmem:[%s1504 + $0x50] sm:$0xff]
  %v1516 = vld [vmem:[%s1504 + $0x58] sm:$0xff]
  %v1517 = vld [vmem:[%s1504 + $0x60] sm:$0xff]
  %v1518 = vld [vmem:[%s1504 + $0x68] sm:$0xff]
  %v1519 = vld [vmem:[%s1504 + $0x70] sm:$0xff]
  %v1520 = vld [vmem:[%s1504 + $0x78] sm:$0xff]
  %v1537 = vunpack.c.l.b16 %v1505
  %v1538 = vunpack.c.h.b16 %v1505
  %v1539 = vunpack.c.l.b16 %v1506
  %v1540 = vunpack.c.h.b16 %v1506
  %v1541 = vunpack.c.l.b16 %v1507
  %v1542 = vunpack.c.h.b16 %v1507
  %v1543 = vunpack.c.l.b16 %v1508
  %v1544 = vunpack.c.h.b16 %v1508
  %v1545 = vunpack.c.l.b16 %v1509
  %v1546 = vunpack.c.h.b16 %v1509
  %v1547 = vunpack.c.l.b16 %v1510
  %v1548 = vunpack.c.h.b16 %v1510
  %v1549 = vunpack.c.l.b16 %v1511
  %v1550 = vunpack.c.h.b16 %v1511
  %v1551 = vunpack.c.l.b16 %v1512
  %v1552 = vunpack.c.h.b16 %v1512
  %v1553 = vunpack.c.l.b16 %v1513
  %v1554 = vunpack.c.h.b16 %v1513
  %v1555 = vunpack.c.l.b16 %v1514
  %v1556 = vunpack.c.h.b16 %v1514
  %v1557 = vunpack.c.l.b16 %v1515
  %v1558 = vunpack.c.h.b16 %v1515
  %v1559 = vunpack.c.l.b16 %v1516
  %v1560 = vunpack.c.h.b16 %v1516
  %v1561 = vunpack.c.l.b16 %v1517
  %v1562 = vunpack.c.h.b16 %v1517
  %v1563 = vunpack.c.l.b16 %v1518
  %v1564 = vunpack.c.h.b16 %v1518
  %v1565 = vunpack.c.l.b16 %v1519
  %v1566 = vunpack.c.h.b16 %v1519
  %v1567 = vunpack.c.l.b16 %v1520
  %v1568 = vunpack.c.h.b16 %v1520
  %v1569 = vpack.c.b16 %v1539, %v1537
  %v1570 = vpack.c.b16 %v1540, %v1538
  %v1571 = vpack.c.b16 %v1543, %v1541
  %v1572 = vpack.c.b16 %v1544, %v1542
  %v1573 = vpack.c.b16 %v1547, %v1545
  %v1574 = vpack.c.b16 %v1548, %v1546
  %v1575 = vpack.c.b16 %v1551, %v1549
  %v1576 = vpack.c.b16 %v1552, %v1550
  %v1577 = vpack.c.b16 %v1555, %v1553
  %v1578 = vpack.c.b16 %v1556, %v1554
  %v1579 = vpack.c.b16 %v1559, %v1557
  %v1580 = vpack.c.b16 %v1560, %v1558
  %v1581 = vpack.c.b16 %v1563, %v1561
  %v1582 = vpack.c.b16 %v1564, %v1562
  %v1583 = vpack.c.b16 %v1567, %v1565
  %v1584 = vpack.c.b16 %v1568, %v1566
  %v1594 = vsel %vm229, %v1570, 0
  %v1597 = vsel %vm229, %v1572, 0
  %v1600 = vsel %vm229, %v1574, 0
  %v1603 = vsel %vm229, %v1576, 0
  %v1606 = vsel %vm229, %v1578, 0
  %v1609 = vsel %vm229, %v1580, 0
  %v1612 = vsel %vm229, %v1582, 0
  %v1615 = vsel %vm229, %v1584, 0
  %1617 = vmatprep.subr.bf16.mxu0 %v196
  %1618 = vmatpush1.bf16.msra.mxu0 %v195
  %1619 = vmatprep.subr.bf16.mxu0 %v198
  %1620 = vmatpush1.bf16.msra.mxu0 %v197
  %1621 = vmatprep.subr.bf16.mxu0 %v200
  %1622 = vmatpush1.bf16.msra.mxu0 %v199
  %1623 = vmatprep.subr.bf16.mxu0 %v202
  %1624 = vmatpush1.bf16.msra.mxu0 %v201
  %1625 = vmatprep.subr.bf16.mxu0 %v204
  %1626 = vmatpush1.bf16.msra.mxu0 %v203
  %1627 = vmatprep.subr.bf16.mxu0 %v206
  %1628 = vmatpush1.bf16.msra.mxu0 %v205
  %1629 = vmatprep.subr.bf16.mxu0 %v208
  %1630 = vmatpush1.bf16.msra.mxu0 %v207
  %1631 = vmatprep.subr.bf16.mxu0 %v210
  %1632 = vmatpush1.bf16.msra.mxu0 %v209
  %1633 = vmatprep.subr.bf16.mxu0 %v259
  %1634 = vmatpush1.bf16.msra.mxu0 %v256
  %1635 = vmatprep.subr.bf16.mxu0 0
  %1636 = vmatpush1.bf16.msra.mxu0 0
  %1637 = vmatprep.subr.bf16.mxu0 0
  %1638 = vmatpush1.bf16.msra.mxu0 0
  %1639 = vmatprep.subr.bf16.mxu0 0
  %1640 = vmatpush1.bf16.msra.mxu0 0
  %1641 = vmatprep.subr.bf16.mxu0 0
  %1642 = vmatpush1.bf16.msra.mxu0 0
  %1643 = vmatprep.subr.bf16.mxu0 0
  %1644 = vmatpush1.bf16.msra.mxu0 0
  %1645 = vmatprep.subr.bf16.mxu0 0
  %1646 = vmatpush1.bf16.msra.mxu0 0
  %1647 = vmatprep.subr.bf16.mxu0 0
  %1648 = vmatpush1.bf16.msra.mxu0 0
  %1649 = vmatprep.mubr.bf16.mxu0 %v1594
  %1650 = vmatmul.mubr.bf16.gmra.mrb[0].mxu0 %v1569
  %v1651 = vpop.f32.mrb[0].mxu0
  %v1652 = vadd.f32 0.0, %v1651
  %v1653 = vpop.f32.mrb[0].mxu0
  %v1654 = vadd.f32 0.0, %v1653
  %v1655 = vpop.f32.mrb[0].mxu0
  %v1656 = vadd.f32 0.0, %v1655
  %v1657 = vpop.f32.mrb[0].mxu0
  %v1658 = vadd.f32 0.0, %v1657
  %1659 = vmatprep.mubr.bf16.mxu0 %v1597
  %1660 = vmatmul.mubr.bf16.gmra.mrb[0].mxu0 %v1571
  %v1661 = vpop.f32.mrb[0].mxu0
  %v1662 = vadd.f32 0.0, %v1661
  %v1663 = vpop.f32.mrb[0].mxu0
  %v1664 = vadd.f32 0.0, %v1663
  %v1665 = vpop.f32.mrb[0].mxu0
  %v1666 = vadd.f32 0.0, %v1665
  %v1667 = vpop.f32.mrb[0].mxu0
  %v1668 = vadd.f32 0.0, %v1667
  %1669 = vmatprep.mubr.bf16.mxu0 %v1600
  %1670 = vmatmul.mubr.bf16.gmra.mrb[0].mxu0 %v1573
  %v1671 = vpop.f32.mrb[0].mxu0
  %v1672 = vadd.f32 0.0, %v1671
  %v1673 = vpop.f32.mrb[0].mxu0
  %v1674 = vadd.f32 0.0, %v1673
  %v1675 = vpop.f32.mrb[0].mxu0
  %v1676 = vadd.f32 0.0, %v1675
  %v1677 = vpop.f32.mrb[0].mxu0
  %v1678 = vadd.f32 0.0, %v1677
  %1679 = vmatprep.mubr.bf16.mxu0 %v1603
  %1680 = vmatmul.mubr.bf16.gmra.mrb[0].mxu0 %v1575
  %v1681 = vpop.f32.mrb[0].mxu0
  %v1682 = vadd.f32 0.0, %v1681
  %v1683 = vpop.f32.mrb[0].mxu0
  %v1684 = vadd.f32 0.0, %v1683
  %v1685 = vpop.f32.mrb[0].mxu0
  %v1686 = vadd.f32 0.0, %v1685
  %v1687 = vpop.f32.mrb[0].mxu0
  %v1688 = vadd.f32 0.0, %v1687
  %1689 = vmatprep.mubr.bf16.mxu0 %v1606
  %1690 = vmatmul.mubr.bf16.gmra.mrb[0].mxu0 %v1577
  %v1691 = vpop.f32.mrb[0].mxu0
  %v1692 = vadd.f32 0.0, %v1691
  %v1693 = vpop.f32.mrb[0].mxu0
  %v1694 = vadd.f32 0.0, %v1693
  %v1695 = vpop.f32.mrb[0].mxu0
  %v1696 = vadd.f32 0.0, %v1695
  %v1697 = vpop.f32.mrb[0].mxu0
  %v1698 = vadd.f32 0.0, %v1697
  %1699 = vmatprep.mubr.bf16.mxu0 %v1609
  %1700 = vmatmul.mubr.bf16.gmra.mrb[0].mxu0 %v1579
  %v1701 = vpop.f32.mrb[0].mxu0
  %v1702 = vadd.f32 0.0, %v1701
  %v1703 = vpop.f32.mrb[0].mxu0
  %v1704 = vadd.f32 0.0, %v1703
  %v1705 = vpop.f32.mrb[0].mxu0
  %v1706 = vadd.f32 0.0, %v1705
  %v1707 = vpop.f32.mrb[0].mxu0
  %v1708 = vadd.f32 0.0, %v1707
  %1709 = vmatprep.mubr.bf16.mxu0 %v1612
  %1710 = vmatmul.mubr.bf16.gmra.mrb[0].mxu0 %v1581
  %v1711 = vpop.f32.mrb[0].mxu0
  %v1712 = vadd.f32 0.0, %v1711
  %v1713 = vpop.f32.mrb[0].mxu0
  %v1714 = vadd.f32 0.0, %v1713
  %v1715 = vpop.f32.mrb[0].mxu0
  %v1716 = vadd.f32 0.0, %v1715
  %v1717 = vpop.f32.mrb[0].mxu0
  %v1718 = vadd.f32 0.0, %v1717
  %1719 = vmatprep.mubr.bf16.mxu0 %v1615
  %1720 = vmatmul.mubr.bf16.gmra.mrb[0].mxu0 %v1583
  %v1721 = vpop.f32.mrb[0].mxu0
  %v1722 = vadd.f32 0.0, %v1721
  %v1723 = vpop.f32.mrb[0].mxu0
  %v1724 = vadd.f32 0.0, %v1723
  %v1725 = vpop.f32.mrb[0].mxu0
  %v1726 = vadd.f32 0.0, %v1725
  %v1727 = vpop.f32.mrb[0].mxu0
  %v1728 = vadd.f32 0.0, %v1727
  %1729 = vdwg.mxu0
  %v1730 = vmax.f32 %v1652, %v1692
  %v1731 = vmax.f32 %v1654, %v1694
  %v1732 = vmax.f32 %v1656, %v1696
  %v1733 = vmax.f32 %v1658, %v1698
  %v1734 = vmax.f32 %v1662, %v1702
  %v1735 = vmax.f32 %v1664, %v1704
  %v1736 = vmax.f32 %v1666, %v1706
  %v1737 = vmax.f32 %v1668, %v1708
  %v1738 = vmax.f32 %v1672, %v1712
  %v1739 = vmax.f32 %v1674, %v1714
  %v1740 = vmax.f32 %v1676, %v1716
  %v1741 = vmax.f32 %v1678, %v1718
  %v1742 = vmax.f32 %v1682, %v1722
  %v1743 = vmax.f32 %v1684, %v1724
  %v1744 = vmax.f32 %v1686, %v1726
  %v1745 = vmax.f32 %v1688, %v1728
  %v1746 = vmax.f32 %v1730, %v1731
  %v1747 = vmax.f32 %v1732, %v1733
  %v1748 = vmax.f32 %v1734, %v1735
  %v1749 = vmax.f32 %v1736, %v1737
  %v1750 = vmax.f32 %v1738, %v1739
  %v1751 = vmax.f32 %v1740, %v1741
  %v1752 = vmax.f32 %v1742, %v1743
  %v1753 = vmax.f32 %v1744, %v1745
  %v1754 = vadd.f32 %v1746, %v402
  %v1755 = vadd.f32 %v1747, %v402
  %v1756 = vadd.f32 %v1748, %v402
  %v1757 = vadd.f32 %v1749, %v402
  %v1758 = vadd.f32 %v1750, %v402
  %v1759 = vadd.f32 %v1751, %v402
  %v1760 = vadd.f32 %v1752, %v402
  %v1761 = vadd.f32 %v1753, %v402
  %v1762 = vmax.f32 %v1754, 0.0
  %v1763 = vmax.f32 %v1755, 0.0
  %v1764 = vmax.f32 %v1756, 0.0
  %v1765 = vmax.f32 %v1757, 0.0
  %v1766 = vmax.f32 %v1758, 0.0
  %v1767 = vmax.f32 %v1759, 0.0
  %v1768 = vmax.f32 %v1760, 0.0
  %v1769 = vmax.f32 %v1761, 0.0
  %v1770 = vpack.c.bf16 %v1763, %v1762
  %v1771 = vpack.c.bf16 %v1765, %v1764
  %v1772 = vpack.c.bf16 %v1767, %v1766
  %v1773 = vpack.c.bf16 %v1769, %v1768
  %v1774 = vld [vmem:[%s3] sm:$0xff]
  %v1775 = vld [vmem:[%s3 + $0x8] sm:$0xff]
  %v1776 = vld [vmem:[%s3 + $0x10] sm:$0xff]
  %v1777 = vld [vmem:[%s3 + $0x18] sm:$0xff]
  %v1778 = vld [vmem:[%s3 + $0x20] sm:$0xff]
  %v1779 = vld [vmem:[%s3 + $0x28] sm:$0xff]
  %v1780 = vld [vmem:[%s3 + $0x30] sm:$0xff]
  %v1781 = vld [vmem:[%s3 + $0x38] sm:$0xff]
  %v1782 = vld [vmem:[%s3 + $0x40] sm:$0xff]
  %v1783 = vld [vmem:[%s3 + $0x48] sm:$0xff]
  %v1784 = vld [vmem:[%s3 + $0x50] sm:$0xff]
  %v1785 = vld [vmem:[%s3 + $0x58] sm:$0xff]
  %v1786 = vld [vmem:[%s3 + $0x60] sm:$0xff]
  %v1787 = vld [vmem:[%s3 + $0x68] sm:$0xff]
  %v1788 = vld [vmem:[%s3 + $0x70] sm:$0xff]
  %v1789 = vld [vmem:[%s3 + $0x78] sm:$0xff]
  %s1790 = scalar_lea.vmem %s3, 128
  %v1791 = vld [vmem:[%s1790] sm:$0xff]
  %v1792 = vld [vmem:[%s1790 + $0x8] sm:$0xff]
  %v1793 = vld [vmem:[%s1790 + $0x10] sm:$0xff]
  %v1794 = vld [vmem:[%s1790 + $0x18] sm:$0xff]
  %v1795 = vld [vmem:[%s1790 + $0x20] sm:$0xff]
  %v1796 = vld [vmem:[%s1790 + $0x28] sm:$0xff]
  %v1797 = vld [vmem:[%s1790 + $0x30] sm:$0xff]
  %v1798 = vld [vmem:[%s1790 + $0x38] sm:$0xff]
  %v1799 = vld [vmem:[%s1790 + $0x40] sm:$0xff]
  %v1800 = vld [vmem:[%s1790 + $0x48] sm:$0xff]
  %v1801 = vld [vmem:[%s1790 + $0x50] sm:$0xff]
  %v1802 = vld [vmem:[%s1790 + $0x58] sm:$0xff]
  %v1803 = vld [vmem:[%s1790 + $0x60] sm:$0xff]
  %v1804 = vld [vmem:[%s1790 + $0x68] sm:$0xff]
  %v1805 = vld [vmem:[%s1790 + $0x70] sm:$0xff]
  %v1806 = vld [vmem:[%s1790 + $0x78] sm:$0xff]
  %v1823 = vunpack.c.l.b16 %v1791
  %v1824 = vunpack.c.h.b16 %v1791
  %v1825 = vunpack.c.l.b16 %v1792
  %v1826 = vunpack.c.h.b16 %v1792
  %v1827 = vunpack.c.l.b16 %v1793
  %v1828 = vunpack.c.h.b16 %v1793
  %v1829 = vunpack.c.l.b16 %v1794
  %v1830 = vunpack.c.h.b16 %v1794
  %v1831 = vunpack.c.l.b16 %v1795
  %v1832 = vunpack.c.h.b16 %v1795
  %v1833 = vunpack.c.l.b16 %v1796
  %v1834 = vunpack.c.h.b16 %v1796
  %v1835 = vunpack.c.l.b16 %v1797
  %v1836 = vunpack.c.h.b16 %v1797
  %v1837 = vunpack.c.l.b16 %v1798
  %v1838 = vunpack.c.h.b16 %v1798
  %v1839 = vunpack.c.l.b16 %v1799
  %v1840 = vunpack.c.h.b16 %v1799
  %v1841 = vunpack.c.l.b16 %v1800
  %v1842 = vunpack.c.h.b16 %v1800
  %v1843 = vunpack.c.l.b16 %v1801
  %v1844 = vunpack.c.h.b16 %v1801
  %v1845 = vunpack.c.l.b16 %v1802
  %v1846 = vunpack.c.h.b16 %v1802
  %v1847 = vunpack.c.l.b16 %v1803
  %v1848 = vunpack.c.h.b16 %v1803
  %v1849 = vunpack.c.l.b16 %v1804
  %v1850 = vunpack.c.h.b16 %v1804
  %v1851 = vunpack.c.l.b16 %v1805
  %v1852 = vunpack.c.h.b16 %v1805
  %v1853 = vunpack.c.l.b16 %v1806
  %v1854 = vunpack.c.h.b16 %v1806
  %v1855 = vpack.c.b16 %v1825, %v1823
  %v1856 = vpack.c.b16 %v1826, %v1824
  %v1857 = vpack.c.b16 %v1829, %v1827
  %v1858 = vpack.c.b16 %v1830, %v1828
  %v1859 = vpack.c.b16 %v1833, %v1831
  %v1860 = vpack.c.b16 %v1834, %v1832
  %v1861 = vpack.c.b16 %v1837, %v1835
  %v1862 = vpack.c.b16 %v1838, %v1836
  %v1863 = vpack.c.b16 %v1841, %v1839
  %v1864 = vpack.c.b16 %v1842, %v1840
  %v1865 = vpack.c.b16 %v1845, %v1843
  %v1866 = vpack.c.b16 %v1846, %v1844
  %v1867 = vpack.c.b16 %v1849, %v1847
  %v1868 = vpack.c.b16 %v1850, %v1848
  %v1869 = vpack.c.b16 %v1853, %v1851
  %v1870 = vpack.c.b16 %v1854, %v1852
  %1887 = vmatprep.subr.bf16.mxu0 %v1856
  %1888 = vmatpush1.bf16.msra.mxu0 %v1855
  %1889 = vmatprep.subr.bf16.mxu0 %v1858
  %1890 = vmatpush1.bf16.msra.mxu0 %v1857
  %1891 = vmatprep.subr.bf16.mxu0 %v1860
  %1892 = vmatpush1.bf16.msra.mxu0 %v1859
  %1893 = vmatprep.subr.bf16.mxu0 %v1862
  %1894 = vmatpush1.bf16.msra.mxu0 %v1861
  %1895 = vmatprep.subr.bf16.mxu0 %v1864
  %1896 = vmatpush1.bf16.msra.mxu0 %v1863
  %1897 = vmatprep.subr.bf16.mxu0 %v1866
  %1898 = vmatpush1.bf16.msra.mxu0 %v1865
  %1899 = vmatprep.subr.bf16.mxu0 %v1868
  %1900 = vmatpush1.bf16.msra.mxu0 %v1867
  %1901 = vmatprep.subr.bf16.mxu0 %v1870
  %1902 = vmatpush1.bf16.msra.mxu0 %v1869
  %1903 = vmatprep.subr.bf16.mxu0 0
  %1904 = vmatpush1.bf16.msra.mxu0 0
  %1905 = vmatprep.subr.bf16.mxu0 0
  %1906 = vmatpush1.bf16.msra.mxu0 0
  %1907 = vmatprep.subr.bf16.mxu0 0
  %1908 = vmatpush1.bf16.msra.mxu0 0
  %1909 = vmatprep.subr.bf16.mxu0 0
  %1910 = vmatpush1.bf16.msra.mxu0 0
  %1911 = vmatprep.subr.bf16.mxu0 0
  %1912 = vmatpush1.bf16.msra.mxu0 0
  %1913 = vmatprep.subr.bf16.mxu0 0
  %1914 = vmatpush1.bf16.msra.mxu0 0
  %1915 = vmatprep.subr.bf16.mxu0 0
  %1916 = vmatpush1.bf16.msra.mxu0 0
  %1917 = vmatprep.subr.bf16.mxu0 0
  %1918 = vmatpush1.bf16.msra.mxu0 0
  %1919 = vmatprep.mubr.bf16.mxu0 0
  %1920 = vmatmul.mubr.bf16.gmra.mrb[0].mxu0 %v690
  %v1921 = vpop.f32.mrb[0].mxu0
  %v1922 = vadd.f32 0.0, %v1921
  %v1923 = vpop.f32.mrb[0].mxu0
  %v1924 = vadd.f32 0.0, %v1923
  %v1925 = vpop.f32.mrb[0].mxu0
  %v1926 = vadd.f32 0.0, %v1925
  %v1927 = vpop.f32.mrb[0].mxu0
  %v1928 = vadd.f32 0.0, %v1927
  %1929 = vmatprep.mubr.bf16.mxu0 0
  %1930 = vmatmul.mubr.bf16.gmra.mrb[0].mxu0 %v691
  %v1931 = vpop.f32.mrb[0].mxu0
  %v1932 = vadd.f32 0.0, %v1931
  %v1933 = vpop.f32.mrb[0].mxu0
  %v1934 = vadd.f32 0.0, %v1933
  %v1935 = vpop.f32.mrb[0].mxu0
  %v1936 = vadd.f32 0.0, %v1935
  %v1937 = vpop.f32.mrb[0].mxu0
  %v1938 = vadd.f32 0.0, %v1937
  %1939 = vmatprep.mubr.bf16.mxu0 0
  %1940 = vmatmul.mubr.bf16.gmra.mrb[0].mxu0 %v692
  %v1941 = vpop.f32.mrb[0].mxu0
  %v1942 = vadd.f32 0.0, %v1941
  %v1943 = vpop.f32.mrb[0].mxu0
  %v1944 = vadd.f32 0.0, %v1943
  %v1945 = vpop.f32.mrb[0].mxu0
  %v1946 = vadd.f32 0.0, %v1945
  %v1947 = vpop.f32.mrb[0].mxu0
  %v1948 = vadd.f32 0.0, %v1947
  %1949 = vmatprep.mubr.bf16.mxu0 0
  %1950 = vmatmul.mubr.bf16.gmra.mrb[0].mxu0 %v693
  %v1951 = vpop.f32.mrb[0].mxu0
  %v1952 = vadd.f32 0.0, %v1951
  %v1953 = vpop.f32.mrb[0].mxu0
  %v1954 = vadd.f32 0.0, %v1953
  %v1955 = vpop.f32.mrb[0].mxu0
  %v1956 = vadd.f32 0.0, %v1955
  %v1957 = vpop.f32.mrb[0].mxu0
  %v1958 = vadd.f32 0.0, %v1957
  %1959 = vdwg.mxu0
  %v1976 = vunpack.c.l.b16 %v1774
  %v1977 = vunpack.c.h.b16 %v1774
  %v1978 = vunpack.c.l.b16 %v1775
  %v1979 = vunpack.c.h.b16 %v1775
  %v1980 = vunpack.c.l.b16 %v1776
  %v1981 = vunpack.c.h.b16 %v1776
  %v1982 = vunpack.c.l.b16 %v1777
  %v1983 = vunpack.c.h.b16 %v1777
  %v1984 = vunpack.c.l.b16 %v1778
  %v1985 = vunpack.c.h.b16 %v1778
  %v1986 = vunpack.c.l.b16 %v1779
  %v1987 = vunpack.c.h.b16 %v1779
  %v1988 = vunpack.c.l.b16 %v1780
  %v1989 = vunpack.c.h.b16 %v1780
  %v1990 = vunpack.c.l.b16 %v1781
  %v1991 = vunpack.c.h.b16 %v1781
  %v1992 = vunpack.c.l.b16 %v1782
  %v1993 = vunpack.c.h.b16 %v1782
  %v1994 = vunpack.c.l.b16 %v1783
  %v1995 = vunpack.c.h.b16 %v1783
  %v1996 = vunpack.c.l.b16 %v1784
  %v1997 = vunpack.c.h.b16 %v1784
  %v1998 = vunpack.c.l.b16 %v1785
  %v1999 = vunpack.c.h.b16 %v1785
  %v2000 = vunpack.c.l.b16 %v1786
  %v2001 = vunpack.c.h.b16 %v1786
  %v2002 = vunpack.c.l.b16 %v1787
  %v2003 = vunpack.c.h.b16 %v1787
  %v2004 = vunpack.c.l.b16 %v1788
  %v2005 = vunpack.c.h.b16 %v1788
  %v2006 = vunpack.c.l.b16 %v1789
  %v2007 = vunpack.c.h.b16 %v1789
  %v2008 = vpack.c.b16 %v1978, %v1976
  %v2009 = vpack.c.b16 %v1979, %v1977
  %v2010 = vpack.c.b16 %v1982, %v1980
  %v2011 = vpack.c.b16 %v1983, %v1981
  %v2012 = vpack.c.b16 %v1986, %v1984
  %v2013 = vpack.c.b16 %v1987, %v1985
  %v2014 = vpack.c.b16 %v1990, %v1988
  %v2015 = vpack.c.b16 %v1991, %v1989
  %v2016 = vpack.c.b16 %v1994, %v1992
  %v2017 = vpack.c.b16 %v1995, %v1993
  %v2018 = vpack.c.b16 %v1998, %v1996
  %v2019 = vpack.c.b16 %v1999, %v1997
  %v2020 = vpack.c.b16 %v2002, %v2000
  %v2021 = vpack.c.b16 %v2003, %v2001
  %v2022 = vpack.c.b16 %v2006, %v2004
  %v2023 = vpack.c.b16 %v2007, %v2005
  %2040 = vmatprep.subr.bf16.mxu0 %v2009
  %2041 = vmatpush1.bf16.msra.mxu0 %v2008
  %2042 = vmatprep.subr.bf16.mxu0 %v2011
  %2043 = vmatpush1.bf16.msra.mxu0 %v2010
  %2044 = vmatprep.subr.bf16.mxu0 %v2013
  %2045 = vmatpush1.bf16.msra.mxu0 %v2012
  %2046 = vmatprep.subr.bf16.mxu0 %v2015
  %2047 = vmatpush1.bf16.msra.mxu0 %v2014
  %2048 = vmatprep.subr.bf16.mxu0 %v2017
  %2049 = vmatpush1.bf16.msra.mxu0 %v2016
  %2050 = vmatprep.subr.bf16.mxu0 %v2019
  %2051 = vmatpush1.bf16.msra.mxu0 %v2018
  %2052 = vmatprep.subr.bf16.mxu0 %v2021
  %2053 = vmatpush1.bf16.msra.mxu0 %v2020
  %2054 = vmatprep.subr.bf16.mxu0 %v2023
  %2055 = vmatpush1.bf16.msra.mxu0 %v2022
  %2056 = vmatprep.subr.bf16.mxu0 0
  %2057 = vmatpush1.bf16.msra.mxu0 0
  %2058 = vmatprep.subr.bf16.mxu0 0
  %2059 = vmatpush1.bf16.msra.mxu0 0
  %2060 = vmatprep.subr.bf16.mxu0 0
  %2061 = vmatpush1.bf16.msra.mxu0 0
  %2062 = vmatprep.subr.bf16.mxu0 0
  %2063 = vmatpush1.bf16.msra.mxu0 0
  %2064 = vmatprep.subr.bf16.mxu0 0
  %2065 = vmatpush1.bf16.msra.mxu0 0
  %2066 = vmatprep.subr.bf16.mxu0 0
  %2067 = vmatpush1.bf16.msra.mxu0 0
  %2068 = vmatprep.subr.bf16.mxu0 0
  %2069 = vmatpush1.bf16.msra.mxu0 0
  %2070 = vmatprep.subr.bf16.mxu0 0
  %2071 = vmatpush1.bf16.msra.mxu0 0
  %2072 = vmatprep.mubr.bf16.mxu0 0
  %2073 = vmatmul.mubr.bf16.gmra.mrb[0].mxu0 %v420
  %v2074 = vpop.f32.mrb[0].mxu0
  %v2075 = vadd.f32 %v1922, %v2074
  %v2076 = vpop.f32.mrb[0].mxu0
  %v2077 = vadd.f32 %v1924, %v2076
  %v2078 = vpop.f32.mrb[0].mxu0
  %v2079 = vadd.f32 %v1926, %v2078
  %v2080 = vpop.f32.mrb[0].mxu0
  %v2081 = vadd.f32 %v1928, %v2080
  %2082 = vmatprep.mubr.bf16.mxu0 0
  %2083 = vmatmul.mubr.bf16.gmra.mrb[0].mxu0 %v421
  %v2084 = vpop.f32.mrb[0].mxu0
  %v2085 = vadd.f32 %v1932, %v2084
  %v2086 = vpop.f32.mrb[0].mxu0
  %v2087 = vadd.f32 %v1934, %v2086
  %v2088 = vpop.f32.mrb[0].mxu0
  %v2089 = vadd.f32 %v1936, %v2088
  %v2090 = vpop.f32.mrb[0].mxu0
  %v2091 = vadd.f32 %v1938, %v2090
  %2092 = vmatprep.mubr.bf16.mxu0 0
  %2093 = vmatmul.mubr.bf16.gmra.mrb[0].mxu0 %v422
  %v2094 = vpop.f32.mrb[0].mxu0
  %v2095 = vadd.f32 %v1942, %v2094
  %v2096 = vpop.f32.mrb[0].mxu0
  %v2097 = vadd.f32 %v1944, %v2096
  %v2098 = vpop.f32.mrb[0].mxu0
  %v2099 = vadd.f32 %v1946, %v2098
  %v2100 = vpop.f32.mrb[0].mxu0
  %v2101 = vadd.f32 %v1948, %v2100
  %2102 = vmatprep.mubr.bf16.mxu0 0
  %2103 = vmatmul.mubr.bf16.gmra.mrb[0].mxu0 %v423
  %v2104 = vpop.f32.mrb[0].mxu0
  %v2105 = vadd.f32 %v1952, %v2104
  %v2106 = vpop.f32.mrb[0].mxu0
  %v2107 = vadd.f32 %v1954, %v2106
  %v2108 = vpop.f32.mrb[0].mxu0
  %v2109 = vadd.f32 %v1956, %v2108
  %v2110 = vpop.f32.mrb[0].mxu0
  %v2111 = vadd.f32 %v1958, %v2110
  %2112 = vdwg.mxu0
  %s2113 = scalar_lea.vmem %s3, 256
  %v2114 = vld [vmem:[%s2113] sm:$0xff]
  %v2115 = vld [vmem:[%s2113 + $0x8] sm:$0xff]
  %v2116 = vld [vmem:[%s2113 + $0x10] sm:$0xff]
  %v2117 = vld [vmem:[%s2113 + $0x18] sm:$0xff]
  %v2118 = vld [vmem:[%s2113 + $0x20] sm:$0xff]
  %v2119 = vld [vmem:[%s2113 + $0x28] sm:$0xff]
  %v2120 = vld [vmem:[%s2113 + $0x30] sm:$0xff]
  %v2121 = vld [vmem:[%s2113 + $0x38] sm:$0xff]
  %v2122 = vld [vmem:[%s2113 + $0x40] sm:$0xff]
  %v2123 = vld [vmem:[%s2113 + $0x48] sm:$0xff]
  %v2124 = vld [vmem:[%s2113 + $0x50] sm:$0xff]
  %v2125 = vld [vmem:[%s2113 + $0x58] sm:$0xff]
  %v2126 = vld [vmem:[%s2113 + $0x60] sm:$0xff]
  %v2127 = vld [vmem:[%s2113 + $0x68] sm:$0xff]
  %v2128 = vld [vmem:[%s2113 + $0x70] sm:$0xff]
  %v2129 = vld [vmem:[%s2113 + $0x78] sm:$0xff]
  %v2146 = vunpack.c.l.b16 %v2114
  %v2147 = vunpack.c.h.b16 %v2114
  %v2148 = vunpack.c.l.b16 %v2115
  %v2149 = vunpack.c.h.b16 %v2115
  %v2150 = vunpack.c.l.b16 %v2116
  %v2151 = vunpack.c.h.b16 %v2116
  %v2152 = vunpack.c.l.b16 %v2117
  %v2153 = vunpack.c.h.b16 %v2117
  %v2154 = vunpack.c.l.b16 %v2118
  %v2155 = vunpack.c.h.b16 %v2118
  %v2156 = vunpack.c.l.b16 %v2119
  %v2157 = vunpack.c.h.b16 %v2119
  %v2158 = vunpack.c.l.b16 %v2120
  %v2159 = vunpack.c.h.b16 %v2120
  %v2160 = vunpack.c.l.b16 %v2121
  %v2161 = vunpack.c.h.b16 %v2121
  %v2162 = vunpack.c.l.b16 %v2122
  %v2163 = vunpack.c.h.b16 %v2122
  %v2164 = vunpack.c.l.b16 %v2123
  %v2165 = vunpack.c.h.b16 %v2123
  %v2166 = vunpack.c.l.b16 %v2124
  %v2167 = vunpack.c.h.b16 %v2124
  %v2168 = vunpack.c.l.b16 %v2125
  %v2169 = vunpack.c.h.b16 %v2125
  %v2170 = vunpack.c.l.b16 %v2126
  %v2171 = vunpack.c.h.b16 %v2126
  %v2172 = vunpack.c.l.b16 %v2127
  %v2173 = vunpack.c.h.b16 %v2127
  %v2174 = vunpack.c.l.b16 %v2128
  %v2175 = vunpack.c.h.b16 %v2128
  %v2176 = vunpack.c.l.b16 %v2129
  %v2177 = vunpack.c.h.b16 %v2129
  %v2178 = vpack.c.b16 %v2148, %v2146
  %v2179 = vpack.c.b16 %v2149, %v2147
  %v2180 = vpack.c.b16 %v2152, %v2150
  %v2181 = vpack.c.b16 %v2153, %v2151
  %v2182 = vpack.c.b16 %v2156, %v2154
  %v2183 = vpack.c.b16 %v2157, %v2155
  %v2184 = vpack.c.b16 %v2160, %v2158
  %v2185 = vpack.c.b16 %v2161, %v2159
  %v2186 = vpack.c.b16 %v2164, %v2162
  %v2187 = vpack.c.b16 %v2165, %v2163
  %v2188 = vpack.c.b16 %v2168, %v2166
  %v2189 = vpack.c.b16 %v2169, %v2167
  %v2190 = vpack.c.b16 %v2172, %v2170
  %v2191 = vpack.c.b16 %v2173, %v2171
  %v2192 = vpack.c.b16 %v2176, %v2174
  %v2193 = vpack.c.b16 %v2177, %v2175
  %2210 = vmatprep.subr.bf16.mxu0 %v2179
  %2211 = vmatpush1.bf16.msra.mxu0 %v2178
  %2212 = vmatprep.subr.bf16.mxu0 %v2181
  %2213 = vmatpush1.bf16.msra.mxu0 %v2180
  %2214 = vmatprep.subr.bf16.mxu0 %v2183
  %2215 = vmatpush1.bf16.msra.mxu0 %v2182
  %2216 = vmatprep.subr.bf16.mxu0 %v2185
  %2217 = vmatpush1.bf16.msra.mxu0 %v2184
  %2218 = vmatprep.subr.bf16.mxu0 %v2187
  %2219 = vmatpush1.bf16.msra.mxu0 %v2186
  %2220 = vmatprep.subr.bf16.mxu0 %v2189
  %2221 = vmatpush1.bf16.msra.mxu0 %v2188
  %2222 = vmatprep.subr.bf16.mxu0 %v2191
  %2223 = vmatpush1.bf16.msra.mxu0 %v2190
  %2224 = vmatprep.subr.bf16.mxu0 %v2193
  %2225 = vmatpush1.bf16.msra.mxu0 %v2192
  %2226 = vmatprep.subr.bf16.mxu0 0
  %2227 = vmatpush1.bf16.msra.mxu0 0
  %2228 = vmatprep.subr.bf16.mxu0 0
  %2229 = vmatpush1.bf16.msra.mxu0 0
  %2230 = vmatprep.subr.bf16.mxu0 0
  %2231 = vmatpush1.bf16.msra.mxu0 0
  %2232 = vmatprep.subr.bf16.mxu0 0
  %2233 = vmatpush1.bf16.msra.mxu0 0
  %2234 = vmatprep.subr.bf16.mxu0 0
  %2235 = vmatpush1.bf16.msra.mxu0 0
  %2236 = vmatprep.subr.bf16.mxu0 0
  %2237 = vmatpush1.bf16.msra.mxu0 0
  %2238 = vmatprep.subr.bf16.mxu0 0
  %2239 = vmatpush1.bf16.msra.mxu0 0
  %2240 = vmatprep.subr.bf16.mxu0 0
  %2241 = vmatpush1.bf16.msra.mxu0 0
  %2242 = vmatprep.mubr.bf16.mxu0 0
  %2243 = vmatmul.mubr.bf16.gmra.mrb[0].mxu0 %v960
  %v2244 = vpop.f32.mrb[0].mxu0
  %v2245 = vadd.f32 0.0, %v2244
  %v2246 = vpop.f32.mrb[0].mxu0
  %v2247 = vadd.f32 0.0, %v2246
  %v2248 = vpop.f32.mrb[0].mxu0
  %v2249 = vadd.f32 0.0, %v2248
  %v2250 = vpop.f32.mrb[0].mxu0
  %v2251 = vadd.f32 0.0, %v2250
  %2252 = vmatprep.mubr.bf16.mxu0 0
  %2253 = vmatmul.mubr.bf16.gmra.mrb[0].mxu0 %v961
  %v2254 = vpop.f32.mrb[0].mxu0
  %v2255 = vadd.f32 0.0, %v2254
  %v2256 = vpop.f32.mrb[0].mxu0
  %v2257 = vadd.f32 0.0, %v2256
  %v2258 = vpop.f32.mrb[0].mxu0
  %v2259 = vadd.f32 0.0, %v2258
  %v2260 = vpop.f32.mrb[0].mxu0
  %v2261 = vadd.f32 0.0, %v2260
  %2262 = vmatprep.mubr.bf16.mxu0 0
  %2263 = vmatmul.mubr.bf16.gmra.mrb[0].mxu0 %v962
  %v2264 = vpop.f32.mrb[0].mxu0
  %v2265 = vadd.f32 0.0, %v2264
  %v2266 = vpop.f32.mrb[0].mxu0
  %v2267 = vadd.f32 0.0, %v2266
  %v2268 = vpop.f32.mrb[0].mxu0
  %v2269 = vadd.f32 0.0, %v2268
  %v2270 = vpop.f32.mrb[0].mxu0
  %v2271 = vadd.f32 0.0, %v2270
  %2272 = vmatprep.mubr.bf16.mxu0 0
  %2273 = vmatmul.mubr.bf16.gmra.mrb[0].mxu0 %v963
  %v2274 = vpop.f32.mrb[0].mxu0
  %v2275 = vadd.f32 0.0, %v2274
  %v2276 = vpop.f32.mrb[0].mxu0
  %v2277 = vadd.f32 0.0, %v2276
  %v2278 = vpop.f32.mrb[0].mxu0
  %v2279 = vadd.f32 0.0, %v2278
  %v2280 = vpop.f32.mrb[0].mxu0
  %v2281 = vadd.f32 0.0, %v2280
  %2282 = vdwg.mxu0
  %v2283 = vadd.f32 %v2075, %v2245
  %v2284 = vadd.f32 %v2077, %v2247
  %v2285 = vadd.f32 %v2079, %v2249
  %v2286 = vadd.f32 %v2081, %v2251
  %v2287 = vadd.f32 %v2085, %v2255
  %v2288 = vadd.f32 %v2087, %v2257
  %v2289 = vadd.f32 %v2089, %v2259
  %v2290 = vadd.f32 %v2091, %v2261
  %v2291 = vadd.f32 %v2095, %v2265
  %v2292 = vadd.f32 %v2097, %v2267
  %v2293 = vadd.f32 %v2099, %v2269
  %v2294 = vadd.f32 %v2101, %v2271
  %v2295 = vadd.f32 %v2105, %v2275
  %v2296 = vadd.f32 %v2107, %v2277
  %v2297 = vadd.f32 %v2109, %v2279
  %v2298 = vadd.f32 %v2111, %v2281
  %s2299 = scalar_lea.vmem %s3, 384
  %v2300 = vld [vmem:[%s2299] sm:$0xff]
  %v2301 = vld [vmem:[%s2299 + $0x8] sm:$0xff]
  %v2302 = vld [vmem:[%s2299 + $0x10] sm:$0xff]
  %v2303 = vld [vmem:[%s2299 + $0x18] sm:$0xff]
  %v2304 = vld [vmem:[%s2299 + $0x20] sm:$0xff]
  %v2305 = vld [vmem:[%s2299 + $0x28] sm:$0xff]
  %v2306 = vld [vmem:[%s2299 + $0x30] sm:$0xff]
  %v2307 = vld [vmem:[%s2299 + $0x38] sm:$0xff]
  %v2308 = vld [vmem:[%s2299 + $0x40] sm:$0xff]
  %v2309 = vld [vmem:[%s2299 + $0x48] sm:$0xff]
  %v2310 = vld [vmem:[%s2299 + $0x50] sm:$0xff]
  %v2311 = vld [vmem:[%s2299 + $0x58] sm:$0xff]
  %v2312 = vld [vmem:[%s2299 + $0x60] sm:$0xff]
  %v2313 = vld [vmem:[%s2299 + $0x68] sm:$0xff]
  %v2314 = vld [vmem:[%s2299 + $0x70] sm:$0xff]
  %v2315 = vld [vmem:[%s2299 + $0x78] sm:$0xff]
  %v2332 = vunpack.c.l.b16 %v2300
  %v2333 = vunpack.c.h.b16 %v2300
  %v2334 = vunpack.c.l.b16 %v2301
  %v2335 = vunpack.c.h.b16 %v2301
  %v2336 = vunpack.c.l.b16 %v2302
  %v2337 = vunpack.c.h.b16 %v2302
  %v2338 = vunpack.c.l.b16 %v2303
  %v2339 = vunpack.c.h.b16 %v2303
  %v2340 = vunpack.c.l.b16 %v2304
  %v2341 = vunpack.c.h.b16 %v2304
  %v2342 = vunpack.c.l.b16 %v2305
  %v2343 = vunpack.c.h.b16 %v2305
  %v2344 = vunpack.c.l.b16 %v2306
  %v2345 = vunpack.c.h.b16 %v2306
  %v2346 = vunpack.c.l.b16 %v2307
  %v2347 = vunpack.c.h.b16 %v2307
  %v2348 = vunpack.c.l.b16 %v2308
  %v2349 = vunpack.c.h.b16 %v2308
  %v2350 = vunpack.c.l.b16 %v2309
  %v2351 = vunpack.c.h.b16 %v2309
  %v2352 = vunpack.c.l.b16 %v2310
  %v2353 = vunpack.c.h.b16 %v2310
  %v2354 = vunpack.c.l.b16 %v2311
  %v2355 = vunpack.c.h.b16 %v2311
  %v2356 = vunpack.c.l.b16 %v2312
  %v2357 = vunpack.c.h.b16 %v2312
  %v2358 = vunpack.c.l.b16 %v2313
  %v2359 = vunpack.c.h.b16 %v2313
  %v2360 = vunpack.c.l.b16 %v2314
  %v2361 = vunpack.c.h.b16 %v2314
  %v2362 = vunpack.c.l.b16 %v2315
  %v2363 = vunpack.c.h.b16 %v2315
  %v2364 = vpack.c.b16 %v2334, %v2332
  %v2365 = vpack.c.b16 %v2335, %v2333
  %v2366 = vpack.c.b16 %v2338, %v2336
  %v2367 = vpack.c.b16 %v2339, %v2337
  %v2368 = vpack.c.b16 %v2342, %v2340
  %v2369 = vpack.c.b16 %v2343, %v2341
  %v2370 = vpack.c.b16 %v2346, %v2344
  %v2371 = vpack.c.b16 %v2347, %v2345
  %v2372 = vpack.c.b16 %v2350, %v2348
  %v2373 = vpack.c.b16 %v2351, %v2349
  %v2374 = vpack.c.b16 %v2354, %v2352
  %v2375 = vpack.c.b16 %v2355, %v2353
  %v2376 = vpack.c.b16 %v2358, %v2356
  %v2377 = vpack.c.b16 %v2359, %v2357
  %v2378 = vpack.c.b16 %v2362, %v2360
  %v2379 = vpack.c.b16 %v2363, %v2361
  %2396 = vmatprep.subr.bf16.mxu0 %v2365
  %2397 = vmatpush1.bf16.msra.mxu0 %v2364
  %2398 = vmatprep.subr.bf16.mxu0 %v2367
  %2399 = vmatpush1.bf16.msra.mxu0 %v2366
  %2400 = vmatprep.subr.bf16.mxu0 %v2369
  %2401 = vmatpush1.bf16.msra.mxu0 %v2368
  %2402 = vmatprep.subr.bf16.mxu0 %v2371
  %2403 = vmatpush1.bf16.msra.mxu0 %v2370
  %2404 = vmatprep.subr.bf16.mxu0 %v2373
  %2405 = vmatpush1.bf16.msra.mxu0 %v2372
  %2406 = vmatprep.subr.bf16.mxu0 %v2375
  %2407 = vmatpush1.bf16.msra.mxu0 %v2374
  %2408 = vmatprep.subr.bf16.mxu0 %v2377
  %2409 = vmatpush1.bf16.msra.mxu0 %v2376
  %2410 = vmatprep.subr.bf16.mxu0 %v2379
  %2411 = vmatpush1.bf16.msra.mxu0 %v2378
  %2412 = vmatprep.subr.bf16.mxu0 0
  %2413 = vmatpush1.bf16.msra.mxu0 0
  %2414 = vmatprep.subr.bf16.mxu0 0
  %2415 = vmatpush1.bf16.msra.mxu0 0
  %2416 = vmatprep.subr.bf16.mxu0 0
  %2417 = vmatpush1.bf16.msra.mxu0 0
  %2418 = vmatprep.subr.bf16.mxu0 0
  %2419 = vmatpush1.bf16.msra.mxu0 0
  %2420 = vmatprep.subr.bf16.mxu0 0
  %2421 = vmatpush1.bf16.msra.mxu0 0
  %2422 = vmatprep.subr.bf16.mxu0 0
  %2423 = vmatpush1.bf16.msra.mxu0 0
  %2424 = vmatprep.subr.bf16.mxu0 0
  %2425 = vmatpush1.bf16.msra.mxu0 0
  %2426 = vmatprep.subr.bf16.mxu0 0
  %2427 = vmatpush1.bf16.msra.mxu0 0
  %2428 = vmatprep.mubr.bf16.mxu0 0
  %2429 = vmatmul.mubr.bf16.gmra.mrb[0].mxu0 %v1230
  %v2430 = vpop.f32.mrb[0].mxu0
  %v2431 = vadd.f32 0.0, %v2430
  %v2432 = vpop.f32.mrb[0].mxu0
  %v2433 = vadd.f32 0.0, %v2432
  %v2434 = vpop.f32.mrb[0].mxu0
  %v2435 = vadd.f32 0.0, %v2434
  %v2436 = vpop.f32.mrb[0].mxu0
  %v2437 = vadd.f32 0.0, %v2436
  %2438 = vmatprep.mubr.bf16.mxu0 0
  %2439 = vmatmul.mubr.bf16.gmra.mrb[0].mxu0 %v1231
  %v2440 = vpop.f32.mrb[0].mxu0
  %v2441 = vadd.f32 0.0, %v2440
  %v2442 = vpop.f32.mrb[0].mxu0
  %v2443 = vadd.f32 0.0, %v2442
  %v2444 = vpop.f32.mrb[0].mxu0
  %v2445 = vadd.f32 0.0, %v2444
  %v2446 = vpop.f32.mrb[0].mxu0
  %v2447 = vadd.f32 0.0, %v2446
  %2448 = vmatprep.mubr.bf16.mxu0 0
  %2449 = vmatmul.mubr.bf16.gmra.mrb[0].mxu0 %v1232
  %v2450 = vpop.f32.mrb[0].mxu0
  %v2451 = vadd.f32 0.0, %v2450
  %v2452 = vpop.f32.mrb[0].mxu0
  %v2453 = vadd.f32 0.0, %v2452
  %v2454 = vpop.f32.mrb[0].mxu0
  %v2455 = vadd.f32 0.0, %v2454
  %v2456 = vpop.f32.mrb[0].mxu0
  %v2457 = vadd.f32 0.0, %v2456
  %2458 = vmatprep.mubr.bf16.mxu0 0
  %2459 = vmatmul.mubr.bf16.gmra.mrb[0].mxu0 %v1233
  %v2460 = vpop.f32.mrb[0].mxu0
  %v2461 = vadd.f32 0.0, %v2460
  %v2462 = vpop.f32.mrb[0].mxu0
  %v2463 = vadd.f32 0.0, %v2462
  %v2464 = vpop.f32.mrb[0].mxu0
  %v2465 = vadd.f32 0.0, %v2464
  %v2466 = vpop.f32.mrb[0].mxu0
  %v2467 = vadd.f32 0.0, %v2466
  %2468 = vdwg.mxu0
  %v2469 = vadd.f32 %v2283, %v2431
  %v2470 = vadd.f32 %v2284, %v2433
  %v2471 = vadd.f32 %v2285, %v2435
  %v2472 = vadd.f32 %v2286, %v2437
  %v2473 = vadd.f32 %v2287, %v2441
  %v2474 = vadd.f32 %v2288, %v2443
  %v2475 = vadd.f32 %v2289, %v2445
  %v2476 = vadd.f32 %v2290, %v2447
  %v2477 = vadd.f32 %v2291, %v2451
  %v2478 = vadd.f32 %v2292, %v2453
  %v2479 = vadd.f32 %v2293, %v2455
  %v2480 = vadd.f32 %v2294, %v2457
  %v2481 = vadd.f32 %v2295, %v2461
  %v2482 = vadd.f32 %v2296, %v2463
  %v2483 = vadd.f32 %v2297, %v2465
  %v2484 = vadd.f32 %v2298, %v2467
  %s2485 = scalar_lea.vmem %s3, 512
  %v2486 = vld [vmem:[%s2485] sm:$0xff]
  %v2487 = vld [vmem:[%s2485 + $0x8] sm:$0xff]
  %v2488 = vld [vmem:[%s2485 + $0x10] sm:$0xff]
  %v2489 = vld [vmem:[%s2485 + $0x18] sm:$0xff]
  %v2490 = vld [vmem:[%s2485 + $0x20] sm:$0xff]
  %v2491 = vld [vmem:[%s2485 + $0x28] sm:$0xff]
  %v2492 = vld [vmem:[%s2485 + $0x30] sm:$0xff]
  %v2493 = vld [vmem:[%s2485 + $0x38] sm:$0xff]
  %v2494 = vld [vmem:[%s2485 + $0x40] sm:$0xff]
  %v2495 = vld [vmem:[%s2485 + $0x48] sm:$0xff]
  %v2496 = vld [vmem:[%s2485 + $0x50] sm:$0xff]
  %v2497 = vld [vmem:[%s2485 + $0x58] sm:$0xff]
  %v2498 = vld [vmem:[%s2485 + $0x60] sm:$0xff]
  %v2499 = vld [vmem:[%s2485 + $0x68] sm:$0xff]
  %v2500 = vld [vmem:[%s2485 + $0x70] sm:$0xff]
  %v2501 = vld [vmem:[%s2485 + $0x78] sm:$0xff]
  %v2518 = vunpack.c.l.b16 %v2486
  %v2519 = vunpack.c.h.b16 %v2486
  %v2520 = vunpack.c.l.b16 %v2487
  %v2521 = vunpack.c.h.b16 %v2487
  %v2522 = vunpack.c.l.b16 %v2488
  %v2523 = vunpack.c.h.b16 %v2488
  %v2524 = vunpack.c.l.b16 %v2489
  %v2525 = vunpack.c.h.b16 %v2489
  %v2526 = vunpack.c.l.b16 %v2490
  %v2527 = vunpack.c.h.b16 %v2490
  %v2528 = vunpack.c.l.b16 %v2491
  %v2529 = vunpack.c.h.b16 %v2491
  %v2530 = vunpack.c.l.b16 %v2492
  %v2531 = vunpack.c.h.b16 %v2492
  %v2532 = vunpack.c.l.b16 %v2493
  %v2533 = vunpack.c.h.b16 %v2493
  %v2534 = vunpack.c.l.b16 %v2494
  %v2535 = vunpack.c.h.b16 %v2494
  %v2536 = vunpack.c.l.b16 %v2495
  %v2537 = vunpack.c.h.b16 %v2495
  %v2538 = vunpack.c.l.b16 %v2496
  %v2539 = vunpack.c.h.b16 %v2496
  %v2540 = vunpack.c.l.b16 %v2497
  %v2541 = vunpack.c.h.b16 %v2497
  %v2542 = vunpack.c.l.b16 %v2498
  %v2543 = vunpack.c.h.b16 %v2498
  %v2544 = vunpack.c.l.b16 %v2499
  %v2545 = vunpack.c.h.b16 %v2499
  %v2546 = vunpack.c.l.b16 %v2500
  %v2547 = vunpack.c.h.b16 %v2500
  %v2548 = vunpack.c.l.b16 %v2501
  %v2549 = vunpack.c.h.b16 %v2501
  %v2550 = vpack.c.b16 %v2520, %v2518
  %v2551 = vpack.c.b16 %v2521, %v2519
  %v2552 = vpack.c.b16 %v2524, %v2522
  %v2553 = vpack.c.b16 %v2525, %v2523
  %v2554 = vpack.c.b16 %v2528, %v2526
  %v2555 = vpack.c.b16 %v2529, %v2527
  %v2556 = vpack.c.b16 %v2532, %v2530
  %v2557 = vpack.c.b16 %v2533, %v2531
  %v2558 = vpack.c.b16 %v2536, %v2534
  %v2559 = vpack.c.b16 %v2537, %v2535
  %v2560 = vpack.c.b16 %v2540, %v2538
  %v2561 = vpack.c.b16 %v2541, %v2539
  %v2562 = vpack.c.b16 %v2544, %v2542
  %v2563 = vpack.c.b16 %v2545, %v2543
  %v2564 = vpack.c.b16 %v2548, %v2546
  %v2565 = vpack.c.b16 %v2549, %v2547
  %2582 = vmatprep.subr.bf16.mxu0 %v2551
  %2583 = vmatpush1.bf16.msra.mxu0 %v2550
  %2584 = vmatprep.subr.bf16.mxu0 %v2553
  %2585 = vmatpush1.bf16.msra.mxu0 %v2552
  %2586 = vmatprep.subr.bf16.mxu0 %v2555
  %2587 = vmatpush1.bf16.msra.mxu0 %v2554
  %2588 = vmatprep.subr.bf16.mxu0 %v2557
  %2589 = vmatpush1.bf16.msra.mxu0 %v2556
  %2590 = vmatprep.subr.bf16.mxu0 %v2559
  %2591 = vmatpush1.bf16.msra.mxu0 %v2558
  %2592 = vmatprep.subr.bf16.mxu0 %v2561
  %2593 = vmatpush1.bf16.msra.mxu0 %v2560
  %2594 = vmatprep.subr.bf16.mxu0 %v2563
  %2595 = vmatpush1.bf16.msra.mxu0 %v2562
  %2596 = vmatprep.subr.bf16.mxu0 %v2565
  %2597 = vmatpush1.bf16.msra.mxu0 %v2564
  %2598 = vmatprep.subr.bf16.mxu0 0
  %2599 = vmatpush1.bf16.msra.mxu0 0
  %2600 = vmatprep.subr.bf16.mxu0 0
  %2601 = vmatpush1.bf16.msra.mxu0 0
  %2602 = vmatprep.subr.bf16.mxu0 0
  %2603 = vmatpush1.bf16.msra.mxu0 0
  %2604 = vmatprep.subr.bf16.mxu0 0
  %2605 = vmatpush1.bf16.msra.mxu0 0
  %2606 = vmatprep.subr.bf16.mxu0 0
  %2607 = vmatpush1.bf16.msra.mxu0 0
  %2608 = vmatprep.subr.bf16.mxu0 0
  %2609 = vmatpush1.bf16.msra.mxu0 0
  %2610 = vmatprep.subr.bf16.mxu0 0
  %2611 = vmatpush1.bf16.msra.mxu0 0
  %2612 = vmatprep.subr.bf16.mxu0 0
  %2613 = vmatpush1.bf16.msra.mxu0 0
  %2614 = vmatprep.mubr.bf16.mxu0 0
  %2615 = vmatmul.mubr.bf16.gmra.mrb[0].mxu0 %v1500
  %v2616 = vpop.f32.mrb[0].mxu0
  %v2617 = vadd.f32 0.0, %v2616
  %v2618 = vpop.f32.mrb[0].mxu0
  %v2619 = vadd.f32 0.0, %v2618
  %v2620 = vpop.f32.mrb[0].mxu0
  %v2621 = vadd.f32 0.0, %v2620
  %v2622 = vpop.f32.mrb[0].mxu0
  %v2623 = vadd.f32 0.0, %v2622
  %2624 = vmatprep.mubr.bf16.mxu0 0
  %2625 = vmatmul.mubr.bf16.gmra.mrb[0].mxu0 %v1501
  %v2626 = vpop.f32.mrb[0].mxu0
  %v2627 = vadd.f32 0.0, %v2626
  %v2628 = vpop.f32.mrb[0].mxu0
  %v2629 = vadd.f32 0.0, %v2628
  %v2630 = vpop.f32.mrb[0].mxu0
  %v2631 = vadd.f32 0.0, %v2630
  %v2632 = vpop.f32.mrb[0].mxu0
  %v2633 = vadd.f32 0.0, %v2632
  %2634 = vmatprep.mubr.bf16.mxu0 0
  %2635 = vmatmul.mubr.bf16.gmra.mrb[0].mxu0 %v1502
  %v2636 = vpop.f32.mrb[0].mxu0
  %v2637 = vadd.f32 0.0, %v2636
  %v2638 = vpop.f32.mrb[0].mxu0
  %v2639 = vadd.f32 0.0, %v2638
  %v2640 = vpop.f32.mrb[0].mxu0
  %v2641 = vadd.f32 0.0, %v2640
  %v2642 = vpop.f32.mrb[0].mxu0
  %v2643 = vadd.f32 0.0, %v2642
  %2644 = vmatprep.mubr.bf16.mxu0 0
  %2645 = vmatmul.mubr.bf16.gmra.mrb[0].mxu0 %v1503
  %v2646 = vpop.f32.mrb[0].mxu0
  %v2647 = vadd.f32 0.0, %v2646
  %v2648 = vpop.f32.mrb[0].mxu0
  %v2649 = vadd.f32 0.0, %v2648
  %v2650 = vpop.f32.mrb[0].mxu0
  %v2651 = vadd.f32 0.0, %v2650
  %v2652 = vpop.f32.mrb[0].mxu0
  %v2653 = vadd.f32 0.0, %v2652
  %2654 = vdwg.mxu0
  %v2655 = vadd.f32 %v2469, %v2617
  %v2656 = vadd.f32 %v2470, %v2619
  %v2657 = vadd.f32 %v2471, %v2621
  %v2658 = vadd.f32 %v2472, %v2623
  %v2659 = vadd.f32 %v2473, %v2627
  %v2660 = vadd.f32 %v2474, %v2629
  %v2661 = vadd.f32 %v2475, %v2631
  %v2662 = vadd.f32 %v2476, %v2633
  %v2663 = vadd.f32 %v2477, %v2637
  %v2664 = vadd.f32 %v2478, %v2639
  %v2665 = vadd.f32 %v2479, %v2641
  %v2666 = vadd.f32 %v2480, %v2643
  %v2667 = vadd.f32 %v2481, %v2647
  %v2668 = vadd.f32 %v2482, %v2649
  %v2669 = vadd.f32 %v2483, %v2651
  %v2670 = vadd.f32 %v2484, %v2653
  %2671 = vmatprep.subr.bf16.mxu0 %v1856
  %2672 = vmatpush1.bf16.msra.mxu0 %v1855
  %2673 = vmatprep.subr.bf16.mxu0 %v1858
  %2674 = vmatpush1.bf16.msra.mxu0 %v1857
  %2675 = vmatprep.subr.bf16.mxu0 %v1860
  %2676 = vmatpush1.bf16.msra.mxu0 %v1859
  %2677 = vmatprep.subr.bf16.mxu0 %v1862
  %2678 = vmatpush1.bf16.msra.mxu0 %v1861
  %2679 = vmatprep.subr.bf16.mxu0 %v1864
  %2680 = vmatpush1.bf16.msra.mxu0 %v1863
  %2681 = vmatprep.subr.bf16.mxu0 %v1866
  %2682 = vmatpush1.bf16.msra.mxu0 %v1865
  %2683 = vmatprep.subr.bf16.mxu0 %v1868
  %2684 = vmatpush1.bf16.msra.mxu0 %v1867
  %2685 = vmatprep.subr.bf16.mxu0 %v1870
  %2686 = vmatpush1.bf16.msra.mxu0 %v1869
  %2687 = vmatprep.subr.bf16.mxu0 0
  %2688 = vmatpush1.bf16.msra.mxu0 0
  %2689 = vmatprep.subr.bf16.mxu0 0
  %2690 = vmatpush1.bf16.msra.mxu0 0
  %2691 = vmatprep.subr.bf16.mxu0 0
  %2692 = vmatpush1.bf16.msra.mxu0 0
  %2693 = vmatprep.subr.bf16.mxu0 0
  %2694 = vmatpush1.bf16.msra.mxu0 0
  %2695 = vmatprep.subr.bf16.mxu0 0
  %2696 = vmatpush1.bf16.msra.mxu0 0
  %2697 = vmatprep.subr.bf16.mxu0 0
  %2698 = vmatpush1.bf16.msra.mxu0 0
  %2699 = vmatprep.subr.bf16.mxu0 0
  %2700 = vmatpush1.bf16.msra.mxu0 0
  %2701 = vmatprep.subr.bf16.mxu0 0
  %2702 = vmatpush1.bf16.msra.mxu0 0
  %2703 = vmatprep.mubr.bf16.mxu0 0
  %2704 = vmatmul.mubr.bf16.gmra.mrb[0].mxu0 %v960
  %v2705 = vpop.f32.mrb[0].mxu0
  %v2706 = vadd.f32 0.0, %v2705
  %v2707 = vpop.f32.mrb[0].mxu0
  %v2708 = vadd.f32 0.0, %v2707
  %v2709 = vpop.f32.mrb[0].mxu0
  %v2710 = vadd.f32 0.0, %v2709
  %v2711 = vpop.f32.mrb[0].mxu0
  %v2712 = vadd.f32 0.0, %v2711
  %2713 = vmatprep.mubr.bf16.mxu0 0
  %2714 = vmatmul.mubr.bf16.gmra.mrb[0].mxu0 %v961
  %v2715 = vpop.f32.mrb[0].mxu0
  %v2716 = vadd.f32 0.0, %v2715
  %v2717 = vpop.f32.mrb[0].mxu0
  %v2718 = vadd.f32 0.0, %v2717
  %v2719 = vpop.f32.mrb[0].mxu0
  %v2720 = vadd.f32 0.0, %v2719
  %v2721 = vpop.f32.mrb[0].mxu0
  %v2722 = vadd.f32 0.0, %v2721
  %2723 = vmatprep.mubr.bf16.mxu0 0
  %2724 = vmatmul.mubr.bf16.gmra.mrb[0].mxu0 %v962
  %v2725 = vpop.f32.mrb[0].mxu0
  %v2726 = vadd.f32 0.0, %v2725
  %v2727 = vpop.f32.mrb[0].mxu0
  %v2728 = vadd.f32 0.0, %v2727
  %v2729 = vpop.f32.mrb[0].mxu0
  %v2730 = vadd.f32 0.0, %v2729
  %v2731 = vpop.f32.mrb[0].mxu0
  %v2732 = vadd.f32 0.0, %v2731
  %2733 = vmatprep.mubr.bf16.mxu0 0
  %2734 = vmatmul.mubr.bf16.gmra.mrb[0].mxu0 %v963
  %v2735 = vpop.f32.mrb[0].mxu0
  %v2736 = vadd.f32 0.0, %v2735
  %v2737 = vpop.f32.mrb[0].mxu0
  %v2738 = vadd.f32 0.0, %v2737
  %v2739 = vpop.f32.mrb[0].mxu0
  %v2740 = vadd.f32 0.0, %v2739
  %v2741 = vpop.f32.mrb[0].mxu0
  %v2742 = vadd.f32 0.0, %v2741
  %2743 = vdwg.mxu0
  %2744 = vmatprep.subr.bf16.mxu0 %v2009
  %2745 = vmatpush1.bf16.msra.mxu0 %v2008
  %2746 = vmatprep.subr.bf16.mxu0 %v2011
  %2747 = vmatpush1.bf16.msra.mxu0 %v2010
  %2748 = vmatprep.subr.bf16.mxu0 %v2013
  %2749 = vmatpush1.bf16.msra.mxu0 %v2012
  %2750 = vmatprep.subr.bf16.mxu0 %v2015
  %2751 = vmatpush1.bf16.msra.mxu0 %v2014
  %2752 = vmatprep.subr.bf16.mxu0 %v2017
  %2753 = vmatpush1.bf16.msra.mxu0 %v2016
  %2754 = vmatprep.subr.bf16.mxu0 %v2019
  %2755 = vmatpush1.bf16.msra.mxu0 %v2018
  %2756 = vmatprep.subr.bf16.mxu0 %v2021
  %2757 = vmatpush1.bf16.msra.mxu0 %v2020
  %2758 = vmatprep.subr.bf16.mxu0 %v2023
  %2759 = vmatpush1.bf16.msra.mxu0 %v2022
  %2760 = vmatprep.subr.bf16.mxu0 0
  %2761 = vmatpush1.bf16.msra.mxu0 0
  %2762 = vmatprep.subr.bf16.mxu0 0
  %2763 = vmatpush1.bf16.msra.mxu0 0
  %2764 = vmatprep.subr.bf16.mxu0 0
  %2765 = vmatpush1.bf16.msra.mxu0 0
  %2766 = vmatprep.subr.bf16.mxu0 0
  %2767 = vmatpush1.bf16.msra.mxu0 0
  %2768 = vmatprep.subr.bf16.mxu0 0
  %2769 = vmatpush1.bf16.msra.mxu0 0
  %2770 = vmatprep.subr.bf16.mxu0 0
  %2771 = vmatpush1.bf16.msra.mxu0 0
  %2772 = vmatprep.subr.bf16.mxu0 0
  %2773 = vmatpush1.bf16.msra.mxu0 0
  %2774 = vmatprep.subr.bf16.mxu0 0
  %2775 = vmatpush1.bf16.msra.mxu0 0
  %2776 = vmatprep.mubr.bf16.mxu0 0
  %2777 = vmatmul.mubr.bf16.gmra.mrb[0].mxu0 %v690
  %v2778 = vpop.f32.mrb[0].mxu0
  %v2779 = vadd.f32 %v2706, %v2778
  %v2780 = vpop.f32.mrb[0].mxu0
  %v2781 = vadd.f32 %v2708, %v2780
  %v2782 = vpop.f32.mrb[0].mxu0
  %v2783 = vadd.f32 %v2710, %v2782
  %v2784 = vpop.f32.mrb[0].mxu0
  %v2785 = vadd.f32 %v2712, %v2784
  %2786 = vmatprep.mubr.bf16.mxu0 0
  %2787 = vmatmul.mubr.bf16.gmra.mrb[0].mxu0 %v691
  %v2788 = vpop.f32.mrb[0].mxu0
  %v2789 = vadd.f32 %v2716, %v2788
  %v2790 = vpop.f32.mrb[0].mxu0
  %v2791 = vadd.f32 %v2718, %v2790
  %v2792 = vpop.f32.mrb[0].mxu0
  %v2793 = vadd.f32 %v2720, %v2792
  %v2794 = vpop.f32.mrb[0].mxu0
  %v2795 = vadd.f32 %v2722, %v2794
  %2796 = vmatprep.mubr.bf16.mxu0 0
  %2797 = vmatmul.mubr.bf16.gmra.mrb[0].mxu0 %v692
  %v2798 = vpop.f32.mrb[0].mxu0
  %v2799 = vadd.f32 %v2726, %v2798
  %v2800 = vpop.f32.mrb[0].mxu0
  %v2801 = vadd.f32 %v2728, %v2800
  %v2802 = vpop.f32.mrb[0].mxu0
  %v2803 = vadd.f32 %v2730, %v2802
  %v2804 = vpop.f32.mrb[0].mxu0
  %v2805 = vadd.f32 %v2732, %v2804
  %2806 = vmatprep.mubr.bf16.mxu0 0
  %2807 = vmatmul.mubr.bf16.gmra.mrb[0].mxu0 %v693
  %v2808 = vpop.f32.mrb[0].mxu0
  %v2809 = vadd.f32 %v2736, %v2808
  %v2810 = vpop.f32.mrb[0].mxu0
  %v2811 = vadd.f32 %v2738, %v2810
  %v2812 = vpop.f32.mrb[0].mxu0
  %v2813 = vadd.f32 %v2740, %v2812
  %v2814 = vpop.f32.mrb[0].mxu0
  %v2815 = vadd.f32 %v2742, %v2814
  %2816 = vdwg.mxu0
  %2817 = vmatprep.subr.bf16.mxu0 %v2179
  %2818 = vmatpush1.bf16.msra.mxu0 %v2178
  %2819 = vmatprep.subr.bf16.mxu0 %v2181
  %2820 = vmatpush1.bf16.msra.mxu0 %v2180
  %2821 = vmatprep.subr.bf16.mxu0 %v2183
  %2822 = vmatpush1.bf16.msra.mxu0 %v2182
  %2823 = vmatprep.subr.bf16.mxu0 %v2185
  %2824 = vmatpush1.bf16.msra.mxu0 %v2184
  %2825 = vmatprep.subr.bf16.mxu0 %v2187
  %2826 = vmatpush1.bf16.msra.mxu0 %v2186
  %2827 = vmatprep.subr.bf16.mxu0 %v2189
  %2828 = vmatpush1.bf16.msra.mxu0 %v2188
  %2829 = vmatprep.subr.bf16.mxu0 %v2191
  %2830 = vmatpush1.bf16.msra.mxu0 %v2190
  %2831 = vmatprep.subr.bf16.mxu0 %v2193
  %2832 = vmatpush1.bf16.msra.mxu0 %v2192
  %2833 = vmatprep.subr.bf16.mxu0 0
  %2834 = vmatpush1.bf16.msra.mxu0 0
  %2835 = vmatprep.subr.bf16.mxu0 0
  %2836 = vmatpush1.bf16.msra.mxu0 0
  %2837 = vmatprep.subr.bf16.mxu0 0
  %2838 = vmatpush1.bf16.msra.mxu0 0
  %2839 = vmatprep.subr.bf16.mxu0 0
  %2840 = vmatpush1.bf16.msra.mxu0 0
  %2841 = vmatprep.subr.bf16.mxu0 0
  %2842 = vmatpush1.bf16.msra.mxu0 0
  %2843 = vmatprep.subr.bf16.mxu0 0
  %2844 = vmatpush1.bf16.msra.mxu0 0
  %2845 = vmatprep.subr.bf16.mxu0 0
  %2846 = vmatpush1.bf16.msra.mxu0 0
  %2847 = vmatprep.subr.bf16.mxu0 0
  %2848 = vmatpush1.bf16.msra.mxu0 0
  %2849 = vmatprep.mubr.bf16.mxu0 0
  %2850 = vmatmul.mubr.bf16.gmra.mrb[0].mxu0 %v1230
  %v2851 = vpop.f32.mrb[0].mxu0
  %v2852 = vadd.f32 0.0, %v2851
  %v2853 = vpop.f32.mrb[0].mxu0
  %v2854 = vadd.f32 0.0, %v2853
  %v2855 = vpop.f32.mrb[0].mxu0
  %v2856 = vadd.f32 0.0, %v2855
  %v2857 = vpop.f32.mrb[0].mxu0
  %v2858 = vadd.f32 0.0, %v2857
  %2859 = vmatprep.mubr.bf16.mxu0 0
  %2860 = vmatmul.mubr.bf16.gmra.mrb[0].mxu0 %v1231
  %v2861 = vpop.f32.mrb[0].mxu0
  %v2862 = vadd.f32 0.0, %v2861
  %v2863 = vpop.f32.mrb[0].mxu0
  %v2864 = vadd.f32 0.0, %v2863
  %v2865 = vpop.f32.mrb[0].mxu0
  %v2866 = vadd.f32 0.0, %v2865
  %v2867 = vpop.f32.mrb[0].mxu0
  %v2868 = vadd.f32 0.0, %v2867
  %2869 = vmatprep.mubr.bf16.mxu0 0
  %2870 = vmatmul.mubr.bf16.gmra.mrb[0].mxu0 %v1232
  %v2871 = vpop.f32.mrb[0].mxu0
  %v2872 = vadd.f32 0.0, %v2871
  %v2873 = vpop.f32.mrb[0].mxu0
  %v2874 = vadd.f32 0.0, %v2873
  %v2875 = vpop.f32.mrb[0].mxu0
  %v2876 = vadd.f32 0.0, %v2875
  %v2877 = vpop.f32.mrb[0].mxu0
  %v2878 = vadd.f32 0.0, %v2877
  %2879 = vmatprep.mubr.bf16.mxu0 0
  %2880 = vmatmul.mubr.bf16.gmra.mrb[0].mxu0 %v1233
  %v2881 = vpop.f32.mrb[0].mxu0
  %v2882 = vadd.f32 0.0, %v2881
  %v2883 = vpop.f32.mrb[0].mxu0
  %v2884 = vadd.f32 0.0, %v2883
  %v2885 = vpop.f32.mrb[0].mxu0
  %v2886 = vadd.f32 0.0, %v2885
  %v2887 = vpop.f32.mrb[0].mxu0
  %v2888 = vadd.f32 0.0, %v2887
  %2889 = vdwg.mxu0
  %v2890 = vadd.f32 %v2779, %v2852
  %v2891 = vadd.f32 %v2781, %v2854
  %v2892 = vadd.f32 %v2783, %v2856
  %v2893 = vadd.f32 %v2785, %v2858
  %v2894 = vadd.f32 %v2789, %v2862
  %v2895 = vadd.f32 %v2791, %v2864
  %v2896 = vadd.f32 %v2793, %v2866
  %v2897 = vadd.f32 %v2795, %v2868
  %v2898 = vadd.f32 %v2799, %v2872
  %v2899 = vadd.f32 %v2801, %v2874
  %v2900 = vadd.f32 %v2803, %v2876
  %v2901 = vadd.f32 %v2805, %v2878
  %v2902 = vadd.f32 %v2809, %v2882
  %v2903 = vadd.f32 %v2811, %v2884
  %v2904 = vadd.f32 %v2813, %v2886
  %v2905 = vadd.f32 %v2815, %v2888
  %2906 = vmatprep.subr.bf16.mxu0 %v2365
  %2907 = vmatpush1.bf16.msra.mxu0 %v2364
  %2908 = vmatprep.subr.bf16.mxu0 %v2367
  %2909 = vmatpush1.bf16.msra.mxu0 %v2366
  %2910 = vmatprep.subr.bf16.mxu0 %v2369
  %2911 = vmatpush1.bf16.msra.mxu0 %v2368
  %2912 = vmatprep.subr.bf16.mxu0 %v2371
  %2913 = vmatpush1.bf16.msra.mxu0 %v2370
  %2914 = vmatprep.subr.bf16.mxu0 %v2373
  %2915 = vmatpush1.bf16.msra.mxu0 %v2372
  %2916 = vmatprep.subr.bf16.mxu0 %v2375
  %2917 = vmatpush1.bf16.msra.mxu0 %v2374
  %2918 = vmatprep.subr.bf16.mxu0 %v2377
  %2919 = vmatpush1.bf16.msra.mxu0 %v2376
  %2920 = vmatprep.subr.bf16.mxu0 %v2379
  %2921 = vmatpush1.bf16.msra.mxu0 %v2378
  %2922 = vmatprep.subr.bf16.mxu0 0
  %2923 = vmatpush1.bf16.msra.mxu0 0
  %2924 = vmatprep.subr.bf16.mxu0 0
  %2925 = vmatpush1.bf16.msra.mxu0 0
  %2926 = vmatprep.subr.bf16.mxu0 0
  %2927 = vmatpush1.bf16.msra.mxu0 0
  %2928 = vmatprep.subr.bf16.mxu0 0
  %2929 = vmatpush1.bf16.msra.mxu0 0
  %2930 = vmatprep.subr.bf16.mxu0 0
  %2931 = vmatpush1.bf16.msra.mxu0 0
  %2932 = vmatprep.subr.bf16.mxu0 0
  %2933 = vmatpush1.bf16.msra.mxu0 0
  %2934 = vmatprep.subr.bf16.mxu0 0
  %2935 = vmatpush1.bf16.msra.mxu0 0
  %2936 = vmatprep.subr.bf16.mxu0 0
  %2937 = vmatpush1.bf16.msra.mxu0 0
  %2938 = vmatprep.mubr.bf16.mxu0 0
  %2939 = vmatmul.mubr.bf16.gmra.mrb[0].mxu0 %v1500
  %v2940 = vpop.f32.mrb[0].mxu0
  %v2941 = vadd.f32 0.0, %v2940
  %v2942 = vpop.f32.mrb[0].mxu0
  %v2943 = vadd.f32 0.0, %v2942
  %v2944 = vpop.f32.mrb[0].mxu0
  %v2945 = vadd.f32 0.0, %v2944
  %v2946 = vpop.f32.mrb[0].mxu0
  %v2947 = vadd.f32 0.0, %v2946
  %2948 = vmatprep.mubr.bf16.mxu0 0
  %2949 = vmatmul.mubr.bf16.gmra.mrb[0].mxu0 %v1501
  %v2950 = vpop.f32.mrb[0].mxu0
  %v2951 = vadd.f32 0.0, %v2950
  %v2952 = vpop.f32.mrb[0].mxu0
  %v2953 = vadd.f32 0.0, %v2952
  %v2954 = vpop.f32.mrb[0].mxu0
  %v2955 = vadd.f32 0.0, %v2954
  %v2956 = vpop.f32.mrb[0].mxu0
  %v2957 = vadd.f32 0.0, %v2956
  %2958 = vmatprep.mubr.bf16.mxu0 0
  %2959 = vmatmul.mubr.bf16.gmra.mrb[0].mxu0 %v1502
  %v2960 = vpop.f32.mrb[0].mxu0
  %v2961 = vadd.f32 0.0, %v2960
  %v2962 = vpop.f32.mrb[0].mxu0
  %v2963 = vadd.f32 0.0, %v2962
  %v2964 = vpop.f32.mrb[0].mxu0
  %v2965 = vadd.f32 0.0, %v2964
  %v2966 = vpop.f32.mrb[0].mxu0
  %v2967 = vadd.f32 0.0, %v2966
  %2968 = vmatprep.mubr.bf16.mxu0 0
  %2969 = vmatmul.mubr.bf16.gmra.mrb[0].mxu0 %v1503
  %v2970 = vpop.f32.mrb[0].mxu0
  %v2971 = vadd.f32 0.0, %v2970
  %v2972 = vpop.f32.mrb[0].mxu0
  %v2973 = vadd.f32 0.0, %v2972
  %v2974 = vpop.f32.mrb[0].mxu0
  %v2975 = vadd.f32 0.0, %v2974
  %v2976 = vpop.f32.mrb[0].mxu0
  %v2977 = vadd.f32 0.0, %v2976
  %2978 = vdwg.mxu0
  %v2979 = vadd.f32 %v2890, %v2941
  %v2980 = vadd.f32 %v2891, %v2943
  %v2981 = vadd.f32 %v2892, %v2945
  %v2982 = vadd.f32 %v2893, %v2947
  %v2983 = vadd.f32 %v2894, %v2951
  %v2984 = vadd.f32 %v2895, %v2953
  %v2985 = vadd.f32 %v2896, %v2955
  %v2986 = vadd.f32 %v2897, %v2957
  %v2987 = vadd.f32 %v2898, %v2961
  %v2988 = vadd.f32 %v2899, %v2963
  %v2989 = vadd.f32 %v2900, %v2965
  %v2990 = vadd.f32 %v2901, %v2967
  %v2991 = vadd.f32 %v2902, %v2971
  %v2992 = vadd.f32 %v2903, %v2973
  %v2993 = vadd.f32 %v2904, %v2975
  %v2994 = vadd.f32 %v2905, %v2977
  %2995 = vmatprep.subr.bf16.mxu0 %v2551
  %2996 = vmatpush1.bf16.msra.mxu0 %v2550
  %2997 = vmatprep.subr.bf16.mxu0 %v2553
  %2998 = vmatpush1.bf16.msra.mxu0 %v2552
  %2999 = vmatprep.subr.bf16.mxu0 %v2555
  %3000 = vmatpush1.bf16.msra.mxu0 %v2554
  %3001 = vmatprep.subr.bf16.mxu0 %v2557
  %3002 = vmatpush1.bf16.msra.mxu0 %v2556
  %3003 = vmatprep.subr.bf16.mxu0 %v2559
  %3004 = vmatpush1.bf16.msra.mxu0 %v2558
  %3005 = vmatprep.subr.bf16.mxu0 %v2561
  %3006 = vmatpush1.bf16.msra.mxu0 %v2560
  %3007 = vmatprep.subr.bf16.mxu0 %v2563
  %3008 = vmatpush1.bf16.msra.mxu0 %v2562
  %3009 = vmatprep.subr.bf16.mxu0 %v2565
  %3010 = vmatpush1.bf16.msra.mxu0 %v2564
  %3011 = vmatprep.subr.bf16.mxu0 0
  %3012 = vmatpush1.bf16.msra.mxu0 0
  %3013 = vmatprep.subr.bf16.mxu0 0
  %3014 = vmatpush1.bf16.msra.mxu0 0
  %3015 = vmatprep.subr.bf16.mxu0 0
  %3016 = vmatpush1.bf16.msra.mxu0 0
  %3017 = vmatprep.subr.bf16.mxu0 0
  %3018 = vmatpush1.bf16.msra.mxu0 0
  %3019 = vmatprep.subr.bf16.mxu0 0
  %3020 = vmatpush1.bf16.msra.mxu0 0
  %3021 = vmatprep.subr.bf16.mxu0 0
  %3022 = vmatpush1.bf16.msra.mxu0 0
  %3023 = vmatprep.subr.bf16.mxu0 0
  %3024 = vmatpush1.bf16.msra.mxu0 0
  %3025 = vmatprep.subr.bf16.mxu0 0
  %3026 = vmatpush1.bf16.msra.mxu0 0
  %3027 = vmatprep.mubr.bf16.mxu0 0
  %3028 = vmatmul.mubr.bf16.gmra.mrb[0].mxu0 %v1770
  %v3029 = vpop.f32.mrb[0].mxu0
  %v3030 = vadd.f32 0.0, %v3029
  %v3031 = vpop.f32.mrb[0].mxu0
  %v3032 = vadd.f32 0.0, %v3031
  %v3033 = vpop.f32.mrb[0].mxu0
  %v3034 = vadd.f32 0.0, %v3033
  %v3035 = vpop.f32.mrb[0].mxu0
  %v3036 = vadd.f32 0.0, %v3035
  %3037 = vmatprep.mubr.bf16.mxu0 0
  %3038 = vmatmul.mubr.bf16.gmra.mrb[0].mxu0 %v1771
  %v3039 = vpop.f32.mrb[0].mxu0
  %v3040 = vadd.f32 0.0, %v3039
  %v3041 = vpop.f32.mrb[0].mxu0
  %v3042 = vadd.f32 0.0, %v3041
  %v3043 = vpop.f32.mrb[0].mxu0
  %v3044 = vadd.f32 0.0, %v3043
  %v3045 = vpop.f32.mrb[0].mxu0
  %v3046 = vadd.f32 0.0, %v3045
  %3047 = vmatprep.mubr.bf16.mxu0 0
  %3048 = vmatmul.mubr.bf16.gmra.mrb[0].mxu0 %v1772
  %v3049 = vpop.f32.mrb[0].mxu0
  %v3050 = vadd.f32 0.0, %v3049
  %v3051 = vpop.f32.mrb[0].mxu0
  %v3052 = vadd.f32 0.0, %v3051
  %v3053 = vpop.f32.mrb[0].mxu0
  %v3054 = vadd.f32 0.0, %v3053
  %v3055 = vpop.f32.mrb[0].mxu0
  %v3056 = vadd.f32 0.0, %v3055
  %3057 = vmatprep.mubr.bf16.mxu0 0
  %3058 = vmatmul.mubr.bf16.gmra.mrb[0].mxu0 %v1773
  %v3059 = vpop.f32.mrb[0].mxu0
  %v3060 = vadd.f32 0.0, %v3059
  %v3061 = vpop.f32.mrb[0].mxu0
  %v3062 = vadd.f32 0.0, %v3061
  %v3063 = vpop.f32.mrb[0].mxu0
  %v3064 = vadd.f32 0.0, %v3063
  %v3065 = vpop.f32.mrb[0].mxu0
  %v3066 = vadd.f32 0.0, %v3065
  %3067 = vdwg.mxu0
  %v3068 = vadd.f32 %v2979, %v3030
  %v3069 = vadd.f32 %v2980, %v3032
  %v3070 = vadd.f32 %v2981, %v3034
  %v3071 = vadd.f32 %v2982, %v3036
  %v3072 = vadd.f32 %v2983, %v3040
  %v3073 = vadd.f32 %v2984, %v3042
  %v3074 = vadd.f32 %v2985, %v3044
  %v3075 = vadd.f32 %v2986, %v3046
  %v3076 = vadd.f32 %v2987, %v3050
  %v3077 = vadd.f32 %v2988, %v3052
  %v3078 = vadd.f32 %v2989, %v3054
  %v3079 = vadd.f32 %v2990, %v3056
  %v3080 = vadd.f32 %v2991, %v3060
  %v3081 = vadd.f32 %v2992, %v3062
  %v3082 = vadd.f32 %v2993, %v3064
  %v3083 = vadd.f32 %v2994, %v3066
  %v3084 = vmax.f32 %v2655, %v3068
  %v3085 = vmax.f32 %v2656, %v3069
  %v3086 = vmax.f32 %v2657, %v3070
  %v3087 = vmax.f32 %v2658, %v3071
  %v3088 = vmax.f32 %v2659, %v3072
  %v3089 = vmax.f32 %v2660, %v3073
  %v3090 = vmax.f32 %v2661, %v3074
  %v3091 = vmax.f32 %v2662, %v3075
  %v3092 = vmax.f32 %v2663, %v3076
  %v3093 = vmax.f32 %v2664, %v3077
  %v3094 = vmax.f32 %v2665, %v3078
  %v3095 = vmax.f32 %v2666, %v3079
  %v3096 = vmax.f32 %v2667, %v3080
  %v3097 = vmax.f32 %v2668, %v3081
  %v3098 = vmax.f32 %v2669, %v3082
  %v3099 = vmax.f32 %v2670, %v3083
  %v3100 = vmax.f32 %v3084, %v3085
  %v3101 = vmax.f32 %v3086, %v3087
  %v3102 = vmax.f32 %v3088, %v3089
  %v3103 = vmax.f32 %v3090, %v3091
  %v3104 = vmax.f32 %v3092, %v3093
  %v3105 = vmax.f32 %v3094, %v3095
  %v3106 = vmax.f32 %v3096, %v3097
  %v3107 = vmax.f32 %v3098, %v3099
  %v3109 = vlaneseq
  %v3110 = vshrl.u32 %v3109, 7
  %v3111 = vsub.s32 0, %v3110
  %v3112 = vrot.slane %v52, %v3111
  %v3114 = vadd.f32 %v3100, %v3112
  %v3115 = vadd.f32 %v3101, %v3112
  %v3116 = vadd.f32 %v3102, %v3112
  %v3117 = vadd.f32 %v3103, %v3112
  %v3118 = vadd.f32 %v3104, %v3112
  %v3119 = vadd.f32 %v3105, %v3112
  %v3120 = vadd.f32 %v3106, %v3112
  %v3121 = vadd.f32 %v3107, %v3112
  %v3122 = vmax.f32 %v3114, 0.0
  %v3123 = vmax.f32 %v3115, 0.0
  %v3124 = vmax.f32 %v3116, 0.0
  %v3125 = vmax.f32 %v3117, 0.0
  %v3126 = vmax.f32 %v3118, 0.0
  %v3127 = vmax.f32 %v3119, 0.0
  %v3128 = vmax.f32 %v3120, 0.0
  %v3129 = vmax.f32 %v3121, 0.0
  %v3130 = vpack.c.bf16 %v3123, %v3122
  %v3131 = vld [vmem:[%s5] sm:$0xf]
  %v3132 = vld [vmem:[%s5 + $0x4] sm:$0xf]
  %v3133 = vld [vmem:[%s5 + $0x8] sm:$0xf]
  %v3134 = vld [vmem:[%s5 + $0xc] sm:$0xf]
  %v3135 = vld [vmem:[%s5 + $0x10] sm:$0xf]
  %v3136 = vld [vmem:[%s5 + $0x14] sm:$0xf]
  %v3137 = vld [vmem:[%s5 + $0x18] sm:$0xf]
  %v3138 = vld [vmem:[%s5 + $0x1c] sm:$0xf]
  %v3139 = vld [vmem:[%s5 + $0x20] sm:$0xf]
  %v3140 = vld [vmem:[%s5 + $0x24] sm:$0xf]
  %v3141 = vld [vmem:[%s5 + $0x28] sm:$0xf]
  %v3142 = vld [vmem:[%s5 + $0x2c] sm:$0xf]
  %v3143 = vld [vmem:[%s5 + $0x30] sm:$0xf]
  %v3144 = vld [vmem:[%s5 + $0x34] sm:$0xf]
  %v3145 = vld [vmem:[%s5 + $0x38] sm:$0xf]
  %v3146 = vld [vmem:[%s5 + $0x3c] sm:$0xf]
  %v3147 = vpack.c.bf16 %v3125, %v3124
  %s3148 = scalar_lea.vmem %s5, 64
  %v3149 = vld [vmem:[%s3148] sm:$0xf]
  %v3150 = vld [vmem:[%s3148 + $0x4] sm:$0xf]
  %v3151 = vld [vmem:[%s3148 + $0x8] sm:$0xf]
  %v3152 = vld [vmem:[%s3148 + $0xc] sm:$0xf]
  %v3153 = vld [vmem:[%s3148 + $0x10] sm:$0xf]
  %v3154 = vld [vmem:[%s3148 + $0x14] sm:$0xf]
  %v3155 = vld [vmem:[%s3148 + $0x18] sm:$0xf]
  %v3156 = vld [vmem:[%s3148 + $0x1c] sm:$0xf]
  %v3157 = vld [vmem:[%s3148 + $0x20] sm:$0xf]
  %v3158 = vld [vmem:[%s3148 + $0x24] sm:$0xf]
  %v3159 = vld [vmem:[%s3148 + $0x28] sm:$0xf]
  %v3160 = vld [vmem:[%s3148 + $0x2c] sm:$0xf]
  %v3161 = vld [vmem:[%s3148 + $0x30] sm:$0xf]
  %v3162 = vld [vmem:[%s3148 + $0x34] sm:$0xf]
  %v3163 = vld [vmem:[%s3148 + $0x38] sm:$0xf]
  %v3164 = vld [vmem:[%s3148 + $0x3c] sm:$0xf]
  %v3181 = vunpack.c.l.b16 %v3149
  %v3182 = vunpack.c.l.b16 %v3150
  %v3183 = vunpack.c.l.b16 %v3151
  %v3184 = vunpack.c.l.b16 %v3152
  %v3185 = vunpack.c.l.b16 %v3153
  %v3186 = vunpack.c.l.b16 %v3154
  %v3187 = vunpack.c.l.b16 %v3155
  %v3188 = vunpack.c.l.b16 %v3156
  %v3189 = vunpack.c.l.b16 %v3157
  %v3190 = vunpack.c.l.b16 %v3158
  %v3191 = vunpack.c.l.b16 %v3159
  %v3192 = vunpack.c.l.b16 %v3160
  %v3193 = vunpack.c.l.b16 %v3161
  %v3194 = vunpack.c.l.b16 %v3162
  %v3195 = vunpack.c.l.b16 %v3163
  %v3196 = vunpack.c.l.b16 %v3164
  %v3197 = vpack.c.b16 %v3182, %v3181
  %v3198 = vpack.c.b16 %v3184, %v3183
  %v3199 = vpack.c.b16 %v3186, %v3185
  %v3200 = vpack.c.b16 %v3188, %v3187
  %v3201 = vpack.c.b16 %v3190, %v3189
  %v3202 = vpack.c.b16 %v3192, %v3191
  %v3203 = vpack.c.b16 %v3194, %v3193
  %v3204 = vpack.c.b16 %v3196, %v3195
  %3213 = vmatprep.subr.bf16.mxu0 0
  %3214 = vmatpush1.bf16.msra.mxu0 %v3197
  %3215 = vmatprep.subr.bf16.mxu0 0
  %3216 = vmatpush1.bf16.msra.mxu0 %v3198
  %3217 = vmatprep.subr.bf16.mxu0 0
  %3218 = vmatpush1.bf16.msra.mxu0 %v3199
  %3219 = vmatprep.subr.bf16.mxu0 0
  %3220 = vmatpush1.bf16.msra.mxu0 %v3200
  %3221 = vmatprep.subr.bf16.mxu0 0
  %3222 = vmatpush1.bf16.msra.mxu0 %v3201
  %3223 = vmatprep.subr.bf16.mxu0 0
  %3224 = vmatpush1.bf16.msra.mxu0 %v3202
  %3225 = vmatprep.subr.bf16.mxu0 0
  %3226 = vmatpush1.bf16.msra.mxu0 %v3203
  %3227 = vmatprep.subr.bf16.mxu0 0
  %3228 = vmatpush1.bf16.msra.mxu0 %v3204
  %3229 = vmatprep.subr.bf16.mxu0 0
  %3230 = vmatpush1.bf16.msra.mxu0 0
  %3231 = vmatprep.subr.bf16.mxu0 0
  %3232 = vmatpush1.bf16.msra.mxu0 0
  %3233 = vmatprep.subr.bf16.mxu0 0
  %3234 = vmatpush1.bf16.msra.mxu0 0
  %3235 = vmatprep.subr.bf16.mxu0 0
  %3236 = vmatpush1.bf16.msra.mxu0 0
  %3237 = vmatprep.subr.bf16.mxu0 0
  %3238 = vmatpush1.bf16.msra.mxu0 0
  %3239 = vmatprep.subr.bf16.mxu0 0
  %3240 = vmatpush1.bf16.msra.mxu0 0
  %3241 = vmatprep.subr.bf16.mxu0 0
  %3242 = vmatpush1.bf16.msra.mxu0 0
  %3243 = vmatprep.subr.bf16.mxu0 0
  %3244 = vmatpush1.bf16.msra.mxu0 0
  %3245 = vmatprep.mubr.bf16.mxu0 0
  %3246 = vmatmul.mubr.bf16.gmra.mrb[0].mxu0 %v3147
  %v3247 = vpop.f32.mrb[0].mxu0
  %v3248 = vadd.f32 0.0, %v3247
  %v3249 = vpop.f32.mrb[0].mxu0
  %v3250 = vpop.f32.mrb[0].mxu0
  %v3251 = vadd.f32 0.0, %v3250
  %v3252 = vpop.f32.mrb[0].mxu0
  %3253 = vdwg.mxu0
  %v3270 = vunpack.c.l.b16 %v3131
  %v3271 = vunpack.c.l.b16 %v3132
  %v3272 = vunpack.c.l.b16 %v3133
  %v3273 = vunpack.c.l.b16 %v3134
  %v3274 = vunpack.c.l.b16 %v3135
  %v3275 = vunpack.c.l.b16 %v3136
  %v3276 = vunpack.c.l.b16 %v3137
  %v3277 = vunpack.c.l.b16 %v3138
  %v3278 = vunpack.c.l.b16 %v3139
  %v3279 = vunpack.c.l.b16 %v3140
  %v3280 = vunpack.c.l.b16 %v3141
  %v3281 = vunpack.c.l.b16 %v3142
  %v3282 = vunpack.c.l.b16 %v3143
  %v3283 = vunpack.c.l.b16 %v3144
  %v3284 = vunpack.c.l.b16 %v3145
  %v3285 = vunpack.c.l.b16 %v3146
  %v3286 = vpack.c.b16 %v3271, %v3270
  %v3287 = vpack.c.b16 %v3273, %v3272
  %v3288 = vpack.c.b16 %v3275, %v3274
  %v3289 = vpack.c.b16 %v3277, %v3276
  %v3290 = vpack.c.b16 %v3279, %v3278
  %v3291 = vpack.c.b16 %v3281, %v3280
  %v3292 = vpack.c.b16 %v3283, %v3282
  %v3293 = vpack.c.b16 %v3285, %v3284
  %3302 = vmatprep.subr.bf16.mxu0 0
  %3303 = vmatpush1.bf16.msra.mxu0 %v3286
  %3304 = vmatprep.subr.bf16.mxu0 0
  %3305 = vmatpush1.bf16.msra.mxu0 %v3287
  %3306 = vmatprep.subr.bf16.mxu0 0
  %3307 = vmatpush1.bf16.msra.mxu0 %v3288
  %3308 = vmatprep.subr.bf16.mxu0 0
  %3309 = vmatpush1.bf16.msra.mxu0 %v3289
  %3310 = vmatprep.subr.bf16.mxu0 0
  %3311 = vmatpush1.bf16.msra.mxu0 %v3290
  %3312 = vmatprep.subr.bf16.mxu0 0
  %3313 = vmatpush1.bf16.msra.mxu0 %v3291
  %3314 = vmatprep.subr.bf16.mxu0 0
  %3315 = vmatpush1.bf16.msra.mxu0 %v3292
  %3316 = vmatprep.subr.bf16.mxu0 0
  %3317 = vmatpush1.bf16.msra.mxu0 %v3293
  %3318 = vmatprep.subr.bf16.mxu0 0
  %3319 = vmatpush1.bf16.msra.mxu0 0
  %3320 = vmatprep.subr.bf16.mxu0 0
  %3321 = vmatpush1.bf16.msra.mxu0 0
  %3322 = vmatprep.subr.bf16.mxu0 0
  %3323 = vmatpush1.bf16.msra.mxu0 0
  %3324 = vmatprep.subr.bf16.mxu0 0
  %3325 = vmatpush1.bf16.msra.mxu0 0
  %3326 = vmatprep.subr.bf16.mxu0 0
  %3327 = vmatpush1.bf16.msra.mxu0 0
  %3328 = vmatprep.subr.bf16.mxu0 0
  %3329 = vmatpush1.bf16.msra.mxu0 0
  %3330 = vmatprep.subr.bf16.mxu0 0
  %3331 = vmatpush1.bf16.msra.mxu0 0
  %3332 = vmatprep.subr.bf16.mxu0 0
  %3333 = vmatpush1.bf16.msra.mxu0 0
  %3334 = vmatprep.mubr.bf16.mxu0 0
  %3335 = vmatmul.mubr.bf16.gmra.mrb[0].mxu0 %v3130
  %v3336 = vpop.f32.mrb[0].mxu0
  %v3337 = vadd.f32 %v3248, %v3336
  %v3338 = vpop.f32.mrb[0].mxu0
  %v3339 = vpop.f32.mrb[0].mxu0
  %v3340 = vadd.f32 %v3251, %v3339
  %v3341 = vpop.f32.mrb[0].mxu0
  %3342 = vdwg.mxu0
  %v3343 = vpack.c.bf16 %v3127, %v3126
  %s3344 = scalar_lea.vmem %s5, 128
  %v3345 = vld [vmem:[%s3344] sm:$0xf]
  %v3346 = vld [vmem:[%s3344 + $0x4] sm:$0xf]
  %v3347 = vld [vmem:[%s3344 + $0x8] sm:$0xf]
  %v3348 = vld [vmem:[%s3344 + $0xc] sm:$0xf]
  %v3349 = vld [vmem:[%s3344 + $0x10] sm:$0xf]
  %v3350 = vld [vmem:[%s3344 + $0x14] sm:$0xf]
  %v3351 = vld [vmem:[%s3344 + $0x18] sm:$0xf]
  %v3352 = vld [vmem:[%s3344 + $0x1c] sm:$0xf]
  %v3353 = vld [vmem:[%s3344 + $0x20] sm:$0xf]
  %v3354 = vld [vmem:[%s3344 + $0x24] sm:$0xf]
  %v3355 = vld [vmem:[%s3344 + $0x28] sm:$0xf]
  %v3356 = vld [vmem:[%s3344 + $0x2c] sm:$0xf]
  %v3357 = vld [vmem:[%s3344 + $0x30] sm:$0xf]
  %v3358 = vld [vmem:[%s3344 + $0x34] sm:$0xf]
  %v3359 = vld [vmem:[%s3344 + $0x38] sm:$0xf]
  %v3360 = vld [vmem:[%s3344 + $0x3c] sm:$0xf]
  %v3377 = vunpack.c.l.b16 %v3345
  %v3378 = vunpack.c.l.b16 %v3346
  %v3379 = vunpack.c.l.b16 %v3347
  %v3380 = vunpack.c.l.b16 %v3348
  %v3381 = vunpack.c.l.b16 %v3349
  %v3382 = vunpack.c.l.b16 %v3350
  %v3383 = vunpack.c.l.b16 %v3351
  %v3384 = vunpack.c.l.b16 %v3352
  %v3385 = vunpack.c.l.b16 %v3353
  %v3386 = vunpack.c.l.b16 %v3354
  %v3387 = vunpack.c.l.b16 %v3355
  %v3388 = vunpack.c.l.b16 %v3356
  %v3389 = vunpack.c.l.b16 %v3357
  %v3390 = vunpack.c.l.b16 %v3358
  %v3391 = vunpack.c.l.b16 %v3359
  %v3392 = vunpack.c.l.b16 %v3360
  %v3393 = vpack.c.b16 %v3378, %v3377
  %v3394 = vpack.c.b16 %v3380, %v3379
  %v3395 = vpack.c.b16 %v3382, %v3381
  %v3396 = vpack.c.b16 %v3384, %v3383
  %v3397 = vpack.c.b16 %v3386, %v3385
  %v3398 = vpack.c.b16 %v3388, %v3387
  %v3399 = vpack.c.b16 %v3390, %v3389
  %v3400 = vpack.c.b16 %v3392, %v3391
  %3409 = vmatprep.subr.bf16.mxu0 0
  %3410 = vmatpush1.bf16.msra.mxu0 %v3393
  %3411 = vmatprep.subr.bf16.mxu0 0
  %3412 = vmatpush1.bf16.msra.mxu0 %v3394
  %3413 = vmatprep.subr.bf16.mxu0 0
  %3414 = vmatpush1.bf16.msra.mxu0 %v3395
  %3415 = vmatprep.subr.bf16.mxu0 0
  %3416 = vmatpush1.bf16.msra.mxu0 %v3396
  %3417 = vmatprep.subr.bf16.mxu0 0
  %3418 = vmatpush1.bf16.msra.mxu0 %v3397
  %3419 = vmatprep.subr.bf16.mxu0 0
  %3420 = vmatpush1.bf16.msra.mxu0 %v3398
  %3421 = vmatprep.subr.bf16.mxu0 0
  %3422 = vmatpush1.bf16.msra.mxu0 %v3399
  %3423 = vmatprep.subr.bf16.mxu0 0
  %3424 = vmatpush1.bf16.msra.mxu0 %v3400
  %3425 = vmatprep.subr.bf16.mxu0 0
  %3426 = vmatpush1.bf16.msra.mxu0 0
  %3427 = vmatprep.subr.bf16.mxu0 0
  %3428 = vmatpush1.bf16.msra.mxu0 0
  %3429 = vmatprep.subr.bf16.mxu0 0
  %3430 = vmatpush1.bf16.msra.mxu0 0
  %3431 = vmatprep.subr.bf16.mxu0 0
  %3432 = vmatpush1.bf16.msra.mxu0 0
  %3433 = vmatprep.subr.bf16.mxu0 0
  %3434 = vmatpush1.bf16.msra.mxu0 0
  %3435 = vmatprep.subr.bf16.mxu0 0
  %3436 = vmatpush1.bf16.msra.mxu0 0
  %3437 = vmatprep.subr.bf16.mxu0 0
  %3438 = vmatpush1.bf16.msra.mxu0 0
  %3439 = vmatprep.subr.bf16.mxu0 0
  %3440 = vmatpush1.bf16.msra.mxu0 0
  %3441 = vmatprep.mubr.bf16.mxu0 0
  %3442 = vmatmul.mubr.bf16.gmra.mrb[0].mxu0 %v3343
  %v3443 = vpop.f32.mrb[0].mxu0
  %v3444 = vadd.f32 0.0, %v3443
  %v3445 = vpop.f32.mrb[0].mxu0
  %v3446 = vpop.f32.mrb[0].mxu0
  %v3447 = vadd.f32 0.0, %v3446
  %v3448 = vpop.f32.mrb[0].mxu0
  %3449 = vdwg.mxu0
  %v3450 = vadd.f32 %v3337, %v3444
  %v3451 = vadd.f32 %v3340, %v3447
  %v3452 = vpack.c.bf16 %v3129, %v3128
  %s3453 = scalar_lea.vmem %s5, 192
  %v3454 = vld [vmem:[%s3453] sm:$0xf]
  %v3455 = vld [vmem:[%s3453 + $0x4] sm:$0xf]
  %v3456 = vld [vmem:[%s3453 + $0x8] sm:$0xf]
  %v3457 = vld [vmem:[%s3453 + $0xc] sm:$0xf]
  %v3458 = vld [vmem:[%s3453 + $0x10] sm:$0xf]
  %v3459 = vld [vmem:[%s3453 + $0x14] sm:$0xf]
  %v3460 = vld [vmem:[%s3453 + $0x18] sm:$0xf]
  %v3461 = vld [vmem:[%s3453 + $0x1c] sm:$0xf]
  %v3462 = vld [vmem:[%s3453 + $0x20] sm:$0xf]
  %v3463 = vld [vmem:[%s3453 + $0x24] sm:$0xf]
  %v3464 = vld [vmem:[%s3453 + $0x28] sm:$0xf]
  %v3465 = vld [vmem:[%s3453 + $0x2c] sm:$0xf]
  %v3466 = vld [vmem:[%s3453 + $0x30] sm:$0xf]
  %v3467 = vld [vmem:[%s3453 + $0x34] sm:$0xf]
  %v3468 = vld [vmem:[%s3453 + $0x38] sm:$0xf]
  %v3469 = vld [vmem:[%s3453 + $0x3c] sm:$0xf]
  %v3486 = vunpack.c.l.b16 %v3454
  %v3487 = vunpack.c.l.b16 %v3455
  %v3488 = vunpack.c.l.b16 %v3456
  %v3489 = vunpack.c.l.b16 %v3457
  %v3490 = vunpack.c.l.b16 %v3458
  %v3491 = vunpack.c.l.b16 %v3459
  %v3492 = vunpack.c.l.b16 %v3460
  %v3493 = vunpack.c.l.b16 %v3461
  %v3494 = vunpack.c.l.b16 %v3462
  %v3495 = vunpack.c.l.b16 %v3463
  %v3496 = vunpack.c.l.b16 %v3464
  %v3497 = vunpack.c.l.b16 %v3465
  %v3498 = vunpack.c.l.b16 %v3466
  %v3499 = vunpack.c.l.b16 %v3467
  %v3500 = vunpack.c.l.b16 %v3468
  %v3501 = vunpack.c.l.b16 %v3469
  %v3502 = vpack.c.b16 %v3487, %v3486
  %v3503 = vpack.c.b16 %v3489, %v3488
  %v3504 = vpack.c.b16 %v3491, %v3490
  %v3505 = vpack.c.b16 %v3493, %v3492
  %v3506 = vpack.c.b16 %v3495, %v3494
  %v3507 = vpack.c.b16 %v3497, %v3496
  %v3508 = vpack.c.b16 %v3499, %v3498
  %v3509 = vpack.c.b16 %v3501, %v3500
  %3518 = vmatprep.subr.bf16.mxu0 0
  %3519 = vmatpush1.bf16.msra.mxu0 %v3502
  %3520 = vmatprep.subr.bf16.mxu0 0
  %3521 = vmatpush1.bf16.msra.mxu0 %v3503
  %3522 = vmatprep.subr.bf16.mxu0 0
  %3523 = vmatpush1.bf16.msra.mxu0 %v3504
  %3524 = vmatprep.subr.bf16.mxu0 0
  %3525 = vmatpush1.bf16.msra.mxu0 %v3505
  %3526 = vmatprep.subr.bf16.mxu0 0
  %3527 = vmatpush1.bf16.msra.mxu0 %v3506
  %3528 = vmatprep.subr.bf16.mxu0 0
  %3529 = vmatpush1.bf16.msra.mxu0 %v3507
  %3530 = vmatprep.subr.bf16.mxu0 0
  %3531 = vmatpush1.bf16.msra.mxu0 %v3508
  %3532 = vmatprep.subr.bf16.mxu0 0
  %3533 = vmatpush1.bf16.msra.mxu0 %v3509
  %3534 = vmatprep.subr.bf16.mxu0 0
  %3535 = vmatpush1.bf16.msra.mxu0 0
  %3536 = vmatprep.subr.bf16.mxu0 0
  %3537 = vmatpush1.bf16.msra.mxu0 0
  %3538 = vmatprep.subr.bf16.mxu0 0
  %3539 = vmatpush1.bf16.msra.mxu0 0
  %3540 = vmatprep.subr.bf16.mxu0 0
  %3541 = vmatpush1.bf16.msra.mxu0 0
  %3542 = vmatprep.subr.bf16.mxu0 0
  %3543 = vmatpush1.bf16.msra.mxu0 0
  %3544 = vmatprep.subr.bf16.mxu0 0
  %3545 = vmatpush1.bf16.msra.mxu0 0
  %3546 = vmatprep.subr.bf16.mxu0 0
  %3547 = vmatpush1.bf16.msra.mxu0 0
  %3548 = vmatprep.subr.bf16.mxu0 0
  %3549 = vmatpush1.bf16.msra.mxu0 0
  %3550 = vmatprep.mubr.bf16.mxu0 0
  %3551 = vmatmul.mubr.bf16.gmra.mrb[0].mxu0 %v3452
  %v3552 = vpop.f32.mrb[0].mxu0
  %v3553 = vadd.f32 0.0, %v3552
  %v3554 = vpop.f32.mrb[0].mxu0
  %v3555 = vpop.f32.mrb[0].mxu0
  %v3556 = vadd.f32 0.0, %v3555
  %v3557 = vpop.f32.mrb[0].mxu0
  %3558 = vdwg.mxu0
  %v3559 = vadd.f32 %v3450, %v3553
  %v3560 = vadd.f32 %v3451, %v3556
  %v3561 = vld [vmem:[%s6] sm:$0x1]
  %v3563 = vlaneseq
  %v3564 = vshrl.u32 %v3563, 7
  %v3565 = vsub.s32 0, %v3564
  %v3566 = vrot.slane %v3561, %v3565
  %v3568 = vadd.f32 %v3559, %v3566
  %v3569 = vadd.f32 %v3560, %v3566
  %v3570 = vmax.f32 %v3568, 0.0
  %v3571 = vmax.f32 %v3569, 0.0
  %v3572 = vpack.c.bf16 %v3571, %v3570
  %v3573 = vld [vmem:[%s7] sm:$0xf]
  %v3574 = vld [vmem:[%s7 + $0x4] sm:$0xf]
  %v3575 = vld [vmem:[%s7 + $0x8] sm:$0xf]
  %v3576 = vld [vmem:[%s7 + $0xc] sm:$0xf]
  %v3577 = vld [vmem:[%s7 + $0x10] sm:$0xf]
  %v3578 = vld [vmem:[%s7 + $0x14] sm:$0xf]
  %v3579 = vld [vmem:[%s7 + $0x18] sm:$0x1]
  %v3580 = vld [vmem:[%s8] sm:$0x1]
  %v3582 = vlaneseq
  %v3583 = vshrl.u32 %v3582, 7
  %v3584 = vsub.s32 0, %v3583
  %v3585 = vrot.slane %v3580, %v3584
  %v3594 = vunpack.c.l.b16 %v3573
  %v3595 = vunpack.c.l.b16 %v3574
  %v3596 = vunpack.c.l.b16 %v3575
  %v3597 = vunpack.c.l.b16 %v3576
  %v3598 = vunpack.c.l.b16 %v3577
  %v3599 = vunpack.c.l.b16 %v3578
  %v3600 = vunpack.c.l.b16 %v3579
  %v3601 = vpack.c.b16 %v3595, %v3594
  %v3602 = vpack.c.b16 %v3597, %v3596
  %v3603 = vpack.c.b16 %v3599, %v3598
  %v3604 = vpack.c.b16 %v3600, %v3600
  %vm3608 = vcmask 408576
  %v3610 = vsel %vm3608, %v3572, 0
  %vm3612 = vcmask 1040384
  %v3614 = vsel %vm3612, %v3604, 0
  %3616 = vmatprep.subr.bf16.mxu0 0
  %3617 = vmatpush1.bf16.msra.mxu0 %v3601
  %3618 = vmatprep.subr.bf16.mxu0 0
  %3619 = vmatpush1.bf16.msra.mxu0 %v3602
  %3620 = vmatprep.subr.bf16.mxu0 0
  %3621 = vmatpush1.bf16.msra.mxu0 %v3603
  %3622 = vmatprep.subr.bf16.mxu0 0
  %3623 = vmatpush1.bf16.msra.mxu0 %v3614
  %3624 = vmatprep.subr.bf16.mxu0 0
  %3625 = vmatpush1.bf16.msra.mxu0 0
  %3626 = vmatprep.subr.bf16.mxu0 0
  %3627 = vmatpush1.bf16.msra.mxu0 0
  %3628 = vmatprep.subr.bf16.mxu0 0
  %3629 = vmatpush1.bf16.msra.mxu0 0
  %3630 = vmatprep.subr.bf16.mxu0 0
  %3631 = vmatpush1.bf16.msra.mxu0 0
  %3632 = vmatprep.subr.bf16.mxu0 0
  %3633 = vmatpush1.bf16.msra.mxu0 0
  %3634 = vmatprep.subr.bf16.mxu0 0
  %3635 = vmatpush1.bf16.msra.mxu0 0
  %3636 = vmatprep.subr.bf16.mxu0 0
  %3637 = vmatpush1.bf16.msra.mxu0 0
  %3638 = vmatprep.subr.bf16.mxu0 0
  %3639 = vmatpush1.bf16.msra.mxu0 0
  %3640 = vmatprep.subr.bf16.mxu0 0
  %3641 = vmatpush1.bf16.msra.mxu0 0
  %3642 = vmatprep.subr.bf16.mxu0 0
  %3643 = vmatpush1.bf16.msra.mxu0 0
  %3644 = vmatprep.subr.bf16.mxu0 0
  %3645 = vmatpush1.bf16.msra.mxu0 0
  %3646 = vmatprep.subr.bf16.mxu0 0
  %3647 = vmatpush1.bf16.msra.mxu0 0
  %3648 = vmatprep.mubr.bf16.mxu0 0
  %3649 = vmatmul.mubr.bf16.gmra.mrb[0].mxu0 %v3610
  %v3650 = vpop.f32.mrb[0].mxu0
  %v3651 = vadd.f32 %v3585, %v3650
  %v3652 = vpop.f32.mrb[0].mxu0
  %v3653 = vpop.f32.mrb[0].mxu0
  %v3654 = vadd.f32 %v3585, %v3653
  %v3655 = vpop.f32.mrb[0].mxu0
  %3656 = vdwg.mxu0
  %vm3657 = vcmask 80896
  %v3658 = vsel %vm3657, %v3651, -inf
  %3659 = vmax.xlane.f32.xlu0 %v3658
  %v3660 = vpop.xlane.xlu0 %3659
  %v3661 = vsel %vm3657, %v3654, -inf
  %3662 = vmax.xlane.f32.xlu0 %v3661
  %v3663 = vpop.xlane.xlu0 %3662
  %v3664 = vsub.f32 %v3651, %v3660
  %v3665 = vsub.f32 %v3654, %v3663
  %v3666 = vmul.f32 %v3664, 1.442695
  %v3667 = vpow.pop %v3666
  %v3668 = vmul.f32 %v3665, 1.442695
  %v3669 = vpow.pop %v3668
  %v3670 = vsel %vm3657, %v3667, 0.0
  %3671 = vadd.xlane.f32.xlu0 %v3670
  %v3672 = vpop.xlane.xlu0 %3671
  %v3673 = vsel %vm3657, %v3669, 0.0
  %3674 = vadd.xlane.f32.xlu0 %v3673
  %v3675 = vpop.xlane.xlu0 %3674
  %v3676 = vlog2.pop %v3672
  %v3677 = vmul.f32 %v3676, 0.6931472
  %v3678 = vlog2.pop %v3675
  %v3679 = vmul.f32 %v3678, 0.6931472
  %v3680 = vsub.f32 %v3664, %v3677
  %v3681 = vsub.f32 %v3665, %v3679
  %3682 = vst.msk [vmem:[%s9] sm:$0xff] %vm3657, %v3680
  %3683 = vst.msk [vmem:[%s9 + $0x8] sm:$0xff] %vm3657, %v3681
  // Predicated region
  $region38: #{net_forward.1} parent=0 // pred_check
    _
  $region39: #{net_forward.1} parent=0 // pred_check_branch
    %3685 = sbr.rel (0) target = $region41
  $region40: #{net_forward.1} parent=0 // pred_region
    _
  $region41: #{net_forward.1} parent=0 // pred_fallthru
    _
  // Predicated region
  $region42: #{net_forward.1} parent=0 // pred_check
    _
  $region43: #{net_forward.1} parent=0 // pred_check_branch
    %3687 = sbr.rel (0) target = $region45
  $region44: #{net_forward.1} parent=0 // pred_region
    _
  $region45: #{net_forward.1} parent=0 // pred_fallthru
    _

</llo_original>
